<compile_context>
chip_gen: v7x
topology: tpu7x:2x2x1
jax: 0.10.0
libtpu: 0.0.40
codegen_flags: <defaults>
</compile_context>

<pallas_src>
import functools

import jax
import jax.numpy as jnp
import numpy as np
from jax.experimental import pallas as pl
from jax.experimental.pallas import tpu as pltpu

EPS = 1e-5
VMEM_LIMIT = 32 * 1024 * 1024  # explicit scoped-VMEM budget (safe for v7x 64 MiB)


def _pick_tile(m, cap=1024):
    for t in (1024, 512, 256, 128, 64, 32, 16, 8):
        if t <= cap and m % t == 0:
            return t
    return m


# ----------------------------- Pallas kernels -----------------------------

def _bn_stats_kernel(x_ref, g_ref, b_ref, scale_ref, shift_ref, s_ref, ss_ref,
                     *, total_m):
    """Single-pass BN batch statistics: accumulate per-channel sum / sum-of-squares
    across row tiles; finalize into fused scale/shift on the last grid step."""
    @pl.when(pl.program_id(0) == 0)
    def _():
        s_ref[...] = jnp.zeros_like(s_ref)
        ss_ref[...] = jnp.zeros_like(ss_ref)

    x = x_ref[...]
    s_ref[...] += jnp.sum(x, axis=0, keepdims=True)
    ss_ref[...] += jnp.sum(x * x, axis=0, keepdims=True)

    @pl.when(pl.program_id(0) == pl.num_programs(0) - 1)
    def _():
        inv_m = 1.0 / total_m
        mean = s_ref[...] * inv_m
        var = ss_ref[...] * inv_m - mean * mean
        scale = g_ref[...] * jax.lax.rsqrt(var + EPS)
        scale_ref[...] = scale
        shift_ref[...] = b_ref[...] - mean * scale


def _conv1_conv3_kernel(xs_ref, scm_ref, shm_ref, w_ref, b_ref, y1_ref, a1_ref):
    """Fused BN1-apply + ReLU + conv1(3x3,s2) + conv3(1x1,s2) for one image.

    xs_ref: (1, HB, WB, 4*Cin) space-to-depth padded input.
    scm/shm: per-position BN scale/shift maps (zero on padded border so the
             zero padding of the post-BN-ReLU activation is reproduced).
    w_ref: (4, 4*Cin, 2*Cout) bf16 tap-major weight, conv3 folded into the
           second Cout output columns of the center tap.
    """
    a = jnp.maximum(xs_ref[0] * scm_ref[...] + shm_ref[...], 0.0)  # f32, (HB,WB,4Cin)
    HB, WB, CK = a.shape
    HO, WO = HB - 1, WB - 1
    C2 = b_ref.shape[1]
    acc = jnp.zeros((HO * WO, C2), jnp.float32)
    for t in range(4):  # 2x2 unit-stride taps in space-to-depth coordinates
        db, dc = divmod(t, 2)
        tap = a[db:db + HO, dc:dc + WO, :].reshape(HO * WO, CK).astype(jnp.bfloat16)
        acc = acc + jnp.dot(tap, w_ref[t], preferred_element_type=jnp.float32)
    acc = acc + b_ref[...]
    half = C2 // 2
    y1_ref[...] = acc[:, :half]     # conv1 output (pre-BN2)
    a1_ref[...] = acc[:, half:]     # conv3 shortcut


def _conv2_residual_kernel(yp_ref, scm_ref, shm_ref, w_ref, b_ref, a1_ref, o_ref):
    """Fused BN2-apply + ReLU + conv2(3x3,s1) + bias + residual add for one image."""
    a = jnp.maximum(yp_ref[0] * scm_ref[...] + shm_ref[...], 0.0)  # f32, (HP,WP,C)
    HP, WP, C = a.shape
    HO, WO = HP - 2, WP - 2
    Cout = w_ref.shape[2]
    acc = jnp.zeros((HO * WO, Cout), jnp.float32)
    for t in range(9):
        kh, kw = divmod(t, 3)
        tap = a[kh:kh + HO, kw:kw + WO, :].reshape(HO * WO, C).astype(jnp.bfloat16)
        acc = acc + jnp.dot(tap, w_ref[t], preferred_element_type=jnp.float32)
    o_ref[...] = acc + b_ref[...] + a1_ref[...]


# ----------------------------- pallas_call wrappers -----------------------------

def bn_stats(x2d, gamma, beta):
    M, C = x2d.shape
    tile = _pick_tile(M)
    kern = functools.partial(_bn_stats_kernel, total_m=float(M))
    return pl.pallas_call(
        kern,
        out_shape=(jax.ShapeDtypeStruct((1, C), jnp.float32),
                   jax.ShapeDtypeStruct((1, C), jnp.float32)),
        grid=(M // tile,),
        in_specs=[pl.BlockSpec((tile, C), lambda i: (i, 0)),
                  pl.BlockSpec((1, C), lambda i: (0, 0)),
                  pl.BlockSpec((1, C), lambda i: (0, 0))],
        out_specs=(pl.BlockSpec((1, C), lambda i: (0, 0)),
                   pl.BlockSpec((1, C), lambda i: (0, 0))),
        scratch_shapes=[pltpu.VMEM((1, C), jnp.float32),
                        pltpu.VMEM((1, C), jnp.float32)],
        compiler_params=pltpu.CompilerParams(
            dimension_semantics=("arbitrary",),
            vmem_limit_bytes=VMEM_LIMIT),
    )(x2d, gamma.reshape(1, C), beta.reshape(1, C))


def conv1_conv3(xs, scm, shm, w13, b13):
    N, HB, WB, CK = xs.shape
    HO, WO = HB - 1, WB - 1
    M = N * HO * WO
    C2 = b13.shape[1]
    Cout = C2 // 2
    return pl.pallas_call(
        _conv1_conv3_kernel,
        out_shape=(jax.ShapeDtypeStruct((M, Cout), jnp.float32),
                   jax.ShapeDtypeStruct((M, Cout), jnp.float32)),
        grid=(N,),
        in_specs=[pl.BlockSpec((1, HB, WB, CK), lambda n: (n, 0, 0, 0)),
                  pl.BlockSpec((HB, WB, CK), lambda n: (0, 0, 0)),
                  pl.BlockSpec((HB, WB, CK), lambda n: (0, 0, 0)),
                  pl.BlockSpec((4, CK, C2), lambda n: (0, 0, 0)),
                  pl.BlockSpec((1, C2), lambda n: (0, 0))],
        out_specs=(pl.BlockSpec((HO * WO, Cout), lambda n: (n, 0)),
                   pl.BlockSpec((HO * WO, Cout), lambda n: (n, 0))),
        compiler_params=pltpu.CompilerParams(
            dimension_semantics=("parallel",),
            vmem_limit_bytes=VMEM_LIMIT),
    )(xs, scm, shm, w13, b13)


def conv2_residual(ypad, scm, shm, w2t, b2, a1):
    N, HP, WP, C = ypad.shape
    HO, WO = HP - 2, WP - 2
    M = N * HO * WO
    Cout = w2t.shape[2]
    return pl.pallas_call(
        _conv2_residual_kernel,
        out_shape=jax.ShapeDtypeStruct((M, Cout), jnp.float32),
        grid=(N,),
        in_specs=[pl.BlockSpec((1, HP, WP, C), lambda n: (n, 0, 0, 0)),
                  pl.BlockSpec((HP, WP, C), lambda n: (0, 0, 0)),
                  pl.BlockSpec((HP, WP, C), lambda n: (0, 0, 0)),
                  pl.BlockSpec((9, C, Cout), lambda n: (0, 0, 0)),
                  pl.BlockSpec((1, Cout), lambda n: (0, 0)),
                  pl.BlockSpec((HO * WO, Cout), lambda n: (n, 0))],
        out_specs=pl.BlockSpec((HO * WO, Cout), lambda n: (n, 0)),
        input_output_aliases={5: 0},  # residual a1 buffer reused as the output
        compiler_params=pltpu.CompilerParams(
            dimension_semantics=("parallel",),
            vmem_limit_bytes=VMEM_LIMIT),
    )(ypad, scm, shm, w2t, b2, a1)


# ----------------------------- JAX glue (layout only) -----------------------------

def _space_to_depth_pad(x_nhwc):
    """Zero-pad by 1 and space-to-depth (block 2): (N,H,W,C) -> (N,(H+2)/2,(W+2)/2,4C)."""
    N, H, W, C = x_nhwc.shape
    xp = jnp.pad(x_nhwc, ((0, 0), (1, 1), (1, 1), (0, 0)))
    Hp, Wp = H + 2, W + 2
    xs = xp.reshape(N, Hp // 2, 2, Wp // 2, 2, C).transpose(0, 1, 3, 2, 4, 5)
    return xs.reshape(N, Hp // 2, Wp // 2, 4 * C)


def _conv1_conv3_weight(w1, w3):
    """OIHW conv1 (3x3,s2) + conv3 (1x1,s2) -> one tap-major s2d weight (4, 4Cin, 2Cout)."""
    Cout, Cin = w1.shape[0], w1.shape[1]
    wt = jnp.zeros((2, 2, 2, 2, Cin, 2 * Cout), jnp.float32)  # (db, dc, pr, pc, c, o)
    for kh in range(3):
        db, pr = divmod(kh, 2)
        for kw in range(3):
            dc, pc = divmod(kw, 2)
            wt = wt.at[db, dc, pr, pc, :, :Cout].set(w1[:, :, kh, kw].T)
    # conv3 samples original pixel (2i,2j) == padded (2i+1,2j+1) == tap (0,0), parity (1,1)
    wt = wt.at[0, 0, 1, 1, :, Cout:].set(w3[:, :, 0, 0].T)
    return wt.reshape(4, 4 * Cin, 2 * Cout)


def _conv2_weight(w2):
    """OIHW (Cout,Cin,3,3) -> tap-major (9, Cin, Cout)."""
    return jnp.transpose(w2, (2, 3, 1, 0)).reshape(9, w2.shape[1], w2.shape[0])


def _s2d_bn_maps(H, W, C, scale, shift):
    """Per-position BN scale/shift maps in space-to-depth layout; zero on the padded
    border so relu(x*scale+shift) reproduces zero padding of the BN+ReLU activation."""
    Hp, Wp = H + 2, W + 2
    m = np.ones((Hp, Wp), np.float32)
    m[0, :] = 0.0
    m[-1, :] = 0.0
    m[:, 0] = 0.0
    m[:, -1] = 0.0
    ms = m.reshape(Hp // 2, 2, Wp // 2, 2).transpose(0, 2, 1, 3).reshape(Hp // 2, Wp // 2, 4)
    ms = np.repeat(ms[:, :, :, None], C, axis=3).reshape(Hp // 2, Wp // 2, 4 * C)
    mask = jnp.asarray(ms)
    sc = jnp.tile(scale, (1, 4)).reshape(1, 1, 4 * C)
    sh = jnp.tile(shift, (1, 4)).reshape(1, 1, 4 * C)
    return mask * sc, mask * sh


def _pad_bn_maps(Hs, Ws, C, scale, shift):
    m = np.ones((Hs + 2, Ws + 2, 1), np.float32)
    m[0] = 0.0
    m[-1] = 0.0
    m[:, 0] = 0.0
    m[:, -1] = 0.0
    mask = jnp.asarray(m)
    return mask * scale.reshape(1, 1, C), mask * shift.reshape(1, 1, C)


def stage2_block1_forward(x_nchw, params):
    N, Cin, H, W = x_nchw.shape
    Cout = params["w1"].shape[0]
    Ho, Wo = H // 2, W // 2

    x = jnp.transpose(x_nchw, (0, 2, 3, 1))                      # NHWC

    # K1: BN1 batch statistics -> fused scale/shift
    scale1, shift1 = bn_stats(x.reshape(N * H * W, Cin), params["g1"], params["b1"])

    # glue (layout only): pad + space-to-depth -> stride-2 conv = 4 unit-stride taps
    xs = _space_to_depth_pad(x)                                   # (N, (H+2)//2, (W+2)//2, 4*Cin)
    scm1, shm1 = _s2d_bn_maps(H, W, Cin, scale1, shift1)
    w13 = _conv1_conv3_weight(params["w1"], params["w3"]).astype(jnp.bfloat16)
    b13 = jnp.concatenate([params["bc1"], params["bc3"]]).reshape(1, 2 * Cout)

    # K2: fused BN1-apply + ReLU + conv1 + conv3 (single matmul per tap)
    y1, a1 = conv1_conv3(xs, scm1, shm1, w13, b13)                # (N*Ho*Wo, Cout) each

    # K3: BN2 batch statistics on the conv1 pre-activation
    scale2, shift2 = bn_stats(y1, params["g2"], params["b2"])

    # glue: spatial zero-pad of y1 (borders fixed up by masked scale/shift maps)
    ypad = jnp.pad(y1.reshape(N, Ho, Wo, Cout), ((0, 0), (1, 1), (1, 1), (0, 0)))
    scm2, shm2 = _pad_bn_maps(Ho, Wo, Cout, scale2, shift2)
    w2t = _conv2_weight(params["w2"]).astype(jnp.bfloat16)

    # K4: fused BN2-apply + ReLU + conv2 + bias + residual add (in-place on a1)
    out = conv2_residual(ypad, scm2, shm2, w2t, params["bc2"].reshape(1, Cout), a1)

    out = out.reshape(N, Ho, Wo, Cout)
    return jnp.transpose(out, (0, 3, 1, 2))                       # back to NCHW


# ----------------------------- pure-JAX reference -----------------------------

def reference_forward(x, params):
    def bn(h, g, b):
        mean = h.mean(axis=(0, 2, 3), keepdims=True)
        var = ((h - mean) ** 2).mean(axis=(0, 2, 3), keepdims=True)
        return (h - mean) * jax.lax.rsqrt(var + EPS) * g[None, :, None, None] \
            + b[None, :, None, None]

    def conv(h, w, b, stride, pad):
        o = jax.lax.conv_general_dilated(
            h, w, (stride, stride), [(pad, pad), (pad, pad)],
            dimension_numbers=("NCHW", "OIHW", "NCHW"),
            precision=jax.lax.Precision.HIGHEST)
        return o + b[None, :, None, None]

    h = jax.nn.relu(bn(x, params["g1"], params["b1"]))
    a1 = conv(h, params["w3"], params["bc3"], 2, 0)
    h = conv(h, params["w1"], params["bc1"], 2, 1)
    h = jax.nn.relu(bn(h, params["g2"], params["b2"]))
    h = conv(h, params["w2"], params["bc2"], 1, 1)
    return h + a1


# ----------------------------- main -----------------------------

if __name__ == "__main__":
    N, Cin, Cout, H, W = 2, 4, 8, 16, 16
    key = jax.random.PRNGKey(0)
    ks = jax.random.split(key, 7)
    params = {
        # BatchNorm affine params (PyTorch default init: gamma=1, beta=0)
        "g1": jnp.ones((Cin,), jnp.float32),
        "b1": jnp.zeros((Cin,), jnp.float32),
        "g2": jnp.ones((Cout,), jnp.float32),
        "b2": jnp.zeros((Cout,), jnp.float32),
        # Conv weights in PyTorch OIHW layout, deterministic random init
        "w1": 0.1 * jax.random.normal(ks[0], (Cout, Cin, 3, 3), jnp.float32),
        "bc1": 0.1 * jax.random.normal(ks[1], (Cout,), jnp.float32),
        "w2": 0.1 * jax.random.normal(ks[2], (Cout, Cout, 3, 3), jnp.float32),
        "bc2": 0.1 * jax.random.normal(ks[3], (Cout,), jnp.float32),
        "w3": 0.1 * jax.random.normal(ks[4], (Cout, Cin, 1, 1), jnp.float32),
        "bc3": 0.1 * jax.random.normal(ks[5], (Cout,), jnp.float32),
    }
    x = jax.random.normal(ks[6], (N, Cin, H, W), jnp.float32)

    fwd = jax.jit(stage2_block1_forward)
    out = jax.block_until_ready(fwd(x, params))
    ref = jax.block_until_ready(reference_forward(x, params))

    assert out.shape == (N, Cout, H // 2, W // 2), out.shape
    # bf16 MXU operands with f32 accumulation vs. HIGHEST-precision reference
    err = float(jnp.max(jnp.abs(out - ref)))
    assert err < 2e-2, f"max abs error {err}"
    print("KERNEL_OK")
</pallas_src>

<mosaic_0001>
module attributes {stable_mosaic.version = 11 : i64} {
  func.func @_bn_stats_kernel(%arg0: i32, %arg1: memref<512x4xf32, #tpu.memory_space<vmem>>, %arg2: memref<1x4xf32, #tpu.memory_space<vmem>>, %arg3: memref<1x4xf32, #tpu.memory_space<vmem>>, %arg4: memref<1x4xf32, #tpu.memory_space<vmem>>, %arg5: memref<1x4xf32, #tpu.memory_space<vmem>>, %arg6: memref<1x4xf32, #tpu.memory_space<vmem>>, %arg7: memref<1x4xf32, #tpu.memory_space<vmem>>) attributes {dimension_semantics = [#tpu.dimension_semantics<arbitrary>], iteration_bounds = array<i64: 1>, scalar_prefetch = 0 : i64, scratch_operands = 2 : i64, tpu.core_type = #tpu.core_type<tc>, window_params = [{transform_indices = @transform_0, window_bounds = array<i64: 512, 4>}, {pipeline_mode = #tpu.pipeline_mode<synchronous>, transform_indices = @transform_1, window_bounds = array<i64: 1, 4>}, {pipeline_mode = #tpu.pipeline_mode<synchronous>, transform_indices = @transform_2, window_bounds = array<i64: 1, 4>}, {pipeline_mode = #tpu.pipeline_mode<synchronous>, transform_indices = @transform_3, window_bounds = array<i64: 1, 4>}, {pipeline_mode = #tpu.pipeline_mode<synchronous>, transform_indices = @transform_4, window_bounds = array<i64: 1, 4>}]} {
    %c0_i32 = arith.constant 0 : i32
    %0 = arith.cmpi eq, %arg0, %c0_i32 : i32
    %1 = arith.extui %0 : i1 to i32
    %c0_i32_0 = arith.constant 0 : i32
    %2 = arith.cmpi ne, %1, %c0_i32_0 : i32
    scf.if %2 {
      %cst_13 = arith.constant 0.000000e+00 : f32
      %18 = vector.broadcast %cst_13 : f32 to vector<1x4xf32>
      %c0_14 = arith.constant 0 : index
      %c0_15 = arith.constant 0 : index
      %19 = vector.load %arg6[%c0_14, %c0_15] : memref<1x4xf32, #tpu.memory_space<vmem>>, vector<1x4xf32>
      tpu.vector_store %arg6[%c0_14, %c0_15], %18 {strides = array<i32>} : memref<1x4xf32, #tpu.memory_space<vmem>>, vector<1x4xf32>,
      %cst_16 = arith.constant 0.000000e+00 : f32
      %20 = vector.broadcast %cst_16 : f32 to vector<1x4xf32>
      %c0_17 = arith.constant 0 : index
      %c0_18 = arith.constant 0 : index
      %21 = vector.load %arg7[%c0_17, %c0_18] : memref<1x4xf32, #tpu.memory_space<vmem>>, vector<1x4xf32>
      tpu.vector_store %arg7[%c0_17, %c0_18], %20 {strides = array<i32>} : memref<1x4xf32, #tpu.memory_space<vmem>>, vector<1x4xf32>,
    } else {
    }
    %c0 = arith.constant 0 : index
    %c0_1 = arith.constant 0 : index
    %3 = vector.load %arg1[%c0, %c0_1] : memref<512x4xf32, #tpu.memory_space<vmem>>, vector<512x4xf32>
    %c0_2 = arith.constant 0 : index
    %c0_3 = arith.constant 0 : index
    %4 = vector.load %arg6[%c0_2, %c0_3] : memref<1x4xf32, #tpu.memory_space<vmem>>, vector<1x4xf32>
    %cst = arith.constant dense<0.000000e+00> : vector<4xf32>
    %5 = vector.multi_reduction <add>, %3, %cst [0] : vector<512x4xf32> to vector<4xf32>
    %6 = vector.shape_cast %5 : vector<4xf32> to vector<1x4xf32>
    %7 = arith.addf %4, %6 : vector<1x4xf32>
    %c0_4 = arith.constant 0 : index
    %c0_5 = arith.constant 0 : index
    %8 = vector.load %arg6[%c0_4, %c0_5] : memref<1x4xf32, #tpu.memory_space<vmem>>, vector<1x4xf32>
    tpu.vector_store %arg6[%c0_4, %c0_5], %7 {strides = array<i32>} : memref<1x4xf32, #tpu.memory_space<vmem>>, vector<1x4xf32>,
    %c0_6 = arith.constant 0 : index
    %c0_7 = arith.constant 0 : index
    %9 = vector.load %arg7[%c0_6, %c0_7] : memref<1x4xf32, #tpu.memory_space<vmem>>, vector<1x4xf32>
    %10 = arith.mulf %3, %3 : vector<512x4xf32>
    %cst_8 = arith.constant dense<0.000000e+00> : vector<4xf32>
    %11 = vector.multi_reduction <add>, %10, %cst_8 [0] : vector<512x4xf32> to vector<4xf32>
    %12 = vector.shape_cast %11 : vector<4xf32> to vector<1x4xf32>
    %13 = arith.addf %9, %12 : vector<1x4xf32>
    %c0_9 = arith.constant 0 : index
    %c0_10 = arith.constant 0 : index
    %14 = vector.load %arg7[%c0_9, %c0_10] : memref<1x4xf32, #tpu.memory_space<vmem>>, vector<1x4xf32>
    tpu.vector_store %arg7[%c0_9, %c0_10], %13 {strides = array<i32>} : memref<1x4xf32, #tpu.memory_space<vmem>>, vector<1x4xf32>,
    %c0_i32_11 = arith.constant 0 : i32
    %15 = arith.cmpi eq, %arg0, %c0_i32_11 : i32
    %16 = arith.extui %15 : i1 to i32
    %c0_i32_12 = arith.constant 0 : i32
    %17 = arith.cmpi ne, %16, %c0_i32_12 : i32
    scf.if %17 {
      %c0_13 = arith.constant 0 : index
      %c0_14 = arith.constant 0 : index
      %18 = vector.load %arg6[%c0_13, %c0_14] : memref<1x4xf32, #tpu.memory_space<vmem>>, vector<1x4xf32>
      %cst_15 = arith.constant 0.001953125 : f32
      %19 = vector.broadcast %cst_15 : f32 to vector<1x4xf32>
      %20 = arith.mulf %18, %19 : vector<1x4xf32>
      %c0_16 = arith.constant 0 : index
      %c0_17 = arith.constant 0 : index
      %21 = vector.load %arg7[%c0_16, %c0_17] : memref<1x4xf32, #tpu.memory_space<vmem>>, vector<1x4xf32>
      %cst_18 = arith.constant 0.001953125 : f32
      %22 = vector.broadcast %cst_18 : f32 to vector<1x4xf32>
      %23 = arith.mulf %21, %22 : vector<1x4xf32>
      %24 = arith.mulf %20, %20 : vector<1x4xf32>
      %25 = arith.subf %23, %24 : vector<1x4xf32>
      %c0_19 = arith.constant 0 : index
      %c0_20 = arith.constant 0 : index
      %26 = vector.load %arg2[%c0_19, %c0_20] : memref<1x4xf32, #tpu.memory_space<vmem>>, vector<1x4xf32>
      %cst_21 = arith.constant 9.99999974E-6 : f32
      %27 = vector.broadcast %cst_21 : f32 to vector<1x4xf32>
      %28 = arith.addf %25, %27 : vector<1x4xf32>
      %29 = math.rsqrt %28 : vector<1x4xf32>
      %30 = arith.mulf %26, %29 : vector<1x4xf32>
      %c0_22 = arith.constant 0 : index
      %c0_23 = arith.constant 0 : index
      %31 = vector.load %arg4[%c0_22, %c0_23] : memref<1x4xf32, #tpu.memory_space<vmem>>, vector<1x4xf32>
      tpu.vector_store %arg4[%c0_22, %c0_23], %30 {strides = array<i32>} : memref<1x4xf32, #tpu.memory_space<vmem>>, vector<1x4xf32>,
      %c0_24 = arith.constant 0 : index
      %c0_25 = arith.constant 0 : index
      %32 = vector.load %arg3[%c0_24, %c0_25] : memref<1x4xf32, #tpu.memory_space<vmem>>, vector<1x4xf32>
      %33 = arith.mulf %20, %30 : vector<1x4xf32>
      %34 = arith.subf %32, %33 : vector<1x4xf32>
      %c0_26 = arith.constant 0 : index
      %c0_27 = arith.constant 0 : index
      %35 = vector.load %arg5[%c0_26, %c0_27] : memref<1x4xf32, #tpu.memory_space<vmem>>, vector<1x4xf32>
      tpu.vector_store %arg5[%c0_26, %c0_27], %34 {strides = array<i32>} : memref<1x4xf32, #tpu.memory_space<vmem>>, vector<1x4xf32>,
    } else {
    }
    return
  }
  func.func @transform_0(%arg0: i32) -> (i32, i32) {
    %c0_i32 = arith.constant 0 : i32
    %c0_i32_0 = arith.constant 0 : i32
    return %arg0, %c0_i32 : i32, i32
  }
  func.func @transform_1(%arg0: i32) -> (i32, i32) {
    %c0_i32 = arith.constant 0 : i32
    %c0_i32_0 = arith.constant 0 : i32
    %c0_i32_1 = arith.constant 0 : i32
    return %c0_i32, %c0_i32_0 : i32, i32
  }
  func.func @transform_2(%arg0: i32) -> (i32, i32) {
    %c0_i32 = arith.constant 0 : i32
    %c0_i32_0 = arith.constant 0 : i32
    %c0_i32_1 = arith.constant 0 : i32
    return %c0_i32, %c0_i32_0 : i32, i32
  }
  func.func @transform_3(%arg0: i32) -> (i32, i32) {
    %c0_i32 = arith.constant 0 : i32
    %c0_i32_0 = arith.constant 0 : i32
    %c0_i32_1 = arith.constant 0 : i32
    return %c0_i32, %c0_i32_0 : i32, i32
  }
  func.func @transform_4(%arg0: i32) -> (i32, i32) {
    %c0_i32 = arith.constant 0 : i32
    %c0_i32_0 = arith.constant 0 : i32
    %c0_i32_1 = arith.constant 0 : i32
    return %c0_i32, %c0_i32_0 : i32, i32
  }
}

module attributes {stable_mosaic.version = 11 : i64} {
  func.func @_conv1_conv3_kernel(%arg0: i32, %arg1: memref<1x9x9x16xf32, #tpu.memory_space<vmem>>, %arg2: memref<9x9x16xf32, #tpu.memory_space<vmem>>, %arg3: memref<9x9x16xf32, #tpu.memory_space<vmem>>, %arg4: memref<4x16x16xbf16, #tpu.memory_space<vmem>>, %arg5: memref<1x16xf32, #tpu.memory_space<vmem>>, %arg6: memref<64x8xf32, #tpu.memory_space<vmem>>, %arg7: memref<64x8xf32, #tpu.memory_space<vmem>>) attributes {dimension_semantics = [#tpu.dimension_semantics<parallel>], iteration_bounds = array<i64: 2>, scalar_prefetch = 0 : i64, scratch_operands = 0 : i64, tpu.core_type = #tpu.core_type<tc>, window_params = [{transform_indices = @transform_0, window_bounds = array<i64: 1, 9, 9, 16>}, {pipeline_mode = #tpu.pipeline_mode<synchronous>, transform_indices = @transform_1, window_bounds = array<i64: 9, 9, 16>}, {pipeline_mode = #tpu.pipeline_mode<synchronous>, transform_indices = @transform_2, window_bounds = array<i64: 9, 9, 16>}, {pipeline_mode = #tpu.pipeline_mode<synchronous>, transform_indices = @transform_3, window_bounds = array<i64: 4, 16, 16>}, {pipeline_mode = #tpu.pipeline_mode<synchronous>, transform_indices = @transform_4, window_bounds = array<i64: 1, 16>}, {transform_indices = @transform_5, window_bounds = array<i64: 64, 8>}, {transform_indices = @transform_6, window_bounds = array<i64: 64, 8>}]} {
    %c0 = arith.constant 0 : index
    %c0_0 = arith.constant 0 : index
    %c0_1 = arith.constant 0 : index
    %c0_2 = arith.constant 0 : index
    %0 = vector.load %arg1[%c0, %c0_0, %c0_1, %c0_2] : memref<1x9x9x16xf32, #tpu.memory_space<vmem>>, vector<1x9x9x16xf32>
    %1 = vector.shape_cast %0 : vector<1x9x9x16xf32> to vector<9x9x16xf32>
    %c0_3 = arith.constant 0 : index
    %c0_4 = arith.constant 0 : index
    %c0_5 = arith.constant 0 : index
    %2 = vector.load %arg2[%c0_3, %c0_4, %c0_5] : memref<9x9x16xf32, #tpu.memory_space<vmem>>, vector<9x9x16xf32>
    %3 = arith.mulf %1, %2 : vector<9x9x16xf32>
    %c0_6 = arith.constant 0 : index
    %c0_7 = arith.constant 0 : index
    %c0_8 = arith.constant 0 : index
    %4 = vector.load %arg3[%c0_6, %c0_7, %c0_8] : memref<9x9x16xf32, #tpu.memory_space<vmem>>, vector<9x9x16xf32>
    %5 = arith.addf %3, %4 : vector<9x9x16xf32>
    %cst = arith.constant 0.000000e+00 : f32
    %6 = vector.broadcast %cst : f32 to vector<9x9x16xf32>
    %7 = arith.maximumf %5, %6 : vector<9x9x16xf32>
    %cst_9 = arith.constant 0.000000e+00 : f32
    %8 = vector.broadcast %cst_9 : f32 to vector<64x16xf32>
    %9 = vector.extract_strided_slice %7 {offsets = [0, 0, 0], sizes = [8, 8, 16], strides = [1, 1, 1]} : vector<9x9x16xf32> to vector<8x8x16xf32>
    %10 = vector.shape_cast %9 : vector<8x8x16xf32> to vector<64x16xf32>
    %11 = arith.truncf %10 : vector<64x16xf32> to vector<64x16xbf16>
    %c0_10 = arith.constant 0 : index
    %c0_11 = arith.constant 0 : index
    %c0_12 = arith.constant 0 : index
    %12 = vector.load %arg4[%c0_10, %c0_11, %c0_12] : memref<4x16x16xbf16, #tpu.memory_space<vmem>>, vector<1x16x16xbf16>
    %13 = vector.shape_cast %12 : vector<1x16x16xbf16> to vector<16x16xbf16>
    %cst_13 = arith.constant dense<0.000000e+00> : vector<64x16xf32>
    %14 = tpu.matmul %11, %13, %cst_13 {dimension_numbers = #tpu.dot_dimension_numbers<[1], [0], [0], [1], [0, 0, 1, 1], [], []>} : vector<64x16xbf16>, vector<16x16xbf16>, vector<64x16xf32> -> vector<64x16xf32>
    %15 = arith.addf %8, %14 : vector<64x16xf32>
    %16 = vector.extract_strided_slice %7 {offsets = [0, 1, 0], sizes = [8, 8, 16], strides = [1, 1, 1]} : vector<9x9x16xf32> to vector<8x8x16xf32>
    %17 = vector.shape_cast %16 : vector<8x8x16xf32> to vector<64x16xf32>
    %18 = arith.truncf %17 : vector<64x16xf32> to vector<64x16xbf16>
    %c1 = arith.constant 1 : index
    %c0_14 = arith.constant 0 : index
    %c0_15 = arith.constant 0 : index
    %19 = vector.load %arg4[%c1, %c0_14, %c0_15] : memref<4x16x16xbf16, #tpu.memory_space<vmem>>, vector<1x16x16xbf16>
    %20 = vector.shape_cast %19 : vector<1x16x16xbf16> to vector<16x16xbf16>
    %cst_16 = arith.constant dense<0.000000e+00> : vector<64x16xf32>
    %21 = tpu.matmul %18, %20, %cst_16 {dimension_numbers = #tpu.dot_dimension_numbers<[1], [0], [0], [1], [0, 0, 1, 1], [], []>} : vector<64x16xbf16>, vector<16x16xbf16>, vector<64x16xf32> -> vector<64x16xf32>
    %22 = arith.addf %15, %21 : vector<64x16xf32>
    %23 = vector.extract_strided_slice %7 {offsets = [1, 0, 0], sizes = [8, 8, 16], strides = [1, 1, 1]} : vector<9x9x16xf32> to vector<8x8x16xf32>
    %24 = vector.shape_cast %23 : vector<8x8x16xf32> to vector<64x16xf32>
    %25 = arith.truncf %24 : vector<64x16xf32> to vector<64x16xbf16>
    %c2 = arith.constant 2 : index
    %c0_17 = arith.constant 0 : index
    %c0_18 = arith.constant 0 : index
    %26 = vector.load %arg4[%c2, %c0_17, %c0_18] : memref<4x16x16xbf16, #tpu.memory_space<vmem>>, vector<1x16x16xbf16>
    %27 = vector.shape_cast %26 : vector<1x16x16xbf16> to vector<16x16xbf16>
    %cst_19 = arith.constant dense<0.000000e+00> : vector<64x16xf32>
    %28 = tpu.matmul %25, %27, %cst_19 {dimension_numbers = #tpu.dot_dimension_numbers<[1], [0], [0], [1], [0, 0, 1, 1], [], []>} : vector<64x16xbf16>, vector<16x16xbf16>, vector<64x16xf32> -> vector<64x16xf32>
    %29 = arith.addf %22, %28 : vector<64x16xf32>
    %30 = vector.extract_strided_slice %7 {offsets = [1, 1, 0], sizes = [8, 8, 16], strides = [1, 1, 1]} : vector<9x9x16xf32> to vector<8x8x16xf32>
    %31 = vector.shape_cast %30 : vector<8x8x16xf32> to vector<64x16xf32>
    %32 = arith.truncf %31 : vector<64x16xf32> to vector<64x16xbf16>
    %c3 = arith.constant 3 : index
    %c0_20 = arith.constant 0 : index
    %c0_21 = arith.constant 0 : index
    %33 = vector.load %arg4[%c3, %c0_20, %c0_21] : memref<4x16x16xbf16, #tpu.memory_space<vmem>>, vector<1x16x16xbf16>
    %34 = vector.shape_cast %33 : vector<1x16x16xbf16> to vector<16x16xbf16>
    %cst_22 = arith.constant dense<0.000000e+00> : vector<64x16xf32>
    %35 = tpu.matmul %32, %34, %cst_22 {dimension_numbers = #tpu.dot_dimension_numbers<[1], [0], [0], [1], [0, 0, 1, 1], [], []>} : vector<64x16xbf16>, vector<16x16xbf16>, vector<64x16xf32> -> vector<64x16xf32>
    %36 = arith.addf %29, %35 : vector<64x16xf32>
    %c0_23 = arith.constant 0 : index
    %c0_24 = arith.constant 0 : index
    %37 = vector.load %arg5[%c0_23, %c0_24] : memref<1x16xf32, #tpu.memory_space<vmem>>, vector<1x16xf32>
    %38 = vector.broadcast %37 : vector<1x16xf32> to vector<64x16xf32>
    %39 = arith.addf %36, %38 : vector<64x16xf32>
    %40 = vector.extract_strided_slice %39 {offsets = [0, 0], sizes = [64, 8], strides = [1, 1]} : vector<64x16xf32> to vector<64x8xf32>
    %c0_25 = arith.constant 0 : index
    %c0_26 = arith.constant 0 : index
    %41 = vector.load %arg6[%c0_25, %c0_26] : memref<64x8xf32, #tpu.memory_space<vmem>>, vector<64x8xf32>
    tpu.vector_store %arg6[%c0_25, %c0_26], %40 {strides = array<i32>} : memref<64x8xf32, #tpu.memory_space<vmem>>, vector<64x8xf32>,
    %42 = vector.extract_strided_slice %39 {offsets = [0, 8], sizes = [64, 8], strides = [1, 1]} : vector<64x16xf32> to vector<64x8xf32>
    %c0_27 = arith.constant 0 : index
    %c0_28 = arith.constant 0 : index
    %43 = vector.load %arg7[%c0_27, %c0_28] : memref<64x8xf32, #tpu.memory_space<vmem>>, vector<64x8xf32>
    tpu.vector_store %arg7[%c0_27, %c0_28], %42 {strides = array<i32>} : memref<64x8xf32, #tpu.memory_space<vmem>>, vector<64x8xf32>,
    return
  }
  func.func @transform_0(%arg0: i32) -> (i32, i32, i32, i32) {
    %c0_i32 = arith.constant 0 : i32
    %c0_i32_0 = arith.constant 0 : i32
    %c0_i32_1 = arith.constant 0 : i32
    %c0_i32_2 = arith.constant 0 : i32
    return %arg0, %c0_i32, %c0_i32_0, %c0_i32_1 : i32, i32, i32, i32
  }
  func.func @transform_1(%arg0: i32) -> (i32, i32, i32) {
    %c0_i32 = arith.constant 0 : i32
    %c0_i32_0 = arith.constant 0 : i32
    %c0_i32_1 = arith.constant 0 : i32
    %c0_i32_2 = arith.constant 0 : i32
    return %c0_i32, %c0_i32_0, %c0_i32_1 : i32, i32, i32
  }
  func.func @transform_2(%arg0: i32) -> (i32, i32, i32) {
    %c0_i32 = arith.constant 0 : i32
    %c0_i32_0 = arith.constant 0 : i32
    %c0_i32_1 = arith.constant 0 : i32
    %c0_i32_2 = arith.constant 0 : i32
    return %c0_i32, %c0_i32_0, %c0_i32_1 : i32, i32, i32
  }
  func.func @transform_3(%arg0: i32) -> (i32, i32, i32) {
    %c0_i32 = arith.constant 0 : i32
    %c0_i32_0 = arith.constant 0 : i32
    %c0_i32_1 = arith.constant 0 : i32
    %c0_i32_2 = arith.constant 0 : i32
    return %c0_i32, %c0_i32_0, %c0_i32_1 : i32, i32, i32
  }
  func.func @transform_4(%arg0: i32) -> (i32, i32) {
    %c0_i32 = arith.constant 0 : i32
    %c0_i32_0 = arith.constant 0 : i32
    %c0_i32_1 = arith.constant 0 : i32
    return %c0_i32, %c0_i32_0 : i32, i32
  }
  func.func @transform_5(%arg0: i32) -> (i32, i32) {
    %c0_i32 = arith.constant 0 : i32
    %c0_i32_0 = arith.constant 0 : i32
    return %arg0, %c0_i32 : i32, i32
  }
  func.func @transform_6(%arg0: i32) -> (i32, i32) {
    %c0_i32 = arith.constant 0 : i32
    %c0_i32_0 = arith.constant 0 : i32
    return %arg0, %c0_i32 : i32, i32
  }
}

module attributes {stable_mosaic.version = 11 : i64} {
  func.func @_bn_stats_kernel(%arg0: i32, %arg1: memref<128x8xf32, #tpu.memory_space<vmem>>, %arg2: memref<1x8xf32, #tpu.memory_space<vmem>>, %arg3: memref<1x8xf32, #tpu.memory_space<vmem>>, %arg4: memref<1x8xf32, #tpu.memory_space<vmem>>, %arg5: memref<1x8xf32, #tpu.memory_space<vmem>>, %arg6: memref<1x8xf32, #tpu.memory_space<vmem>>, %arg7: memref<1x8xf32, #tpu.memory_space<vmem>>) attributes {dimension_semantics = [#tpu.dimension_semantics<arbitrary>], iteration_bounds = array<i64: 1>, scalar_prefetch = 0 : i64, scratch_operands = 2 : i64, tpu.core_type = #tpu.core_type<tc>, window_params = [{transform_indices = @transform_0, window_bounds = array<i64: 128, 8>}, {pipeline_mode = #tpu.pipeline_mode<synchronous>, transform_indices = @transform_1, window_bounds = array<i64: 1, 8>}, {pipeline_mode = #tpu.pipeline_mode<synchronous>, transform_indices = @transform_2, window_bounds = array<i64: 1, 8>}, {pipeline_mode = #tpu.pipeline_mode<synchronous>, transform_indices = @transform_3, window_bounds = array<i64: 1, 8>}, {pipeline_mode = #tpu.pipeline_mode<synchronous>, transform_indices = @transform_4, window_bounds = array<i64: 1, 8>}]} {
    %c0_i32 = arith.constant 0 : i32
    %0 = arith.cmpi eq, %arg0, %c0_i32 : i32
    %1 = arith.extui %0 : i1 to i32
    %c0_i32_0 = arith.constant 0 : i32
    %2 = arith.cmpi ne, %1, %c0_i32_0 : i32
    scf.if %2 {
      %cst_13 = arith.constant 0.000000e+00 : f32
      %18 = vector.broadcast %cst_13 : f32 to vector<1x8xf32>
      %c0_14 = arith.constant 0 : index
      %c0_15 = arith.constant 0 : index
      %19 = vector.load %arg6[%c0_14, %c0_15] : memref<1x8xf32, #tpu.memory_space<vmem>>, vector<1x8xf32>
      tpu.vector_store %arg6[%c0_14, %c0_15], %18 {strides = array<i32>} : memref<1x8xf32, #tpu.memory_space<vmem>>, vector<1x8xf32>,
      %cst_16 = arith.constant 0.000000e+00 : f32
      %20 = vector.broadcast %cst_16 : f32 to vector<1x8xf32>
      %c0_17 = arith.constant 0 : index
      %c0_18 = arith.constant 0 : index
      %21 = vector.load %arg7[%c0_17, %c0_18] : memref<1x8xf32, #tpu.memory_space<vmem>>, vector<1x8xf32>
      tpu.vector_store %arg7[%c0_17, %c0_18], %20 {strides = array<i32>} : memref<1x8xf32, #tpu.memory_space<vmem>>, vector<1x8xf32>,
    } else {
    }
    %c0 = arith.constant 0 : index
    %c0_1 = arith.constant 0 : index
    %3 = vector.load %arg1[%c0, %c0_1] : memref<128x8xf32, #tpu.memory_space<vmem>>, vector<128x8xf32>
    %c0_2 = arith.constant 0 : index
    %c0_3 = arith.constant 0 : index
    %4 = vector.load %arg6[%c0_2, %c0_3] : memref<1x8xf32, #tpu.memory_space<vmem>>, vector<1x8xf32>
    %cst = arith.constant dense<0.000000e+00> : vector<8xf32>
    %5 = vector.multi_reduction <add>, %3, %cst [0] : vector<128x8xf32> to vector<8xf32>
    %6 = vector.shape_cast %5 : vector<8xf32> to vector<1x8xf32>
    %7 = arith.addf %4, %6 : vector<1x8xf32>
    %c0_4 = arith.constant 0 : index
    %c0_5 = arith.constant 0 : index
    %8 = vector.load %arg6[%c0_4, %c0_5] : memref<1x8xf32, #tpu.memory_space<vmem>>, vector<1x8xf32>
    tpu.vector_store %arg6[%c0_4, %c0_5], %7 {strides = array<i32>} : memref<1x8xf32, #tpu.memory_space<vmem>>, vector<1x8xf32>,
    %c0_6 = arith.constant 0 : index
    %c0_7 = arith.constant 0 : index
    %9 = vector.load %arg7[%c0_6, %c0_7] : memref<1x8xf32, #tpu.memory_space<vmem>>, vector<1x8xf32>
    %10 = arith.mulf %3, %3 : vector<128x8xf32>
    %cst_8 = arith.constant dense<0.000000e+00> : vector<8xf32>
    %11 = vector.multi_reduction <add>, %10, %cst_8 [0] : vector<128x8xf32> to vector<8xf32>
    %12 = vector.shape_cast %11 : vector<8xf32> to vector<1x8xf32>
    %13 = arith.addf %9, %12 : vector<1x8xf32>
    %c0_9 = arith.constant 0 : index
    %c0_10 = arith.constant 0 : index
    %14 = vector.load %arg7[%c0_9, %c0_10] : memref<1x8xf32, #tpu.memory_space<vmem>>, vector<1x8xf32>
    tpu.vector_store %arg7[%c0_9, %c0_10], %13 {strides = array<i32>} : memref<1x8xf32, #tpu.memory_space<vmem>>, vector<1x8xf32>,
    %c0_i32_11 = arith.constant 0 : i32
    %15 = arith.cmpi eq, %arg0, %c0_i32_11 : i32
    %16 = arith.extui %15 : i1 to i32
    %c0_i32_12 = arith.constant 0 : i32
    %17 = arith.cmpi ne, %16, %c0_i32_12 : i32
    scf.if %17 {
      %c0_13 = arith.constant 0 : index
      %c0_14 = arith.constant 0 : index
      %18 = vector.load %arg6[%c0_13, %c0_14] : memref<1x8xf32, #tpu.memory_space<vmem>>, vector<1x8xf32>
      %cst_15 = arith.constant 7.812500e-03 : f32
      %19 = vector.broadcast %cst_15 : f32 to vector<1x8xf32>
      %20 = arith.mulf %18, %19 : vector<1x8xf32>
      %c0_16 = arith.constant 0 : index
      %c0_17 = arith.constant 0 : index
      %21 = vector.load %arg7[%c0_16, %c0_17] : memref<1x8xf32, #tpu.memory_space<vmem>>, vector<1x8xf32>
      %cst_18 = arith.constant 7.812500e-03 : f32
      %22 = vector.broadcast %cst_18 : f32 to vector<1x8xf32>
      %23 = arith.mulf %21, %22 : vector<1x8xf32>
      %24 = arith.mulf %20, %20 : vector<1x8xf32>
      %25 = arith.subf %23, %24 : vector<1x8xf32>
      %c0_19 = arith.constant 0 : index
      %c0_20 = arith.constant 0 : index
      %26 = vector.load %arg2[%c0_19, %c0_20] : memref<1x8xf32, #tpu.memory_space<vmem>>, vector<1x8xf32>
      %cst_21 = arith.constant 9.99999974E-6 : f32
      %27 = vector.broadcast %cst_21 : f32 to vector<1x8xf32>
      %28 = arith.addf %25, %27 : vector<1x8xf32>
      %29 = math.rsqrt %28 : vector<1x8xf32>
      %30 = arith.mulf %26, %29 : vector<1x8xf32>
      %c0_22 = arith.constant 0 : index
      %c0_23 = arith.constant 0 : index
      %31 = vector.load %arg4[%c0_22, %c0_23] : memref<1x8xf32, #tpu.memory_space<vmem>>, vector<1x8xf32>
      tpu.vector_store %arg4[%c0_22, %c0_23], %30 {strides = array<i32>} : memref<1x8xf32, #tpu.memory_space<vmem>>, vector<1x8xf32>,
      %c0_24 = arith.constant 0 : index
      %c0_25 = arith.constant 0 : index
      %32 = vector.load %arg3[%c0_24, %c0_25] : memref<1x8xf32, #tpu.memory_space<vmem>>, vector<1x8xf32>
      %33 = arith.mulf %20, %30 : vector<1x8xf32>
      %34 = arith.subf %32, %33 : vector<1x8xf32>
      %c0_26 = arith.constant 0 : index
      %c0_27 = arith.constant 0 : index
      %35 = vector.load %arg5[%c0_26, %c0_27] : memref<1x8xf32, #tpu.memory_space<vmem>>, vector<1x8xf32>
      tpu.vector_store %arg5[%c0_26, %c0_27], %34 {strides = array<i32>} : memref<1x8xf32, #tpu.memory_space<vmem>>, vector<1x8xf32>,
    } else {
    }
    return
  }
  func.func @transform_0(%arg0: i32) -> (i32, i32) {
    %c0_i32 = arith.constant 0 : i32
    %c0_i32_0 = arith.constant 0 : i32
    return %arg0, %c0_i32 : i32, i32
  }
  func.func @transform_1(%arg0: i32) -> (i32, i32) {
    %c0_i32 = arith.constant 0 : i32
    %c0_i32_0 = arith.constant 0 : i32
    %c0_i32_1 = arith.constant 0 : i32
    return %c0_i32, %c0_i32_0 : i32, i32
  }
  func.func @transform_2(%arg0: i32) -> (i32, i32) {
    %c0_i32 = arith.constant 0 : i32
    %c0_i32_0 = arith.constant 0 : i32
    %c0_i32_1 = arith.constant 0 : i32
    return %c0_i32, %c0_i32_0 : i32, i32
  }
  func.func @transform_3(%arg0: i32) -> (i32, i32) {
    %c0_i32 = arith.constant 0 : i32
    %c0_i32_0 = arith.constant 0 : i32
    %c0_i32_1 = arith.constant 0 : i32
    return %c0_i32, %c0_i32_0 : i32, i32
  }
  func.func @transform_4(%arg0: i32) -> (i32, i32) {
    %c0_i32 = arith.constant 0 : i32
    %c0_i32_0 = arith.constant 0 : i32
    %c0_i32_1 = arith.constant 0 : i32
    return %c0_i32, %c0_i32_0 : i32, i32
  }
}

module attributes {stable_mosaic.version = 11 : i64} {
  func.func @_conv2_residual_kernel(%arg0: i32, %arg1: memref<1x10x10x8xf32, #tpu.memory_space<vmem>>, %arg2: memref<10x10x8xf32, #tpu.memory_space<vmem>>, %arg3: memref<10x10x8xf32, #tpu.memory_space<vmem>>, %arg4: memref<9x8x8xbf16, #tpu.memory_space<vmem>>, %arg5: memref<1x8xf32, #tpu.memory_space<vmem>>, %arg6: memref<64x8xf32, #tpu.memory_space<vmem>>, %arg7: memref<64x8xf32, #tpu.memory_space<vmem>>) attributes {dimension_semantics = [#tpu.dimension_semantics<parallel>], iteration_bounds = array<i64: 2>, scalar_prefetch = 0 : i64, scratch_operands = 0 : i64, tpu.core_type = #tpu.core_type<tc>, window_params = [{transform_indices = @transform_0, window_bounds = array<i64: 1, 10, 10, 8>}, {pipeline_mode = #tpu.pipeline_mode<synchronous>, transform_indices = @transform_1, window_bounds = array<i64: 10, 10, 8>}, {pipeline_mode = #tpu.pipeline_mode<synchronous>, transform_indices = @transform_2, window_bounds = array<i64: 10, 10, 8>}, {pipeline_mode = #tpu.pipeline_mode<synchronous>, transform_indices = @transform_3, window_bounds = array<i64: 9, 8, 8>}, {pipeline_mode = #tpu.pipeline_mode<synchronous>, transform_indices = @transform_4, window_bounds = array<i64: 1, 8>}, {transform_indices = @transform_5, window_bounds = array<i64: 64, 8>}, {transform_indices = @transform_6, window_bounds = array<i64: 64, 8>}]} {
    %c0 = arith.constant 0 : index
    %c0_0 = arith.constant 0 : index
    %c0_1 = arith.constant 0 : index
    %c0_2 = arith.constant 0 : index
    %0 = vector.load %arg1[%c0, %c0_0, %c0_1, %c0_2] : memref<1x10x10x8xf32, #tpu.memory_space<vmem>>, vector<1x10x10x8xf32>
    %1 = vector.shape_cast %0 : vector<1x10x10x8xf32> to vector<10x10x8xf32>
    %c0_3 = arith.constant 0 : index
    %c0_4 = arith.constant 0 : index
    %c0_5 = arith.constant 0 : index
    %2 = vector.load %arg2[%c0_3, %c0_4, %c0_5] : memref<10x10x8xf32, #tpu.memory_space<vmem>>, vector<10x10x8xf32>
    %3 = arith.mulf %1, %2 : vector<10x10x8xf32>
    %c0_6 = arith.constant 0 : index
    %c0_7 = arith.constant 0 : index
    %c0_8 = arith.constant 0 : index
    %4 = vector.load %arg3[%c0_6, %c0_7, %c0_8] : memref<10x10x8xf32, #tpu.memory_space<vmem>>, vector<10x10x8xf32>
    %5 = arith.addf %3, %4 : vector<10x10x8xf32>
    %cst = arith.constant 0.000000e+00 : f32
    %6 = vector.broadcast %cst : f32 to vector<10x10x8xf32>
    %7 = arith.maximumf %5, %6 : vector<10x10x8xf32>
    %cst_9 = arith.constant 0.000000e+00 : f32
    %8 = vector.broadcast %cst_9 : f32 to vector<64x8xf32>
    %9 = vector.extract_strided_slice %7 {offsets = [0, 0, 0], sizes = [8, 8, 8], strides = [1, 1, 1]} : vector<10x10x8xf32> to vector<8x8x8xf32>
    %10 = vector.shape_cast %9 : vector<8x8x8xf32> to vector<64x8xf32>
    %11 = arith.truncf %10 : vector<64x8xf32> to vector<64x8xbf16>
    %c0_10 = arith.constant 0 : index
    %c0_11 = arith.constant 0 : index
    %c0_12 = arith.constant 0 : index
    %12 = vector.load %arg4[%c0_10, %c0_11, %c0_12] : memref<9x8x8xbf16, #tpu.memory_space<vmem>>, vector<1x8x8xbf16>
    %13 = vector.shape_cast %12 : vector<1x8x8xbf16> to vector<8x8xbf16>
    %cst_13 = arith.constant dense<0.000000e+00> : vector<64x8xf32>
    %14 = tpu.matmul %11, %13, %cst_13 {dimension_numbers = #tpu.dot_dimension_numbers<[1], [0], [0], [1], [0, 0, 1, 1], [], []>} : vector<64x8xbf16>, vector<8x8xbf16>, vector<64x8xf32> -> vector<64x8xf32>
    %15 = arith.addf %8, %14 : vector<64x8xf32>
    %16 = vector.extract_strided_slice %7 {offsets = [0, 1, 0], sizes = [8, 8, 8], strides = [1, 1, 1]} : vector<10x10x8xf32> to vector<8x8x8xf32>
    %17 = vector.shape_cast %16 : vector<8x8x8xf32> to vector<64x8xf32>
    %18 = arith.truncf %17 : vector<64x8xf32> to vector<64x8xbf16>
    %c1 = arith.constant 1 : index
    %c0_14 = arith.constant 0 : index
    %c0_15 = arith.constant 0 : index
    %19 = vector.load %arg4[%c1, %c0_14, %c0_15] : memref<9x8x8xbf16, #tpu.memory_space<vmem>>, vector<1x8x8xbf16>
    %20 = vector.shape_cast %19 : vector<1x8x8xbf16> to vector<8x8xbf16>
    %cst_16 = arith.constant dense<0.000000e+00> : vector<64x8xf32>
    %21 = tpu.matmul %18, %20, %cst_16 {dimension_numbers = #tpu.dot_dimension_numbers<[1], [0], [0], [1], [0, 0, 1, 1], [], []>} : vector<64x8xbf16>, vector<8x8xbf16>, vector<64x8xf32> -> vector<64x8xf32>
    %22 = arith.addf %15, %21 : vector<64x8xf32>
    %23 = vector.extract_strided_slice %7 {offsets = [0, 2, 0], sizes = [8, 8, 8], strides = [1, 1, 1]} : vector<10x10x8xf32> to vector<8x8x8xf32>
    %24 = vector.shape_cast %23 : vector<8x8x8xf32> to vector<64x8xf32>
    %25 = arith.truncf %24 : vector<64x8xf32> to vector<64x8xbf16>
    %c2 = arith.constant 2 : index
    %c0_17 = arith.constant 0 : index
    %c0_18 = arith.constant 0 : index
    %26 = vector.load %arg4[%c2, %c0_17, %c0_18] : memref<9x8x8xbf16, #tpu.memory_space<vmem>>, vector<1x8x8xbf16>
    %27 = vector.shape_cast %26 : vector<1x8x8xbf16> to vector<8x8xbf16>
    %cst_19 = arith.constant dense<0.000000e+00> : vector<64x8xf32>
    %28 = tpu.matmul %25, %27, %cst_19 {dimension_numbers = #tpu.dot_dimension_numbers<[1], [0], [0], [1], [0, 0, 1, 1], [], []>} : vector<64x8xbf16>, vector<8x8xbf16>, vector<64x8xf32> -> vector<64x8xf32>
    %29 = arith.addf %22, %28 : vector<64x8xf32>
    %30 = vector.extract_strided_slice %7 {offsets = [1, 0, 0], sizes = [8, 8, 8], strides = [1, 1, 1]} : vector<10x10x8xf32> to vector<8x8x8xf32>
    %31 = vector.shape_cast %30 : vector<8x8x8xf32> to vector<64x8xf32>
    %32 = arith.truncf %31 : vector<64x8xf32> to vector<64x8xbf16>
    %c3 = arith.constant 3 : index
    %c0_20 = arith.constant 0 : index
    %c0_21 = arith.constant 0 : index
    %33 = vector.load %arg4[%c3, %c0_20, %c0_21] : memref<9x8x8xbf16, #tpu.memory_space<vmem>>, vector<1x8x8xbf16>
    %34 = vector.shape_cast %33 : vector<1x8x8xbf16> to vector<8x8xbf16>
    %cst_22 = arith.constant dense<0.000000e+00> : vector<64x8xf32>
    %35 = tpu.matmul %32, %34, %cst_22 {dimension_numbers = #tpu.dot_dimension_numbers<[1], [0], [0], [1], [0, 0, 1, 1], [], []>} : vector<64x8xbf16>, vector<8x8xbf16>, vector<64x8xf32> -> vector<64x8xf32>
    %36 = arith.addf %29, %35 : vector<64x8xf32>
    %37 = vector.extract_strided_slice %7 {offsets = [1, 1, 0], sizes = [8, 8, 8], strides = [1, 1, 1]} : vector<10x10x8xf32> to vector<8x8x8xf32>
    %38 = vector.shape_cast %37 : vector<8x8x8xf32> to vector<64x8xf32>
    %39 = arith.truncf %38 : vector<64x8xf32> to vector<64x8xbf16>
    %c4 = arith.constant 4 : index
    %c0_23 = arith.constant 0 : index
    %c0_24 = arith.constant 0 : index
    %40 = vector.load %arg4[%c4, %c0_23, %c0_24] : memref<9x8x8xbf16, #tpu.memory_space<vmem>>, vector<1x8x8xbf16>
    %41 = vector.shape_cast %40 : vector<1x8x8xbf16> to vector<8x8xbf16>
    %cst_25 = arith.constant dense<0.000000e+00> : vector<64x8xf32>
    %42 = tpu.matmul %39, %41, %cst_25 {dimension_numbers = #tpu.dot_dimension_numbers<[1], [0], [0], [1], [0, 0, 1, 1], [], []>} : vector<64x8xbf16>, vector<8x8xbf16>, vector<64x8xf32> -> vector<64x8xf32>
    %43 = arith.addf %36, %42 : vector<64x8xf32>
    %44 = vector.extract_strided_slice %7 {offsets = [1, 2, 0], sizes = [8, 8, 8], strides = [1, 1, 1]} : vector<10x10x8xf32> to vector<8x8x8xf32>
    %45 = vector.shape_cast %44 : vector<8x8x8xf32> to vector<64x8xf32>
    %46 = arith.truncf %45 : vector<64x8xf32> to vector<64x8xbf16>
    %c5 = arith.constant 5 : index
    %c0_26 = arith.constant 0 : index
    %c0_27 = arith.constant 0 : index
    %47 = vector.load %arg4[%c5, %c0_26, %c0_27] : memref<9x8x8xbf16, #tpu.memory_space<vmem>>, vector<1x8x8xbf16>
    %48 = vector.shape_cast %47 : vector<1x8x8xbf16> to vector<8x8xbf16>
    %cst_28 = arith.constant dense<0.000000e+00> : vector<64x8xf32>
    %49 = tpu.matmul %46, %48, %cst_28 {dimension_numbers = #tpu.dot_dimension_numbers<[1], [0], [0], [1], [0, 0, 1, 1], [], []>} : vector<64x8xbf16>, vector<8x8xbf16>, vector<64x8xf32> -> vector<64x8xf32>
    %50 = arith.addf %43, %49 : vector<64x8xf32>
    %51 = vector.extract_strided_slice %7 {offsets = [2, 0, 0], sizes = [8, 8, 8], strides = [1, 1, 1]} : vector<10x10x8xf32> to vector<8x8x8xf32>
    %52 = vector.shape_cast %51 : vector<8x8x8xf32> to vector<64x8xf32>
    %53 = arith.truncf %52 : vector<64x8xf32> to vector<64x8xbf16>
    %c6 = arith.constant 6 : index
    %c0_29 = arith.constant 0 : index
    %c0_30 = arith.constant 0 : index
    %54 = vector.load %arg4[%c6, %c0_29, %c0_30] : memref<9x8x8xbf16, #tpu.memory_space<vmem>>, vector<1x8x8xbf16>
    %55 = vector.shape_cast %54 : vector<1x8x8xbf16> to vector<8x8xbf16>
    %cst_31 = arith.constant dense<0.000000e+00> : vector<64x8xf32>
    %56 = tpu.matmul %53, %55, %cst_31 {dimension_numbers = #tpu.dot_dimension_numbers<[1], [0], [0], [1], [0, 0, 1, 1], [], []>} : vector<64x8xbf16>, vector<8x8xbf16>, vector<64x8xf32> -> vector<64x8xf32>
    %57 = arith.addf %50, %56 : vector<64x8xf32>
    %58 = vector.extract_strided_slice %7 {offsets = [2, 1, 0], sizes = [8, 8, 8], strides = [1, 1, 1]} : vector<10x10x8xf32> to vector<8x8x8xf32>
    %59 = vector.shape_cast %58 : vector<8x8x8xf32> to vector<64x8xf32>
    %60 = arith.truncf %59 : vector<64x8xf32> to vector<64x8xbf16>
    %c7 = arith.constant 7 : index
    %c0_32 = arith.constant 0 : index
    %c0_33 = arith.constant 0 : index
    %61 = vector.load %arg4[%c7, %c0_32, %c0_33] : memref<9x8x8xbf16, #tpu.memory_space<vmem>>, vector<1x8x8xbf16>
    %62 = vector.shape_cast %61 : vector<1x8x8xbf16> to vector<8x8xbf16>
    %cst_34 = arith.constant dense<0.000000e+00> : vector<64x8xf32>
    %63 = tpu.matmul %60, %62, %cst_34 {dimension_numbers = #tpu.dot_dimension_numbers<[1], [0], [0], [1], [0, 0, 1, 1], [], []>} : vector<64x8xbf16>, vector<8x8xbf16>, vector<64x8xf32> -> vector<64x8xf32>
    %64 = arith.addf %57, %63 : vector<64x8xf32>
    %65 = vector.extract_strided_slice %7 {offsets = [2, 2, 0], sizes = [8, 8, 8], strides = [1, 1, 1]} : vector<10x10x8xf32> to vector<8x8x8xf32>
    %66 = vector.shape_cast %65 : vector<8x8x8xf32> to vector<64x8xf32>
    %67 = arith.truncf %66 : vector<64x8xf32> to vector<64x8xbf16>
    %c8 = arith.constant 8 : index
    %c0_35 = arith.constant 0 : index
    %c0_36 = arith.constant 0 : index
    %68 = vector.load %arg4[%c8, %c0_35, %c0_36] : memref<9x8x8xbf16, #tpu.memory_space<vmem>>, vector<1x8x8xbf16>
    %69 = vector.shape_cast %68 : vector<1x8x8xbf16> to vector<8x8xbf16>
    %cst_37 = arith.constant dense<0.000000e+00> : vector<64x8xf32>
    %70 = tpu.matmul %67, %69, %cst_37 {dimension_numbers = #tpu.dot_dimension_numbers<[1], [0], [0], [1], [0, 0, 1, 1], [], []>} : vector<64x8xbf16>, vector<8x8xbf16>, vector<64x8xf32> -> vector<64x8xf32>
    %71 = arith.addf %64, %70 : vector<64x8xf32>
    %c0_38 = arith.constant 0 : index
    %c0_39 = arith.constant 0 : index
    %72 = vector.load %arg5[%c0_38, %c0_39] : memref<1x8xf32, #tpu.memory_space<vmem>>, vector<1x8xf32>
    %73 = vector.broadcast %72 : vector<1x8xf32> to vector<64x8xf32>
    %74 = arith.addf %71, %73 : vector<64x8xf32>
    %c0_40 = arith.constant 0 : index
    %c0_41 = arith.constant 0 : index
    %75 = vector.load %arg6[%c0_40, %c0_41] : memref<64x8xf32, #tpu.memory_space<vmem>>, vector<64x8xf32>
    %76 = arith.addf %74, %75 : vector<64x8xf32>
    %c0_42 = arith.constant 0 : index
    %c0_43 = arith.constant 0 : index
    %77 = vector.load %arg7[%c0_42, %c0_43] : memref<64x8xf32, #tpu.memory_space<vmem>>, vector<64x8xf32>
    tpu.vector_store %arg7[%c0_42, %c0_43], %76 {strides = array<i32>} : memref<64x8xf32, #tpu.memory_space<vmem>>, vector<64x8xf32>,
    return
  }
  func.func @transform_0(%arg0: i32) -> (i32, i32, i32, i32) {
    %c0_i32 = arith.constant 0 : i32
    %c0_i32_0 = arith.constant 0 : i32
    %c0_i32_1 = arith.constant 0 : i32
    %c0_i32_2 = arith.constant 0 : i32
    return %arg0, %c0_i32, %c0_i32_0, %c0_i32_1 : i32, i32, i32, i32
  }
  func.func @transform_1(%arg0: i32) -> (i32, i32, i32) {
    %c0_i32 = arith.constant 0 : i32
    %c0_i32_0 = arith.constant 0 : i32
    %c0_i32_1 = arith.constant 0 : i32
    %c0_i32_2 = arith.constant 0 : i32
    return %c0_i32, %c0_i32_0, %c0_i32_1 : i32, i32, i32
  }
  func.func @transform_2(%arg0: i32) -> (i32, i32, i32) {
    %c0_i32 = arith.constant 0 : i32
    %c0_i32_0 = arith.constant 0 : i32
    %c0_i32_1 = arith.constant 0 : i32
    %c0_i32_2 = arith.constant 0 : i32
    return %c0_i32, %c0_i32_0, %c0_i32_1 : i32, i32, i32
  }
  func.func @transform_3(%arg0: i32) -> (i32, i32, i32) {
    %c0_i32 = arith.constant 0 : i32
    %c0_i32_0 = arith.constant 0 : i32
    %c0_i32_1 = arith.constant 0 : i32
    %c0_i32_2 = arith.constant 0 : i32
    return %c0_i32, %c0_i32_0, %c0_i32_1 : i32, i32, i32
  }
  func.func @transform_4(%arg0: i32) -> (i32, i32) {
    %c0_i32 = arith.constant 0 : i32
    %c0_i32_0 = arith.constant 0 : i32
    %c0_i32_1 = arith.constant 0 : i32
    return %c0_i32, %c0_i32_0 : i32, i32
  }
  func.func @transform_5(%arg0: i32) -> (i32, i32) {
    %c0_i32 = arith.constant 0 : i32
    %c0_i32_0 = arith.constant 0 : i32
    return %arg0, %c0_i32 : i32, i32
  }
  func.func @transform_6(%arg0: i32) -> (i32, i32) {
    %c0_i32 = arith.constant 0 : i32
    %c0_i32_0 = arith.constant 0 : i32
    return %arg0, %c0_i32 : i32, i32
  }
}

</mosaic_0001>

<llo_original>
// kernel: stage2_block1_forward.4
$region0: #{stage2_block1_forward.4}
  #allocation0 [shape = 'u32[]', space=smem, size = 0x4, offset = 0x4, fixed_abs, tag = 'smem constant byte address 0x4 - core index']
  #allocation1 [shape = 'u32[144,128]{1,0:T(1,128)}', space=vmem, size = 0x12000, scoped, tag = 'internal scratch']
  #allocation2 [shape = 'f32[1,4]{1,0:T(1,128)}', space=vmem, size = 0x200, scoped, tag = 'scratch operand']
  #allocation3 [shape = 'f32[1,4]{1,0:T(1,128)}', space=vmem, size = 0x200, scoped, tag = 'scratch operand']
  %s0 = inlined_call_operand.vmem [shape: f32[512,4], index: 0, kind: input, shape index: {}]
  %s1 = inlined_call_operand.vmem [shape: f32[1,4], index: 1, kind: input, shape index: {}]
  %s2 = inlined_call_operand.vmem [shape: f32[1,4], index: 2, kind: input, shape index: {}]
  %s3 = inlined_call_operand.vmem [shape: f32[1,4], index: 3, kind: output, shape index: {0}]
  %s4 = inlined_call_operand.vmem [shape: f32[1,4], index: 4, kind: output, shape index: {1}]
  %5 = xla_tuple %s3, %s4
  %s6 = sld [smem:[#allocation0]]
  $region38: #{stage2_block1_forward.4} parent=0
    _
  %s8 = ssub.s32 1, %s6
  %s9 = scalar_select 0, %s8, %s6
  // Predicated region
  $region2: #{stage2_block1_forward.4} parent=0 // pred_check
    _
  $region3: #{stage2_block1_forward.4} parent=0 // pred_check_branch
    %11 = sbr.rel (0) target = $region5
  $region4: #{stage2_block1_forward.4} parent=0 // pred_region
    _
  $region5: #{stage2_block1_forward.4} parent=0 // pred_fallthru
    _
  // Predicated region
  $region6: #{stage2_block1_forward.4} parent=0 // pred_check
    _
  $region7: #{stage2_block1_forward.4} parent=0 // pred_check_branch
    %13 = sbr.rel (0) target = $region9
  $region8: #{stage2_block1_forward.4} parent=0 // pred_region
    _
  $region9: #{stage2_block1_forward.4} parent=0 // pred_fallthru
    _
  // Predicated region
  $region10: #{stage2_block1_forward.4} parent=0 // pred_check
    _
  $region11: #{stage2_block1_forward.4} parent=0 // pred_check_branch
    %15 = sbr.rel (0) target = $region13
  $region12: #{stage2_block1_forward.4} parent=0 // pred_region
    _
  $region13: #{stage2_block1_forward.4} parent=0 // pred_fallthru
    _
  %p16 = scmp.eq.s32.totalorder 0, 0
  // Predicated region
  $region14: #{stage2_block1_forward.4} parent=0 // pred_check
    %p17 = pneg %p16
  $region15: #{stage2_block1_forward.4} parent=0 // pred_check_branch
    %19 = sbr.rel (%p17) target = $region17
  $region16: #{stage2_block1_forward.4} parent=0 // pred_region
    %vm20 = vcmask 24576
    %21 = vst.msk [vmem:[#allocation2] sm:$0x1] %vm20, 0.0
    %22 = vst.msk [vmem:[#allocation3] sm:$0x1] %vm20, 0.0
  $region17: #{stage2_block1_forward.4} parent=0 // pred_fallthru
    _
  %v23 = vld [vmem:[%s0] sm:$0xff]
  %v24 = vld [vmem:[%s0 + $0x8] sm:$0xff]
  %v25 = vld [vmem:[%s0 + $0x10] sm:$0xff]
  %v26 = vld [vmem:[%s0 + $0x18] sm:$0xff]
  %v27 = vld [vmem:[%s0 + $0x20] sm:$0xff]
  %v28 = vld [vmem:[%s0 + $0x28] sm:$0xff]
  %v29 = vld [vmem:[%s0 + $0x30] sm:$0xff]
  %v30 = vld [vmem:[%s0 + $0x38] sm:$0xff]
  %v31 = vld [vmem:[%s0 + $0x40] sm:$0xff]
  %v32 = vld [vmem:[%s0 + $0x48] sm:$0xff]
  %v33 = vld [vmem:[%s0 + $0x50] sm:$0xff]
  %v34 = vld [vmem:[%s0 + $0x58] sm:$0xff]
  %v35 = vld [vmem:[%s0 + $0x60] sm:$0xff]
  %v36 = vld [vmem:[%s0 + $0x68] sm:$0xff]
  %v37 = vld [vmem:[%s0 + $0x70] sm:$0xff]
  %v38 = vld [vmem:[%s0 + $0x78] sm:$0xff]
  %v39 = vld [vmem:[%s0 + $0x80] sm:$0xff]
  %v40 = vld [vmem:[%s0 + $0x88] sm:$0xff]
  %v41 = vld [vmem:[%s0 + $0x90] sm:$0xff]
  %v42 = vld [vmem:[%s0 + $0x98] sm:$0xff]
  %v43 = vld [vmem:[%s0 + $0xa0] sm:$0xff]
  %v44 = vld [vmem:[%s0 + $0xa8] sm:$0xff]
  %v45 = vld [vmem:[%s0 + $0xb0] sm:$0xff]
  %v46 = vld [vmem:[%s0 + $0xb8] sm:$0xff]
  %v47 = vld [vmem:[%s0 + $0xc0] sm:$0xff]
  %v48 = vld [vmem:[%s0 + $0xc8] sm:$0xff]
  %v49 = vld [vmem:[%s0 + $0xd0] sm:$0xff]
  %v50 = vld [vmem:[%s0 + $0xd8] sm:$0xff]
  %v51 = vld [vmem:[%s0 + $0xe0] sm:$0xff]
  %v52 = vld [vmem:[%s0 + $0xe8] sm:$0xff]
  %v53 = vld [vmem:[%s0 + $0xf0] sm:$0xff]
  %v54 = vld [vmem:[%s0 + $0xf8] sm:$0xff]
  %v55 = vld [vmem:[%s0 + $0x100] sm:$0xff]
  %v56 = vld [vmem:[%s0 + $0x108] sm:$0xff]
  %v57 = vld [vmem:[%s0 + $0x110] sm:$0xff]
  %v58 = vld [vmem:[%s0 + $0x118] sm:$0xff]
  %v59 = vld [vmem:[%s0 + $0x120] sm:$0xff]
  %v60 = vld [vmem:[%s0 + $0x128] sm:$0xff]
  %v61 = vld [vmem:[%s0 + $0x130] sm:$0xff]
  %v62 = vld [vmem:[%s0 + $0x138] sm:$0xff]
  %v63 = vld [vmem:[%s0 + $0x140] sm:$0xff]
  %v64 = vld [vmem:[%s0 + $0x148] sm:$0xff]
  %v65 = vld [vmem:[%s0 + $0x150] sm:$0xff]
  %v66 = vld [vmem:[%s0 + $0x158] sm:$0xff]
  %v67 = vld [vmem:[%s0 + $0x160] sm:$0xff]
  %v68 = vld [vmem:[%s0 + $0x168] sm:$0xff]
  %v69 = vld [vmem:[%s0 + $0x170] sm:$0xff]
  %v70 = vld [vmem:[%s0 + $0x178] sm:$0xff]
  %v71 = vld [vmem:[%s0 + $0x180] sm:$0xff]
  %v72 = vld [vmem:[%s0 + $0x188] sm:$0xff]
  %v73 = vld [vmem:[%s0 + $0x190] sm:$0xff]
  %v74 = vld [vmem:[%s0 + $0x198] sm:$0xff]
  %v75 = vld [vmem:[%s0 + $0x1a0] sm:$0xff]
  %v76 = vld [vmem:[%s0 + $0x1a8] sm:$0xff]
  %v77 = vld [vmem:[%s0 + $0x1b0] sm:$0xff]
  %v78 = vld [vmem:[%s0 + $0x1b8] sm:$0xff]
  %v79 = vld [vmem:[%s0 + $0x1c0] sm:$0xff]
  %v80 = vld [vmem:[%s0 + $0x1c8] sm:$0xff]
  %v81 = vld [vmem:[%s0 + $0x1d0] sm:$0xff]
  %v82 = vld [vmem:[%s0 + $0x1d8] sm:$0xff]
  %v83 = vld [vmem:[%s0 + $0x1e0] sm:$0xff]
  %v84 = vld [vmem:[%s0 + $0x1e8] sm:$0xff]
  %v85 = vld [vmem:[%s0 + $0x1f0] sm:$0xff]
  %v86 = vld [vmem:[%s0 + $0x1f8] sm:$0xff]
  %v87 = vld [vmem:[#allocation2] sm:$0x1]
  %vm88 = vcmask 31744
  %v89 = vsel %vm88, %v23, 0.0
  %v90 = vsel %vm88, %v24, 0.0
  %v91 = vadd.f32 %v89, %v90
  %v92 = vsel %vm88, %v25, 0.0
  %v93 = vadd.f32 %v91, %v92
  %v94 = vsel %vm88, %v26, 0.0
  %v95 = vadd.f32 %v93, %v94
  %v96 = vsel %vm88, %v27, 0.0
  %v97 = vadd.f32 %v95, %v96
  %v98 = vsel %vm88, %v28, 0.0
  %v99 = vadd.f32 %v97, %v98
  %v100 = vsel %vm88, %v29, 0.0
  %v101 = vadd.f32 %v99, %v100
  %v102 = vsel %vm88, %v30, 0.0
  %v103 = vadd.f32 %v101, %v102
  %v104 = vsel %vm88, %v31, 0.0
  %v105 = vadd.f32 %v103, %v104
  %v106 = vsel %vm88, %v32, 0.0
  %v107 = vadd.f32 %v105, %v106
  %v108 = vsel %vm88, %v33, 0.0
  %v109 = vadd.f32 %v107, %v108
  %v110 = vsel %vm88, %v34, 0.0
  %v111 = vadd.f32 %v109, %v110
  %v112 = vsel %vm88, %v35, 0.0
  %v113 = vadd.f32 %v111, %v112
  %v114 = vsel %vm88, %v36, 0.0
  %v115 = vadd.f32 %v113, %v114
  %v116 = vsel %vm88, %v37, 0.0
  %v117 = vadd.f32 %v115, %v116
  %v118 = vsel %vm88, %v38, 0.0
  %v119 = vadd.f32 %v117, %v118
  %v120 = vsel %vm88, %v39, 0.0
  %v121 = vadd.f32 %v119, %v120
  %v122 = vsel %vm88, %v40, 0.0
  %v123 = vadd.f32 %v121, %v122
  %v124 = vsel %vm88, %v41, 0.0
  %v125 = vadd.f32 %v123, %v124
  %v126 = vsel %vm88, %v42, 0.0
  %v127 = vadd.f32 %v125, %v126
  %v128 = vsel %vm88, %v43, 0.0
  %v129 = vadd.f32 %v127, %v128
  %v130 = vsel %vm88, %v44, 0.0
  %v131 = vadd.f32 %v129, %v130
  %v132 = vsel %vm88, %v45, 0.0
  %v133 = vadd.f32 %v131, %v132
  %v134 = vsel %vm88, %v46, 0.0
  %v135 = vadd.f32 %v133, %v134
  %v136 = vsel %vm88, %v47, 0.0
  %v137 = vadd.f32 %v135, %v136
  %v138 = vsel %vm88, %v48, 0.0
  %v139 = vadd.f32 %v137, %v138
  %v140 = vsel %vm88, %v49, 0.0
  %v141 = vadd.f32 %v139, %v140
  %v142 = vsel %vm88, %v50, 0.0
  %v143 = vadd.f32 %v141, %v142
  %v144 = vsel %vm88, %v51, 0.0
  %v145 = vadd.f32 %v143, %v144
  %v146 = vsel %vm88, %v52, 0.0
  %v147 = vadd.f32 %v145, %v146
  %v148 = vsel %vm88, %v53, 0.0
  %v149 = vadd.f32 %v147, %v148
  %v150 = vsel %vm88, %v54, 0.0
  %v151 = vadd.f32 %v149, %v150
  %v152 = vsel %vm88, %v55, 0.0
  %v153 = vadd.f32 %v151, %v152
  %v154 = vsel %vm88, %v56, 0.0
  %v155 = vadd.f32 %v153, %v154
  %v156 = vsel %vm88, %v57, 0.0
  %v157 = vadd.f32 %v155, %v156
  %v158 = vsel %vm88, %v58, 0.0
  %v159 = vadd.f32 %v157, %v158
  %v160 = vsel %vm88, %v59, 0.0
  %v161 = vadd.f32 %v159, %v160
  %v162 = vsel %vm88, %v60, 0.0
  %v163 = vadd.f32 %v161, %v162
  %v164 = vsel %vm88, %v61, 0.0
  %v165 = vadd.f32 %v163, %v164
  %v166 = vsel %vm88, %v62, 0.0
  %v167 = vadd.f32 %v165, %v166
  %v168 = vsel %vm88, %v63, 0.0
  %v169 = vadd.f32 %v167, %v168
  %v170 = vsel %vm88, %v64, 0.0
  %v171 = vadd.f32 %v169, %v170
  %v172 = vsel %vm88, %v65, 0.0
  %v173 = vadd.f32 %v171, %v172
  %v174 = vsel %vm88, %v66, 0.0
  %v175 = vadd.f32 %v173, %v174
  %v176 = vsel %vm88, %v67, 0.0
  %v177 = vadd.f32 %v175, %v176
  %v178 = vsel %vm88, %v68, 0.0
  %v179 = vadd.f32 %v177, %v178
  %v180 = vsel %vm88, %v69, 0.0
  %v181 = vadd.f32 %v179, %v180
  %v182 = vsel %vm88, %v70, 0.0
  %v183 = vadd.f32 %v181, %v182
  %v184 = vsel %vm88, %v71, 0.0
  %v185 = vadd.f32 %v183, %v184
  %v186 = vsel %vm88, %v72, 0.0
  %v187 = vadd.f32 %v185, %v186
  %v188 = vsel %vm88, %v73, 0.0
  %v189 = vadd.f32 %v187, %v188
  %v190 = vsel %vm88, %v74, 0.0
  %v191 = vadd.f32 %v189, %v190
  %v192 = vsel %vm88, %v75, 0.0
  %v193 = vadd.f32 %v191, %v192
  %v194 = vsel %vm88, %v76, 0.0
  %v195 = vadd.f32 %v193, %v194
  %v196 = vsel %vm88, %v77, 0.0
  %v197 = vadd.f32 %v195, %v196
  %v198 = vsel %vm88, %v78, 0.0
  %v199 = vadd.f32 %v197, %v198
  %v200 = vsel %vm88, %v79, 0.0
  %v201 = vadd.f32 %v199, %v200
  %v202 = vsel %vm88, %v80, 0.0
  %v203 = vadd.f32 %v201, %v202
  %v204 = vsel %vm88, %v81, 0.0
  %v205 = vadd.f32 %v203, %v204
  %v206 = vsel %vm88, %v82, 0.0
  %v207 = vadd.f32 %v205, %v206
  %v208 = vsel %vm88, %v83, 0.0
  %v209 = vadd.f32 %v207, %v208
  %v210 = vsel %vm88, %v84, 0.0
  %v211 = vadd.f32 %v209, %v210
  %v212 = vsel %vm88, %v85, 0.0
  %v213 = vadd.f32 %v211, %v212
  %v214 = vsel %vm88, %v86, 0.0
  %v215 = vadd.f32 %v213, %v214
  %v216 = vrot.slane %v215, 4
  %v217 = vadd.f32 %v215, %v216
  %v218 = vrot.slane %v217, 2
  %v219 = vadd.f32 %v217, %v218
  %v220 = vrot.slane %v219, 1
  %v221 = vadd.f32 %v219, %v220
  %v222 = vadd.f32 %v87, %v221
  %vm223 = vcmask 24576
  %224 = vst.msk [vmem:[#allocation2] sm:$0x1] %vm223, %v222
  %v225 = vld [vmem:[#allocation3] sm:$0x1]
  %v226 = vmul.f32 %v23, %v23
  %v227 = vmul.f32 %v24, %v24
  %v228 = vmul.f32 %v25, %v25
  %v229 = vmul.f32 %v26, %v26
  %v230 = vmul.f32 %v27, %v27
  %v231 = vmul.f32 %v28, %v28
  %v232 = vmul.f32 %v29, %v29
  %v233 = vmul.f32 %v30, %v30
  %v234 = vmul.f32 %v31, %v31
  %v235 = vmul.f32 %v32, %v32
  %v236 = vmul.f32 %v33, %v33
  %v237 = vmul.f32 %v34, %v34
  %v238 = vmul.f32 %v35, %v35
  %v239 = vmul.f32 %v36, %v36
  %v240 = vmul.f32 %v37, %v37
  %v241 = vmul.f32 %v38, %v38
  %v242 = vmul.f32 %v39, %v39
  %v243 = vmul.f32 %v40, %v40
  %v244 = vmul.f32 %v41, %v41
  %v245 = vmul.f32 %v42, %v42
  %v246 = vmul.f32 %v43, %v43
  %v247 = vmul.f32 %v44, %v44
  %v248 = vmul.f32 %v45, %v45
  %v249 = vmul.f32 %v46, %v46
  %v250 = vmul.f32 %v47, %v47
  %v251 = vmul.f32 %v48, %v48
  %v252 = vmul.f32 %v49, %v49
  %v253 = vmul.f32 %v50, %v50
  %v254 = vmul.f32 %v51, %v51
  %v255 = vmul.f32 %v52, %v52
  %v256 = vmul.f32 %v53, %v53
  %v257 = vmul.f32 %v54, %v54
  %v258 = vmul.f32 %v55, %v55
  %v259 = vmul.f32 %v56, %v56
  %v260 = vmul.f32 %v57, %v57
  %v261 = vmul.f32 %v58, %v58
  %v262 = vmul.f32 %v59, %v59
  %v263 = vmul.f32 %v60, %v60
  %v264 = vmul.f32 %v61, %v61
  %v265 = vmul.f32 %v62, %v62
  %v266 = vmul.f32 %v63, %v63
  %v267 = vmul.f32 %v64, %v64
  %v268 = vmul.f32 %v65, %v65
  %v269 = vmul.f32 %v66, %v66
  %v270 = vmul.f32 %v67, %v67
  %v271 = vmul.f32 %v68, %v68
  %v272 = vmul.f32 %v69, %v69
  %v273 = vmul.f32 %v70, %v70
  %v274 = vmul.f32 %v71, %v71
  %v275 = vmul.f32 %v72, %v72
  %v276 = vmul.f32 %v73, %v73
  %v277 = vmul.f32 %v74, %v74
  %v278 = vmul.f32 %v75, %v75
  %v279 = vmul.f32 %v76, %v76
  %v280 = vmul.f32 %v77, %v77
  %v281 = vmul.f32 %v78, %v78
  %v282 = vmul.f32 %v79, %v79
  %v283 = vmul.f32 %v80, %v80
  %v284 = vmul.f32 %v81, %v81
  %v285 = vmul.f32 %v82, %v82
  %v286 = vmul.f32 %v83, %v83
  %v287 = vmul.f32 %v84, %v84
  %v288 = vmul.f32 %v85, %v85
  %v289 = vmul.f32 %v86, %v86
  %v290 = vsel %vm88, %v226, 0.0
  %v291 = vsel %vm88, %v227, 0.0
  %v292 = vadd.f32 %v290, %v291
  %v293 = vsel %vm88, %v228, 0.0
  %v294 = vadd.f32 %v292, %v293
  %v295 = vsel %vm88, %v229, 0.0
  %v296 = vadd.f32 %v294, %v295
  %v297 = vsel %vm88, %v230, 0.0
  %v298 = vadd.f32 %v296, %v297
  %v299 = vsel %vm88, %v231, 0.0
  %v300 = vadd.f32 %v298, %v299
  %v301 = vsel %vm88, %v232, 0.0
  %v302 = vadd.f32 %v300, %v301
  %v303 = vsel %vm88, %v233, 0.0
  %v304 = vadd.f32 %v302, %v303
  %v305 = vsel %vm88, %v234, 0.0
  %v306 = vadd.f32 %v304, %v305
  %v307 = vsel %vm88, %v235, 0.0
  %v308 = vadd.f32 %v306, %v307
  %v309 = vsel %vm88, %v236, 0.0
  %v310 = vadd.f32 %v308, %v309
  %v311 = vsel %vm88, %v237, 0.0
  %v312 = vadd.f32 %v310, %v311
  %v313 = vsel %vm88, %v238, 0.0
  %v314 = vadd.f32 %v312, %v313
  %v315 = vsel %vm88, %v239, 0.0
  %v316 = vadd.f32 %v314, %v315
  %v317 = vsel %vm88, %v240, 0.0
  %v318 = vadd.f32 %v316, %v317
  %v319 = vsel %vm88, %v241, 0.0
  %v320 = vadd.f32 %v318, %v319
  %v321 = vsel %vm88, %v242, 0.0
  %v322 = vadd.f32 %v320, %v321
  %v323 = vsel %vm88, %v243, 0.0
  %v324 = vadd.f32 %v322, %v323
  %v325 = vsel %vm88, %v244, 0.0
  %v326 = vadd.f32 %v324, %v325
  %v327 = vsel %vm88, %v245, 0.0
  %v328 = vadd.f32 %v326, %v327
  %v329 = vsel %vm88, %v246, 0.0
  %v330 = vadd.f32 %v328, %v329
  %v331 = vsel %vm88, %v247, 0.0
  %v332 = vadd.f32 %v330, %v331
  %v333 = vsel %vm88, %v248, 0.0
  %v334 = vadd.f32 %v332, %v333
  %v335 = vsel %vm88, %v249, 0.0
  %v336 = vadd.f32 %v334, %v335
  %v337 = vsel %vm88, %v250, 0.0
  %v338 = vadd.f32 %v336, %v337
  %v339 = vsel %vm88, %v251, 0.0
  %v340 = vadd.f32 %v338, %v339
  %v341 = vsel %vm88, %v252, 0.0
  %v342 = vadd.f32 %v340, %v341
  %v343 = vsel %vm88, %v253, 0.0
  %v344 = vadd.f32 %v342, %v343
  %v345 = vsel %vm88, %v254, 0.0
  %v346 = vadd.f32 %v344, %v345
  %v347 = vsel %vm88, %v255, 0.0
  %v348 = vadd.f32 %v346, %v347
  %v349 = vsel %vm88, %v256, 0.0
  %v350 = vadd.f32 %v348, %v349
  %v351 = vsel %vm88, %v257, 0.0
  %v352 = vadd.f32 %v350, %v351
  %v353 = vsel %vm88, %v258, 0.0
  %v354 = vadd.f32 %v352, %v353
  %v355 = vsel %vm88, %v259, 0.0
  %v356 = vadd.f32 %v354, %v355
  %v357 = vsel %vm88, %v260, 0.0
  %v358 = vadd.f32 %v356, %v357
  %v359 = vsel %vm88, %v261, 0.0
  %v360 = vadd.f32 %v358, %v359
  %v361 = vsel %vm88, %v262, 0.0
  %v362 = vadd.f32 %v360, %v361
  %v363 = vsel %vm88, %v263, 0.0
  %v364 = vadd.f32 %v362, %v363
  %v365 = vsel %vm88, %v264, 0.0
  %v366 = vadd.f32 %v364, %v365
  %v367 = vsel %vm88, %v265, 0.0
  %v368 = vadd.f32 %v366, %v367
  %v369 = vsel %vm88, %v266, 0.0
  %v370 = vadd.f32 %v368, %v369
  %v371 = vsel %vm88, %v267, 0.0
  %v372 = vadd.f32 %v370, %v371
  %v373 = vsel %vm88, %v268, 0.0
  %v374 = vadd.f32 %v372, %v373
  %v375 = vsel %vm88, %v269, 0.0
  %v376 = vadd.f32 %v374, %v375
  %v377 = vsel %vm88, %v270, 0.0
  %v378 = vadd.f32 %v376, %v377
  %v379 = vsel %vm88, %v271, 0.0
  %v380 = vadd.f32 %v378, %v379
  %v381 = vsel %vm88, %v272, 0.0
  %v382 = vadd.f32 %v380, %v381
  %v383 = vsel %vm88, %v273, 0.0
  %v384 = vadd.f32 %v382, %v383
  %v385 = vsel %vm88, %v274, 0.0
  %v386 = vadd.f32 %v384, %v385
  %v387 = vsel %vm88, %v275, 0.0
  %v388 = vadd.f32 %v386, %v387
  %v389 = vsel %vm88, %v276, 0.0
  %v390 = vadd.f32 %v388, %v389
  %v391 = vsel %vm88, %v277, 0.0
  %v392 = vadd.f32 %v390, %v391
  %v393 = vsel %vm88, %v278, 0.0
  %v394 = vadd.f32 %v392, %v393
  %v395 = vsel %vm88, %v279, 0.0
  %v396 = vadd.f32 %v394, %v395
  %v397 = vsel %vm88, %v280, 0.0
  %v398 = vadd.f32 %v396, %v397
  %v399 = vsel %vm88, %v281, 0.0
  %v400 = vadd.f32 %v398, %v399
  %v401 = vsel %vm88, %v282, 0.0
  %v402 = vadd.f32 %v400, %v401
  %v403 = vsel %vm88, %v283, 0.0
  %v404 = vadd.f32 %v402, %v403
  %v405 = vsel %vm88, %v284, 0.0
  %v406 = vadd.f32 %v404, %v405
  %v407 = vsel %vm88, %v285, 0.0
  %v408 = vadd.f32 %v406, %v407
  %v409 = vsel %vm88, %v286, 0.0
  %v410 = vadd.f32 %v408, %v409
  %v411 = vsel %vm88, %v287, 0.0
  %v412 = vadd.f32 %v410, %v411
  %v413 = vsel %vm88, %v288, 0.0
  %v414 = vadd.f32 %v412, %v413
  %v415 = vsel %vm88, %v289, 0.0
  %v416 = vadd.f32 %v414, %v415
  %v417 = vrot.slane %v416, 4
  %v418 = vadd.f32 %v416, %v417
  %v419 = vrot.slane %v418, 2
  %v420 = vadd.f32 %v418, %v419
  %v421 = vrot.slane %v420, 1
  %v422 = vadd.f32 %v420, %v421
  %v423 = vadd.f32 %v225, %v422
  %424 = vst.msk [vmem:[#allocation3] sm:$0x1] %vm223, %v423
  // Predicated region
  $region18: #{stage2_block1_forward.4} parent=0 // pred_check
    %p425 = pneg %p16
  $region19: #{stage2_block1_forward.4} parent=0 // pred_check_branch
    %427 = sbr.rel (%p425) target = $region21
  $region20: #{stage2_block1_forward.4} parent=0 // pred_region
    %v428 = vld [vmem:[#allocation2] sm:$0x1]
    %v429 = vmul.f32 %v428, 0.001953125
    %v430 = vld [vmem:[#allocation3] sm:$0x1]
    %v431 = vmul.f32 %v430, 0.001953125
    %v432 = vmul.f32 %v429, %v429
    %v433 = vsub.f32 %v431, %v432
    %v434 = vld [vmem:[%s1] sm:$0x1]
    %v435 = vadd.f32 %v433, 1e-05
    %v436 = vrsqrt.pop %v435
    %v437 = vmul.f32 %v434, %v436
    %438 = vst.msk [vmem:[%s3] sm:$0x1] %vm223, %v437
    %v439 = vld [vmem:[%s2] sm:$0x1]
    %v440 = vmul.f32 %v429, %v437
    %v441 = vsub.f32 %v439, %v440
    %442 = vst.msk [vmem:[%s4] sm:$0x1] %vm223, %v441
  $region21: #{stage2_block1_forward.4} parent=0 // pred_fallthru
    _
  // Predicated region
  $region22: #{stage2_block1_forward.4} parent=0 // pred_check
    _
  $region23: #{stage2_block1_forward.4} parent=0 // pred_check_branch
    %444 = sbr.rel (0) target = $region25
  $region24: #{stage2_block1_forward.4} parent=0 // pred_region
    _
  $region25: #{stage2_block1_forward.4} parent=0 // pred_fallthru
    _
  // Predicated region
  $region26: #{stage2_block1_forward.4} parent=0 // pred_check
    _
  $region27: #{stage2_block1_forward.4} parent=0 // pred_check_branch
    %446 = sbr.rel (0) target = $region29
  $region28: #{stage2_block1_forward.4} parent=0 // pred_region
    _
  $region29: #{stage2_block1_forward.4} parent=0 // pred_fallthru
    _
  // Predicated region
  $region30: #{stage2_block1_forward.4} parent=0 // pred_check
    _
  $region31: #{stage2_block1_forward.4} parent=0 // pred_check_branch
    %448 = sbr.rel (0) target = $region33
  $region32: #{stage2_block1_forward.4} parent=0 // pred_region
    _
  $region33: #{stage2_block1_forward.4} parent=0 // pred_fallthru
    _
  // Predicated region
  $region34: #{stage2_block1_forward.4} parent=0 // pred_check
    _
  $region35: #{stage2_block1_forward.4} parent=0 // pred_check_branch
    %450 = sbr.rel (0) target = $region37
  $region36: #{stage2_block1_forward.4} parent=0 // pred_region
    _
  $region37: #{stage2_block1_forward.4} parent=0 // pred_fallthru
    _

// kernel: stage2_block1_forward.5
$region0: #{stage2_block1_forward.5}
  #allocation0 [shape = 'u32[]', space=smem, size = 0x4, offset = 0x4, fixed_abs, tag = 'smem constant byte address 0x4 - core index']
  #allocation1 [shape = 'u32[144,128]{1,0:T(1,128)}', space=vmem, size = 0x12000, scoped, tag = 'internal scratch']
  %s0 = inlined_call_operand.vmem [shape: f32[2,9,9,16], index: 0, kind: input, shape index: {}]
  %s1 = inlined_call_operand.vmem [shape: f32[9,9,16], index: 1, kind: input, shape index: {}]
  %s2 = inlined_call_operand.vmem [shape: f32[9,9,16], index: 2, kind: input, shape index: {}]
  %s3 = inlined_call_operand.vmem [shape: bf16[4,16,16], index: 3, kind: input, shape index: {}]
  %s4 = inlined_call_operand.vmem [shape: f32[1,16], index: 4, kind: input, shape index: {}]
  %s5 = inlined_call_operand.vmem [shape: f32[128,8], index: 5, kind: output, shape index: {0}]
  %s6 = inlined_call_operand.vmem [shape: f32[128,8], index: 6, kind: output, shape index: {1}]
  %7 = xla_tuple %s5, %s6
  %s8 = sld [smem:[#allocation0]]
  $region61: #{stage2_block1_forward.5} parent=0
    _
  %s10 = ssub.s32 1, %s8
  %s11 = scalar_select 0, %s10, %s8
  loop: start=0, step=1, limit=4
  $region2: #{stage2_block1_forward.5} parent=0 // loop_pre_header
    _
  $region3: #{stage2_block1_forward.5} parent=0 // loop_header
    %s13 = sphi 0, %s17
    %p14 = scmp.ge.s32.totalorder %s13, 4
    %s23 = sphi 0, %s25
    %s26 = sphi 0, %s23
    %s27 = sphi 0, %s26
    %s43 = sphi 0, %s27
    %s47 = sphi 0, %s47
    %s49 = sphi 0, %s47
    %s50 = sphi 0, %s49
    %s64 = sphi 0, %s50
    %s68 = sphi 0, %s68
    %s70 = sphi 0, %s68
    %s71 = sphi 0, %s70
    %s85 = sphi 0, %s71
    %s89 = sphi 0, %s89
    %s91 = sphi 0, %s89
    %s92 = sphi 0, %s91
    %s106 = sphi 0, %s92
    %s110 = sphi 0, %s110
    %s112 = sphi 0, %s110
    %s113 = sphi 0, %s112
    %s127 = sphi 0, %s113
    %s133 = sphi 0, %s135
    %s136 = sphi 0, %s133
    %s137 = sphi 0, %s136
    %s153 = sphi 0, %s137
    %s159 = sphi 0, %s161
    %s162 = sphi 0, %s159
    %s163 = sphi 0, %s162
    %s179 = sphi 0, %s163
  $region4: #{stage2_block1_forward.5} parent=0 // loop_header_branch
    %16 = sbr.rel (%p14) target = $region8
  $region5: #{stage2_block1_forward.5} parent=0 // loop_body
    %s18 = ssub.s32 %s13, 1
    %s19 = ssub.s32 %s13, 2
    %s20 = sadd.s32 %s13, 1
    %s21 = ssub.s32 %s13, %s20
    %p22 = scmp.eq.s32.totalorder %s21, 0
    %s24 = sadd.s32 %s23, 1
    %s25 = scalar_select %p22, %s23, %s24
    %p28 = pneg %p22
    %p29 = scmp.eq.s32.totalorder %s13, 1
    %p30 = por %p28, %p29
    %p31 = scmp.ne.s32.totalorder %s23, %s26
    %p32 = scmp.eq.s32.totalorder %s13, 0
    %p33 = por %p31, %p32
    %p34 = scmp.ne.s32.totalorder %s23, %s26
    %p35 = scmp.eq.s32.totalorder %s18, 1
    %p36 = por %p34, %p35
    %p37 = scmp.ne.s32.totalorder %s26, %s27
    %p38 = scmp.eq.s32.totalorder %s18, 0
    %p39 = por %p37, %p38
    %p40 = scmp.ne.s32.totalorder %s26, %s27
    %p41 = scmp.eq.s32.totalorder %s19, 1
    %p42 = por %p40, %p41
    %p44 = scmp.ne.s32.totalorder %s27, %s43
    %p45 = scmp.eq.s32.totalorder %s19, 0
    %p46 = por %p44, %p45
    %s48 = sadd.s32 %s47, 1
    %p51 = scmp.eq.s32.totalorder %s13, 1
    %p52 = scmp.ne.s32.totalorder %s47, %s49
    %p53 = scmp.eq.s32.totalorder %s13, 0
    %p54 = por %p52, %p53
    %p55 = scmp.ne.s32.totalorder %s47, %s49
    %p56 = scmp.eq.s32.totalorder %s18, 1
    %p57 = por %p55, %p56
    %p58 = scmp.ne.s32.totalorder %s49, %s50
    %p59 = scmp.eq.s32.totalorder %s18, 0
    %p60 = por %p58, %p59
    %p61 = scmp.ne.s32.totalorder %s49, %s50
    %p62 = scmp.eq.s32.totalorder %s19, 1
    %p63 = por %p61, %p62
    %p65 = scmp.ne.s32.totalorder %s50, %s64
    %p66 = scmp.eq.s32.totalorder %s19, 0
    %p67 = por %p65, %p66
    %s69 = sadd.s32 %s68, 1
    %p72 = scmp.eq.s32.totalorder %s13, 1
    %p73 = scmp.ne.s32.totalorder %s68, %s70
    %p74 = scmp.eq.s32.totalorder %s13, 0
    %p75 = por %p73, %p74
    %p76 = scmp.ne.s32.totalorder %s68, %s70
    %p77 = scmp.eq.s32.totalorder %s18, 1
    %p78 = por %p76, %p77
    %p79 = scmp.ne.s32.totalorder %s70, %s71
    %p80 = scmp.eq.s32.totalorder %s18, 0
    %p81 = por %p79, %p80
    %p82 = scmp.ne.s32.totalorder %s70, %s71
    %p83 = scmp.eq.s32.totalorder %s19, 1
    %p84 = por %p82, %p83
    %p86 = scmp.ne.s32.totalorder %s71, %s85
    %p87 = scmp.eq.s32.totalorder %s19, 0
    %p88 = por %p86, %p87
    %s90 = sadd.s32 %s89, 1
    %p93 = scmp.eq.s32.totalorder %s13, 1
    %p94 = scmp.ne.s32.totalorder %s89, %s91
    %p95 = scmp.eq.s32.totalorder %s13, 0
    %p96 = por %p94, %p95
    %p97 = scmp.ne.s32.totalorder %s89, %s91
    %p98 = scmp.eq.s32.totalorder %s18, 1
    %p99 = por %p97, %p98
    %p100 = scmp.ne.s32.totalorder %s91, %s92
    %p101 = scmp.eq.s32.totalorder %s18, 0
    %p102 = por %p100, %p101
    %p103 = scmp.ne.s32.totalorder %s91, %s92
    %p104 = scmp.eq.s32.totalorder %s19, 1
    %p105 = por %p103, %p104
    %p107 = scmp.ne.s32.totalorder %s92, %s106
    %p108 = scmp.eq.s32.totalorder %s19, 0
    %p109 = por %p107, %p108
    %s111 = sadd.s32 %s110, 1
    %p114 = scmp.eq.s32.totalorder %s13, 1
    %p115 = scmp.ne.s32.totalorder %s110, %s112
    %p116 = scmp.eq.s32.totalorder %s13, 0
    %p117 = por %p115, %p116
    %p118 = scmp.ne.s32.totalorder %s110, %s112
    %p119 = scmp.eq.s32.totalorder %s18, 1
    %p120 = por %p118, %p119
    %p121 = scmp.ne.s32.totalorder %s112, %s113
    %p122 = scmp.eq.s32.totalorder %s18, 0
    %p123 = por %p121, %p122
    %p124 = scmp.ne.s32.totalorder %s112, %s113
    %p125 = scmp.eq.s32.totalorder %s19, 1
    %p126 = por %p124, %p125
    %p128 = scmp.ne.s32.totalorder %s113, %s127
    %p129 = scmp.eq.s32.totalorder %s19, 0
    %p130 = por %p128, %p129
    %s131 = ssub.s32 %s13, %s20
    %p132 = scmp.eq.s32.totalorder %s131, 0
    %s134 = sadd.s32 %s133, 1
    %s135 = scalar_select %p132, %s133, %s134
    %p138 = pneg %p132
    %p139 = scmp.eq.s32.totalorder %s13, 1
    %p140 = por %p138, %p139
    %p141 = scmp.ne.s32.totalorder %s133, %s136
    %p142 = scmp.eq.s32.totalorder %s13, 0
    %p143 = por %p141, %p142
    %p144 = scmp.ne.s32.totalorder %s133, %s136
    %p145 = scmp.eq.s32.totalorder %s18, 1
    %p146 = por %p144, %p145
    %p147 = scmp.ne.s32.totalorder %s136, %s137
    %p148 = scmp.eq.s32.totalorder %s18, 0
    %p149 = por %p147, %p148
    %p150 = scmp.ne.s32.totalorder %s136, %s137
    %p151 = scmp.eq.s32.totalorder %s19, 1
    %p152 = por %p150, %p151
    %p154 = scmp.ne.s32.totalorder %s137, %s153
    %p155 = scmp.eq.s32.totalorder %s19, 0
    %p156 = por %p154, %p155
    %s157 = ssub.s32 %s13, %s20
    %p158 = scmp.eq.s32.totalorder %s157, 0
    %s160 = sadd.s32 %s159, 1
    %s161 = scalar_select %p158, %s159, %s160
    %p164 = pneg %p158
    %p165 = scmp.eq.s32.totalorder %s13, 1
    %p166 = por %p164, %p165
    %p167 = scmp.ne.s32.totalorder %s159, %s162
    %p168 = scmp.eq.s32.totalorder %s13, 0
    %p169 = por %p167, %p168
    %p170 = scmp.ne.s32.totalorder %s159, %s162
    %p171 = scmp.eq.s32.totalorder %s18, 1
    %p172 = por %p170, %p171
    %p173 = scmp.ne.s32.totalorder %s162, %s163
    %p174 = scmp.eq.s32.totalorder %s18, 0
    %p175 = por %p173, %p174
    %p176 = scmp.ne.s32.totalorder %s162, %s163
    %p177 = scmp.eq.s32.totalorder %s19, 1
    %p178 = por %p176, %p177
    %p180 = scmp.ne.s32.totalorder %s163, %s179
    %p181 = scmp.eq.s32.totalorder %s19, 0
    %p182 = por %p180, %p181
    %p183 = scmp.le.s32.totalorder 1, %s13
    %p184 = scmp.lt.s32.totalorder %s13, 3
    %p185 = pnand %p183, %p184
    %p186 = pneg %p185
    // Predicated region
    $region9: #{stage2_block1_forward.5} parent=5 // pred_check
      _
    $region10: #{stage2_block1_forward.5} parent=5 // pred_check_branch
      %188 = sbr.rel (%p185) target = $region12
    $region11: #{stage2_block1_forward.5} parent=5 // pred_region
      %s189 = ssub.s32 %s13, 1
      // Predicated region
      $region13: #{stage2_block1_forward.5} parent=11 // pred_check
        %p190 = pneg %p60
      $region14: #{stage2_block1_forward.5} parent=11 // pred_check_branch
        %192 = sbr.rel (%p190) target = $region16
      $region15: #{stage2_block1_forward.5} parent=11 // pred_region
        _
      $region16: #{stage2_block1_forward.5} parent=11 // pred_fallthru
        _
      // Predicated region
      $region17: #{stage2_block1_forward.5} parent=11 // pred_check
        %p193 = pneg %p81
      $region18: #{stage2_block1_forward.5} parent=11 // pred_check_branch
        %195 = sbr.rel (%p193) target = $region20
      $region19: #{stage2_block1_forward.5} parent=11 // pred_region
        _
      $region20: #{stage2_block1_forward.5} parent=11 // pred_fallthru
        _
      // Predicated region
      $region21: #{stage2_block1_forward.5} parent=11 // pred_check
        %p196 = pneg %p102
      $region22: #{stage2_block1_forward.5} parent=11 // pred_check_branch
        %198 = sbr.rel (%p196) target = $region24
      $region23: #{stage2_block1_forward.5} parent=11 // pred_region
        _
      $region24: #{stage2_block1_forward.5} parent=11 // pred_fallthru
        _
      // Predicated region
      $region25: #{stage2_block1_forward.5} parent=11 // pred_check
        %p199 = pneg %p123
      $region26: #{stage2_block1_forward.5} parent=11 // pred_check_branch
        %201 = sbr.rel (%p199) target = $region28
      $region27: #{stage2_block1_forward.5} parent=11 // pred_region
        _
      $region28: #{stage2_block1_forward.5} parent=11 // pred_fallthru
        _
    $region12: #{stage2_block1_forward.5} parent=5 // pred_fallthru
      _
    %p202 = scmp.lt.s32.totalorder %s13, 2
    // Predicated region
    $region29: #{stage2_block1_forward.5} parent=5 // pred_check
      %p203 = pneg %p202
    $region30: #{stage2_block1_forward.5} parent=5 // pred_check_branch
      %205 = sbr.rel (%p203) target = $region32
    $region31: #{stage2_block1_forward.5} parent=5 // pred_region
      // Predicated region
      $region33: #{stage2_block1_forward.5} parent=31 // pred_check
        %p206 = pneg %p33
      $region34: #{stage2_block1_forward.5} parent=31 // pred_check_branch
        %208 = sbr.rel (%p206) target = $region36
      $region35: #{stage2_block1_forward.5} parent=31 // pred_region
        %p209 = scmp.lt.s32.totalorder %s13, 1
        %s210 = scalar_select %p209, %s13, 1
        %s211 = smul.addr %s210, 18
        %s212 = smul.addr %s211, 8
        %s213 = scalar_lea.vmem %s0, %s212
      $region36: #{stage2_block1_forward.5} parent=31 // pred_fallthru
        _
    $region32: #{stage2_block1_forward.5} parent=5 // pred_fallthru
      _
    %p214 = scmp.le.s32.totalorder 1, %s13
    %p215 = scmp.lt.s32.totalorder %s13, 3
    %p216 = pnand %p214, %p215
    %p217 = pneg %p216
    // Predicated region
    $region37: #{stage2_block1_forward.5} parent=5 // pred_check
      _
    $region38: #{stage2_block1_forward.5} parent=5 // pred_check_branch
      %219 = sbr.rel (%p216) target = $region40
    $region39: #{stage2_block1_forward.5} parent=5 // pred_region
      %s220 = ssub.s32 %s13, 1
      %p221 = scmp.lt.s32.totalorder %s18, 1
      %s222 = scalar_select %p221, %s18, 1
      %s223 = smul.addr %s222, 18
      %s224 = smul.addr %s223, 8
      %s225 = scalar_lea.vmem %s0, %s224
      %p226 = pneg %p39
      %p227 = pneg %p36
      %p228 = pneg %p60
      %p229 = pneg %p57
      %p230 = pneg %p81
      %p231 = pneg %p78
      %p232 = pneg %p102
      %p233 = pneg %p99
      %p234 = pneg %p123
      %p235 = pneg %p120
      %p236 = pneg %p149
      %p237 = pneg %p146
      %s238 = smul.u32 8, %s18
      %p239 = scmp.lt.s32.totalorder %s238, 15
      %s240 = scalar_select %p239, %s238, 15
      %s241 = smul.addr %s240, 8
      %s242 = scalar_lea.vmem %s5, %s241
      %p243 = pneg %p175
      %p244 = pneg %p172
      %s245 = smul.u32 8, %s18
      %p246 = scmp.lt.s32.totalorder %s245, 15
      %s247 = scalar_select %p246, %s245, 15
      %s248 = smul.addr %s247, 8
      %s249 = scalar_lea.vmem %s6, %s248
      %p250 = scmp.lt.s32.totalorder %s18, 1
      %s251 = scalar_select %p250, %s18, 1
      %s252 = smul.addr %s251, 18
      %s253 = smul.addr %s252, 8
      %s254 = scalar_lea.vmem %s0, %s253
      %s255 = smul.u32 8, %s18
      %p256 = scmp.lt.s32.totalorder %s255, 15
      %s257 = scalar_select %p256, %s255, 15
      %s258 = smul.addr %s257, 8
      %s259 = scalar_lea.vmem %s5, %s258
      %s260 = smul.u32 8, %s18
      %s261 = smul.u32 8, %s18
      %p262 = scmp.lt.s32.totalorder %s261, 15
      %s263 = scalar_select %p262, %s261, 15
      %s264 = smul.addr %s263, 8
      %s265 = scalar_lea.vmem %s6, %s264
      %s266 = smul.u32 8, %s18
      %v268 = vld [vmem:[%s254] sm:$0xff]
      %v269 = vld [vmem:[%s254 + $0x8] sm:$0x1]
      %v270 = vld [vmem:[%s254 + $0x10] sm:$0xff]
      %v271 = vld [vmem:[%s254 + $0x18] sm:$0x1]
      %v272 = vld [vmem:[%s254 + $0x20] sm:$0xff]
      %v273 = vld [vmem:[%s254 + $0x28] sm:$0x1]
      %v274 = vld [vmem:[%s254 + $0x30] sm:$0xff]
      %v275 = vld [vmem:[%s254 + $0x38] sm:$0x1]
      %v276 = vld [vmem:[%s254 + $0x40] sm:$0xff]
      %v277 = vld [vmem:[%s254 + $0x48] sm:$0x1]
      %v278 = vld [vmem:[%s254 + $0x50] sm:$0xff]
      %v279 = vld [vmem:[%s254 + $0x58] sm:$0x1]
      %v280 = vld [vmem:[%s254 + $0x60] sm:$0xff]
      %v281 = vld [vmem:[%s254 + $0x68] sm:$0x1]
      %v282 = vld [vmem:[%s254 + $0x70] sm:$0xff]
      %v283 = vld [vmem:[%s254 + $0x78] sm:$0x1]
      %v284 = vld [vmem:[%s254 + $0x80] sm:$0xff]
      %v285 = vld [vmem:[%s254 + $0x88] sm:$0x1]
      %v286 = vld [vmem:[%s1] sm:$0xff]
      %v287 = vld [vmem:[%s1 + $0x8] sm:$0x1]
      %v288 = vld [vmem:[%s1 + $0x10] sm:$0xff]
      %v289 = vld [vmem:[%s1 + $0x18] sm:$0x1]
      %v290 = vld [vmem:[%s1 + $0x20] sm:$0xff]
      %v291 = vld [vmem:[%s1 + $0x28] sm:$0x1]
      %v292 = vld [vmem:[%s1 + $0x30] sm:$0xff]
      %v293 = vld [vmem:[%s1 + $0x38] sm:$0x1]
      %v294 = vld [vmem:[%s1 + $0x40] sm:$0xff]
      %v295 = vld [vmem:[%s1 + $0x48] sm:$0x1]
      %v296 = vld [vmem:[%s1 + $0x50] sm:$0xff]
      %v297 = vld [vmem:[%s1 + $0x58] sm:$0x1]
      %v298 = vld [vmem:[%s1 + $0x60] sm:$0xff]
      %v299 = vld [vmem:[%s1 + $0x68] sm:$0x1]
      %v300 = vld [vmem:[%s1 + $0x70] sm:$0xff]
      %v301 = vld [vmem:[%s1 + $0x78] sm:$0x1]
      %v302 = vld [vmem:[%s1 + $0x80] sm:$0xff]
      %v303 = vld [vmem:[%s1 + $0x88] sm:$0x1]
      %v304 = vmul.f32 %v268, %v286
      %v305 = vmul.f32 %v269, %v287
      %v306 = vmul.f32 %v270, %v288
      %v307 = vmul.f32 %v271, %v289
      %v308 = vmul.f32 %v272, %v290
      %v309 = vmul.f32 %v273, %v291
      %v310 = vmul.f32 %v274, %v292
      %v311 = vmul.f32 %v275, %v293
      %v312 = vmul.f32 %v276, %v294
      %v313 = vmul.f32 %v277, %v295
      %v314 = vmul.f32 %v278, %v296
      %v315 = vmul.f32 %v279, %v297
      %v316 = vmul.f32 %v280, %v298
      %v317 = vmul.f32 %v281, %v299
      %v318 = vmul.f32 %v282, %v300
      %v319 = vmul.f32 %v283, %v301
      %v320 = vmul.f32 %v284, %v302
      %v321 = vmul.f32 %v285, %v303
      %v322 = vld [vmem:[%s2] sm:$0xff]
      %v323 = vld [vmem:[%s2 + $0x8] sm:$0x1]
      %v324 = vld [vmem:[%s2 + $0x10] sm:$0xff]
      %v325 = vld [vmem:[%s2 + $0x18] sm:$0x1]
      %v326 = vld [vmem:[%s2 + $0x20] sm:$0xff]
      %v327 = vld [vmem:[%s2 + $0x28] sm:$0x1]
      %v328 = vld [vmem:[%s2 + $0x30] sm:$0xff]
      %v329 = vld [vmem:[%s2 + $0x38] sm:$0x1]
      %v330 = vld [vmem:[%s2 + $0x40] sm:$0xff]
      %v331 = vld [vmem:[%s2 + $0x48] sm:$0x1]
      %v332 = vld [vmem:[%s2 + $0x50] sm:$0xff]
      %v333 = vld [vmem:[%s2 + $0x58] sm:$0x1]
      %v334 = vld [vmem:[%s2 + $0x60] sm:$0xff]
      %v335 = vld [vmem:[%s2 + $0x68] sm:$0x1]
      %v336 = vld [vmem:[%s2 + $0x70] sm:$0xff]
      %v337 = vld [vmem:[%s2 + $0x78] sm:$0x1]
      %v338 = vld [vmem:[%s2 + $0x80] sm:$0xff]
      %v339 = vld [vmem:[%s2 + $0x88] sm:$0x1]
      %v340 = vadd.f32 %v304, %v322
      %v341 = vadd.f32 %v305, %v323
      %v342 = vadd.f32 %v306, %v324
      %v343 = vadd.f32 %v307, %v325
      %v344 = vadd.f32 %v308, %v326
      %v345 = vadd.f32 %v309, %v327
      %v346 = vadd.f32 %v310, %v328
      %v347 = vadd.f32 %v311, %v329
      %v348 = vadd.f32 %v312, %v330
      %v349 = vadd.f32 %v313, %v331
      %v350 = vadd.f32 %v314, %v332
      %v351 = vadd.f32 %v315, %v333
      %v352 = vadd.f32 %v316, %v334
      %v353 = vadd.f32 %v317, %v335
      %v354 = vadd.f32 %v318, %v336
      %v355 = vadd.f32 %v319, %v337
      %v356 = vadd.f32 %v320, %v338
      %v357 = vadd.f32 %v321, %v339
      %v358 = vmax.f32 %v340, 0.0
      %v359 = vmax.f32 %v341, 0.0
      %v360 = vmax.f32 %v342, 0.0
      %v361 = vmax.f32 %v343, 0.0
      %v362 = vmax.f32 %v344, 0.0
      %v363 = vmax.f32 %v345, 0.0
      %v364 = vmax.f32 %v346, 0.0
      %v365 = vmax.f32 %v347, 0.0
      %v366 = vmax.f32 %v348, 0.0
      %v367 = vmax.f32 %v349, 0.0
      %v368 = vmax.f32 %v350, 0.0
      %v369 = vmax.f32 %v351, 0.0
      %v370 = vmax.f32 %v352, 0.0
      %v371 = vmax.f32 %v353, 0.0
      %v372 = vmax.f32 %v354, 0.0
      %v373 = vmax.f32 %v355, 0.0
      %v374 = vmax.f32 %v356, 0.0
      %v375 = vmax.f32 %v357, 0.0
      %v376 = vpack.c.bf16 %v360, %v358
      %v377 = vpack.c.bf16 %v364, %v362
      %v378 = vpack.c.bf16 %v368, %v366
      %v379 = vpack.c.bf16 %v372, %v370
      %v380 = vld [vmem:[%s3] sm:$0xf]
      %v381 = vld [vmem:[%s3 + $0x4] sm:$0xf]
      %vm398 = vcmask 1046528
      %v399 = vrot.slane %v358, 1
      %v400 = vrot.slane %v359, 1
      %v401 = vsel %vm398, %v399, %v400
      %v402 = vrot.slane %v360, 1
      %v403 = vrot.slane %v361, 1
      %v404 = vsel %vm398, %v402, %v403
      %v405 = vrot.slane %v362, 1
      %v406 = vrot.slane %v363, 1
      %v407 = vsel %vm398, %v405, %v406
      %v408 = vrot.slane %v364, 1
      %v409 = vrot.slane %v365, 1
      %v410 = vsel %vm398, %v408, %v409
      %v411 = vrot.slane %v366, 1
      %v412 = vrot.slane %v367, 1
      %v413 = vsel %vm398, %v411, %v412
      %v414 = vrot.slane %v368, 1
      %v415 = vrot.slane %v369, 1
      %v416 = vsel %vm398, %v414, %v415
      %v417 = vrot.slane %v370, 1
      %v418 = vrot.slane %v371, 1
      %v419 = vsel %vm398, %v417, %v418
      %v420 = vrot.slane %v372, 1
      %v421 = vrot.slane %v373, 1
      %v422 = vsel %vm398, %v420, %v421
      %v431 = vpack.c.bf16 %v404, %v401
      %v432 = vpack.c.bf16 %v410, %v407
      %v433 = vpack.c.bf16 %v416, %v413
      %v434 = vpack.c.bf16 %v422, %v419
      %s435 = scalar_lea.vmem %s3, 8
      %v436 = vld [vmem:[%s435] sm:$0xf]
      %v437 = vld [vmem:[%s435 + $0x4] sm:$0xf]
      %v440 = vunpack.c.l.b16 %v436
      %v441 = vunpack.c.l.b16 %v437
      %v442 = vpack.c.b16 %v441, %v440
      %vm444 = vcmask 130048
      %v446 = vsel %vm444, %v431, 0
      %v449 = vsel %vm444, %v432, 0
      %v452 = vsel %vm444, %v433, 0
      %v455 = vsel %vm444, %v434, 0
      %457 = vmatprep.subr.bf16.mxu0 0
      %458 = vmatpush1.bf16.msra.mxu0 %v442
      %459 = vmatprep.subr.bf16.mxu0 0
      %460 = vmatpush1.bf16.msra.mxu0 0
      %461 = vmatprep.subr.bf16.mxu0 0
      %462 = vmatpush1.bf16.msra.mxu0 0
      %463 = vmatprep.subr.bf16.mxu0 0
      %464 = vmatpush1.bf16.msra.mxu0 0
      %465 = vmatprep.subr.bf16.mxu0 0
      %466 = vmatpush1.bf16.msra.mxu0 0
      %467 = vmatprep.subr.bf16.mxu0 0
      %468 = vmatpush1.bf16.msra.mxu0 0
      %469 = vmatprep.subr.bf16.mxu0 0
      %470 = vmatpush1.bf16.msra.mxu0 0
      %471 = vmatprep.subr.bf16.mxu0 0
      %472 = vmatpush1.bf16.msra.mxu0 0
      %473 = vmatprep.subr.bf16.mxu0 0
      %474 = vmatpush1.bf16.msra.mxu0 0
      %475 = vmatprep.subr.bf16.mxu0 0
      %476 = vmatpush1.bf16.msra.mxu0 0
      %477 = vmatprep.subr.bf16.mxu0 0
      %478 = vmatpush1.bf16.msra.mxu0 0
      %479 = vmatprep.subr.bf16.mxu0 0
      %480 = vmatpush1.bf16.msra.mxu0 0
      %481 = vmatprep.subr.bf16.mxu0 0
      %482 = vmatpush1.bf16.msra.mxu0 0
      %483 = vmatprep.subr.bf16.mxu0 0
      %484 = vmatpush1.bf16.msra.mxu0 0
      %485 = vmatprep.subr.bf16.mxu0 0
      %486 = vmatpush1.bf16.msra.mxu0 0
      %487 = vmatprep.subr.bf16.mxu0 0
      %488 = vmatpush1.bf16.msra.mxu0 0
      %489 = vmatprep.mubr.bf16.mxu0 0
      %490 = vmatmul.mubr.bf16.gmra.mrb[0].mxu0 %v446
      %v491 = vpop.f32.mrb[0].mxu0
      %v492 = vadd.f32 0.0, %v491
      %v493 = vpop.f32.mrb[0].mxu0
      %v494 = vpop.f32.mrb[0].mxu0
      %v495 = vadd.f32 0.0, %v494
      %v496 = vpop.f32.mrb[0].mxu0
      %497 = vmatprep.mubr.bf16.mxu0 0
      %498 = vmatmul.mubr.bf16.gmra.mrb[0].mxu0 %v449
      %v499 = vpop.f32.mrb[0].mxu0
      %v500 = vadd.f32 0.0, %v499
      %v501 = vpop.f32.mrb[0].mxu0
      %v502 = vpop.f32.mrb[0].mxu0
      %v503 = vadd.f32 0.0, %v502
      %v504 = vpop.f32.mrb[0].mxu0
      %505 = vmatprep.mubr.bf16.mxu0 0
      %506 = vmatmul.mubr.bf16.gmra.mrb[0].mxu0 %v452
      %v507 = vpop.f32.mrb[0].mxu0
      %v508 = vadd.f32 0.0, %v507
      %v509 = vpop.f32.mrb[0].mxu0
      %v510 = vpop.f32.mrb[0].mxu0
      %v511 = vadd.f32 0.0, %v510
      %v512 = vpop.f32.mrb[0].mxu0
      %513 = vmatprep.mubr.bf16.mxu0 0
      %514 = vmatmul.mubr.bf16.gmra.mrb[0].mxu0 %v455
      %v515 = vpop.f32.mrb[0].mxu0
      %v516 = vadd.f32 0.0, %v515
      %v517 = vpop.f32.mrb[0].mxu0
      %v518 = vpop.f32.mrb[0].mxu0
      %v519 = vadd.f32 0.0, %v518
      %v520 = vpop.f32.mrb[0].mxu0
      %521 = vdwg.mxu0
      %v524 = vunpack.c.l.b16 %v380
      %v525 = vunpack.c.l.b16 %v381
      %v526 = vpack.c.b16 %v525, %v524
      %v529 = vsel %vm444, %v376, 0
      %v532 = vsel %vm444, %v377, 0
      %v535 = vsel %vm444, %v378, 0
      %v538 = vsel %vm444, %v379, 0
      %540 = vmatprep.subr.bf16.mxu0 0
      %541 = vmatpush1.bf16.msra.mxu0 %v526
      %542 = vmatprep.subr.bf16.mxu0 0
      %543 = vmatpush1.bf16.msra.mxu0 0
      %544 = vmatprep.subr.bf16.mxu0 0
      %545 = vmatpush1.bf16.msra.mxu0 0
      %546 = vmatprep.subr.bf16.mxu0 0
      %547 = vmatpush1.bf16.msra.mxu0 0
      %548 = vmatprep.subr.bf16.mxu0 0
      %549 = vmatpush1.bf16.msra.mxu0 0
      %550 = vmatprep.subr.bf16.mxu0 0
      %551 = vmatpush1.bf16.msra.mxu0 0
      %552 = vmatprep.subr.bf16.mxu0 0
      %553 = vmatpush1.bf16.msra.mxu0 0
      %554 = vmatprep.subr.bf16.mxu0 0
      %555 = vmatpush1.bf16.msra.mxu0 0
      %556 = vmatprep.subr.bf16.mxu0 0
      %557 = vmatpush1.bf16.msra.mxu0 0
      %558 = vmatprep.subr.bf16.mxu0 0
      %559 = vmatpush1.bf16.msra.mxu0 0
      %560 = vmatprep.subr.bf16.mxu0 0
      %561 = vmatpush1.bf16.msra.mxu0 0
      %562 = vmatprep.subr.bf16.mxu0 0
      %563 = vmatpush1.bf16.msra.mxu0 0
      %564 = vmatprep.subr.bf16.mxu0 0
      %565 = vmatpush1.bf16.msra.mxu0 0
      %566 = vmatprep.subr.bf16.mxu0 0
      %567 = vmatpush1.bf16.msra.mxu0 0
      %568 = vmatprep.subr.bf16.mxu0 0
      %569 = vmatpush1.bf16.msra.mxu0 0
      %570 = vmatprep.subr.bf16.mxu0 0
      %571 = vmatpush1.bf16.msra.mxu0 0
      %572 = vmatprep.mubr.bf16.mxu0 0
      %573 = vmatmul.mubr.bf16.gmra.mrb[0].mxu0 %v529
      %v574 = vpop.f32.mrb[0].mxu0
      %v575 = vadd.f32 %v492, %v574
      %v576 = vpop.f32.mrb[0].mxu0
      %v577 = vpop.f32.mrb[0].mxu0
      %v578 = vadd.f32 %v495, %v577
      %v579 = vpop.f32.mrb[0].mxu0
      %580 = vmatprep.mubr.bf16.mxu0 0
      %581 = vmatmul.mubr.bf16.gmra.mrb[0].mxu0 %v532
      %v582 = vpop.f32.mrb[0].mxu0
      %v583 = vadd.f32 %v500, %v582
      %v584 = vpop.f32.mrb[0].mxu0
      %v585 = vpop.f32.mrb[0].mxu0
      %v586 = vadd.f32 %v503, %v585
      %v587 = vpop.f32.mrb[0].mxu0
      %588 = vmatprep.mubr.bf16.mxu0 0
      %589 = vmatmul.mubr.bf16.gmra.mrb[0].mxu0 %v535
      %v590 = vpop.f32.mrb[0].mxu0
      %v591 = vadd.f32 %v508, %v590
      %v592 = vpop.f32.mrb[0].mxu0
      %v593 = vpop.f32.mrb[0].mxu0
      %v594 = vadd.f32 %v511, %v593
      %v595 = vpop.f32.mrb[0].mxu0
      %596 = vmatprep.mubr.bf16.mxu0 0
      %597 = vmatmul.mubr.bf16.gmra.mrb[0].mxu0 %v538
      %v598 = vpop.f32.mrb[0].mxu0
      %v599 = vadd.f32 %v516, %v598
      %v600 = vpop.f32.mrb[0].mxu0
      %v601 = vpop.f32.mrb[0].mxu0
      %v602 = vadd.f32 %v519, %v601
      %v603 = vpop.f32.mrb[0].mxu0
      %604 = vdwg.mxu0
      %v605 = vpack.c.bf16 %v362, %v360
      %v606 = vpack.c.bf16 %v366, %v364
      %v607 = vpack.c.bf16 %v370, %v368
      %v608 = vpack.c.bf16 %v374, %v372
      %s609 = scalar_lea.vmem %s3, 16
      %v610 = vld [vmem:[%s609] sm:$0xf]
      %v611 = vld [vmem:[%s609 + $0x4] sm:$0xf]
      %v614 = vunpack.c.l.b16 %v610
      %v615 = vunpack.c.l.b16 %v611
      %v616 = vpack.c.b16 %v615, %v614
      %v619 = vsel %vm444, %v605, 0
      %v622 = vsel %vm444, %v606, 0
      %v625 = vsel %vm444, %v607, 0
      %v628 = vsel %vm444, %v608, 0
      %630 = vmatprep.subr.bf16.mxu0 0
      %631 = vmatpush1.bf16.msra.mxu0 %v616
      %632 = vmatprep.subr.bf16.mxu0 0
      %633 = vmatpush1.bf16.msra.mxu0 0
      %634 = vmatprep.subr.bf16.mxu0 0
      %635 = vmatpush1.bf16.msra.mxu0 0
      %636 = vmatprep.subr.bf16.mxu0 0
      %637 = vmatpush1.bf16.msra.mxu0 0
      %638 = vmatprep.subr.bf16.mxu0 0
      %639 = vmatpush1.bf16.msra.mxu0 0
      %640 = vmatprep.subr.bf16.mxu0 0
      %641 = vmatpush1.bf16.msra.mxu0 0
      %642 = vmatprep.subr.bf16.mxu0 0
      %643 = vmatpush1.bf16.msra.mxu0 0
      %644 = vmatprep.subr.bf16.mxu0 0
      %645 = vmatpush1.bf16.msra.mxu0 0
      %646 = vmatprep.subr.bf16.mxu0 0
      %647 = vmatpush1.bf16.msra.mxu0 0
      %648 = vmatprep.subr.bf16.mxu0 0
      %649 = vmatpush1.bf16.msra.mxu0 0
      %650 = vmatprep.subr.bf16.mxu0 0
      %651 = vmatpush1.bf16.msra.mxu0 0
      %652 = vmatprep.subr.bf16.mxu0 0
      %653 = vmatpush1.bf16.msra.mxu0 0
      %654 = vmatprep.subr.bf16.mxu0 0
      %655 = vmatpush1.bf16.msra.mxu0 0
      %656 = vmatprep.subr.bf16.mxu0 0
      %657 = vmatpush1.bf16.msra.mxu0 0
      %658 = vmatprep.subr.bf16.mxu0 0
      %659 = vmatpush1.bf16.msra.mxu0 0
      %660 = vmatprep.subr.bf16.mxu0 0
      %661 = vmatpush1.bf16.msra.mxu0 0
      %662 = vmatprep.mubr.bf16.mxu0 0
      %663 = vmatmul.mubr.bf16.gmra.mrb[0].mxu0 %v619
      %v664 = vpop.f32.mrb[0].mxu0
      %v665 = vadd.f32 0.0, %v664
      %v666 = vpop.f32.mrb[0].mxu0
      %v667 = vpop.f32.mrb[0].mxu0
      %v668 = vadd.f32 0.0, %v667
      %v669 = vpop.f32.mrb[0].mxu0
      %670 = vmatprep.mubr.bf16.mxu0 0
      %671 = vmatmul.mubr.bf16.gmra.mrb[0].mxu0 %v622
      %v672 = vpop.f32.mrb[0].mxu0
      %v673 = vadd.f32 0.0, %v672
      %v674 = vpop.f32.mrb[0].mxu0
      %v675 = vpop.f32.mrb[0].mxu0
      %v676 = vadd.f32 0.0, %v675
      %v677 = vpop.f32.mrb[0].mxu0
      %678 = vmatprep.mubr.bf16.mxu0 0
      %679 = vmatmul.mubr.bf16.gmra.mrb[0].mxu0 %v625
      %v680 = vpop.f32.mrb[0].mxu0
      %v681 = vadd.f32 0.0, %v680
      %v682 = vpop.f32.mrb[0].mxu0
      %v683 = vpop.f32.mrb[0].mxu0
      %v684 = vadd.f32 0.0, %v683
      %v685 = vpop.f32.mrb[0].mxu0
      %686 = vmatprep.mubr.bf16.mxu0 0
      %687 = vmatmul.mubr.bf16.gmra.mrb[0].mxu0 %v628
      %v688 = vpop.f32.mrb[0].mxu0
      %v689 = vadd.f32 0.0, %v688
      %v690 = vpop.f32.mrb[0].mxu0
      %v691 = vpop.f32.mrb[0].mxu0
      %v692 = vadd.f32 0.0, %v691
      %v693 = vpop.f32.mrb[0].mxu0
      %694 = vdwg.mxu0
      %v695 = vadd.f32 %v575, %v665
      %v696 = vadd.f32 %v578, %v668
      %v697 = vadd.f32 %v583, %v673
      %v698 = vadd.f32 %v586, %v676
      %v699 = vadd.f32 %v591, %v681
      %v700 = vadd.f32 %v594, %v684
      %v701 = vadd.f32 %v599, %v689
      %v702 = vadd.f32 %v602, %v692
      %v705 = vrot.slane %v374, 1
      %v706 = vrot.slane %v375, 1
      %v707 = vsel %vm398, %v705, %v706
      %v709 = vpack.c.bf16 %v407, %v404
      %v710 = vpack.c.bf16 %v413, %v410
      %v711 = vpack.c.bf16 %v419, %v416
      %v712 = vpack.c.bf16 %v707, %v422
      %s713 = scalar_lea.vmem %s3, 24
      %v714 = vld [vmem:[%s713] sm:$0xf]
      %v715 = vld [vmem:[%s713 + $0x4] sm:$0xf]
      %v718 = vunpack.c.l.b16 %v714
      %v719 = vunpack.c.l.b16 %v715
      %v720 = vpack.c.b16 %v719, %v718
      %v723 = vsel %vm444, %v709, 0
      %v726 = vsel %vm444, %v710, 0
      %v729 = vsel %vm444, %v711, 0
      %v732 = vsel %vm444, %v712, 0
      %734 = vmatprep.subr.bf16.mxu0 0
      %735 = vmatpush1.bf16.msra.mxu0 %v720
      %736 = vmatprep.subr.bf16.mxu0 0
      %737 = vmatpush1.bf16.msra.mxu0 0
      %738 = vmatprep.subr.bf16.mxu0 0
      %739 = vmatpush1.bf16.msra.mxu0 0
      %740 = vmatprep.subr.bf16.mxu0 0
      %741 = vmatpush1.bf16.msra.mxu0 0
      %742 = vmatprep.subr.bf16.mxu0 0
      %743 = vmatpush1.bf16.msra.mxu0 0
      %744 = vmatprep.subr.bf16.mxu0 0
      %745 = vmatpush1.bf16.msra.mxu0 0
      %746 = vmatprep.subr.bf16.mxu0 0
      %747 = vmatpush1.bf16.msra.mxu0 0
      %748 = vmatprep.subr.bf16.mxu0 0
      %749 = vmatpush1.bf16.msra.mxu0 0
      %750 = vmatprep.subr.bf16.mxu0 0
      %751 = vmatpush1.bf16.msra.mxu0 0
      %752 = vmatprep.subr.bf16.mxu0 0
      %753 = vmatpush1.bf16.msra.mxu0 0
      %754 = vmatprep.subr.bf16.mxu0 0
      %755 = vmatpush1.bf16.msra.mxu0 0
      %756 = vmatprep.subr.bf16.mxu0 0
      %757 = vmatpush1.bf16.msra.mxu0 0
      %758 = vmatprep.subr.bf16.mxu0 0
      %759 = vmatpush1.bf16.msra.mxu0 0
      %760 = vmatprep.subr.bf16.mxu0 0
      %761 = vmatpush1.bf16.msra.mxu0 0
      %762 = vmatprep.subr.bf16.mxu0 0
      %763 = vmatpush1.bf16.msra.mxu0 0
      %764 = vmatprep.subr.bf16.mxu0 0
      %765 = vmatpush1.bf16.msra.mxu0 0
      %766 = vmatprep.mubr.bf16.mxu0 0
      %767 = vmatmul.mubr.bf16.gmra.mrb[0].mxu0 %v723
      %v768 = vpop.f32.mrb[0].mxu0
      %v769 = vadd.f32 0.0, %v768
      %v770 = vpop.f32.mrb[0].mxu0
      %v771 = vpop.f32.mrb[0].mxu0
      %v772 = vadd.f32 0.0, %v771
      %v773 = vpop.f32.mrb[0].mxu0
      %774 = vmatprep.mubr.bf16.mxu0 0
      %775 = vmatmul.mubr.bf16.gmra.mrb[0].mxu0 %v726
      %v776 = vpop.f32.mrb[0].mxu0
      %v777 = vadd.f32 0.0, %v776
      %v778 = vpop.f32.mrb[0].mxu0
      %v779 = vpop.f32.mrb[0].mxu0
      %v780 = vadd.f32 0.0, %v779
      %v781 = vpop.f32.mrb[0].mxu0
      %782 = vmatprep.mubr.bf16.mxu0 0
      %783 = vmatmul.mubr.bf16.gmra.mrb[0].mxu0 %v729
      %v784 = vpop.f32.mrb[0].mxu0
      %v785 = vadd.f32 0.0, %v784
      %v786 = vpop.f32.mrb[0].mxu0
      %v787 = vpop.f32.mrb[0].mxu0
      %v788 = vadd.f32 0.0, %v787
      %v789 = vpop.f32.mrb[0].mxu0
      %790 = vmatprep.mubr.bf16.mxu0 0
      %791 = vmatmul.mubr.bf16.gmra.mrb[0].mxu0 %v732
      %v792 = vpop.f32.mrb[0].mxu0
      %v793 = vadd.f32 0.0, %v792
      %v794 = vpop.f32.mrb[0].mxu0
      %v795 = vpop.f32.mrb[0].mxu0
      %v796 = vadd.f32 0.0, %v795
      %v797 = vpop.f32.mrb[0].mxu0
      %798 = vdwg.mxu0
      %v799 = vadd.f32 %v695, %v769
      %v800 = vadd.f32 %v696, %v772
      %v801 = vadd.f32 %v697, %v777
      %v802 = vadd.f32 %v698, %v780
      %v803 = vadd.f32 %v699, %v785
      %v804 = vadd.f32 %v700, %v788
      %v805 = vadd.f32 %v701, %v793
      %v806 = vadd.f32 %v702, %v796
      %v807 = vld [vmem:[%s4] sm:$0x1]
      %v809 = vlaneseq
      %v810 = vshrl.u32 %v809, 7
      %v811 = vsub.s32 0, %v810
      %v812 = vrot.slane %v807, %v811
      %v814 = vadd.f32 %v799, %v812
      %v815 = vadd.f32 %v800, %v812
      %v816 = vadd.f32 %v801, %v812
      %v817 = vadd.f32 %v802, %v812
      %v818 = vadd.f32 %v803, %v812
      %v819 = vadd.f32 %v804, %v812
      %v820 = vadd.f32 %v805, %v812
      %v821 = vadd.f32 %v806, %v812
      %vm822 = vcmask 64512
      %823 = vst.msk [vmem:[%s259] sm:$0xff] %vm822, %v814
      %824 = vst.msk [vmem:[%s259 + $0x8] sm:$0xff] %vm822, %v815
      %825 = vst.msk [vmem:[%s259 + $0x10] sm:$0xff] %vm822, %v816
      %826 = vst.msk [vmem:[%s259 + $0x18] sm:$0xff] %vm822, %v817
      %827 = vst.msk [vmem:[%s259 + $0x20] sm:$0xff] %vm822, %v818
      %828 = vst.msk [vmem:[%s259 + $0x28] sm:$0xff] %vm822, %v819
      %829 = vst.msk [vmem:[%s259 + $0x30] sm:$0xff] %vm822, %v820
      %830 = vst.msk [vmem:[%s259 + $0x38] sm:$0xff] %vm822, %v821
      %839 = vrot.lane.b32.xlu0 %v814, 120
      %v840 = vpop.permute.xlu0 %839
      %841 = vrot.lane.b32.xlu0 %v815, 120
      %v842 = vpop.permute.xlu0 %841
      %843 = vrot.lane.b32.xlu0 %v816, 120
      %v844 = vpop.permute.xlu0 %843
      %845 = vrot.lane.b32.xlu0 %v817, 120
      %v846 = vpop.permute.xlu0 %845
      %847 = vrot.lane.b32.xlu0 %v818, 120
      %v848 = vpop.permute.xlu0 %847
      %849 = vrot.lane.b32.xlu0 %v819, 120
      %v850 = vpop.permute.xlu0 %849
      %851 = vrot.lane.b32.xlu0 %v820, 120
      %v852 = vpop.permute.xlu0 %851
      %853 = vrot.lane.b32.xlu0 %v821, 120
      %v854 = vpop.permute.xlu0 %853
      %863 = vst.msk [vmem:[%s265] sm:$0xff] %vm822, %v840
      %864 = vst.msk [vmem:[%s265 + $0x8] sm:$0xff] %vm822, %v842
      %865 = vst.msk [vmem:[%s265 + $0x10] sm:$0xff] %vm822, %v844
      %866 = vst.msk [vmem:[%s265 + $0x18] sm:$0xff] %vm822, %v846
      %867 = vst.msk [vmem:[%s265 + $0x20] sm:$0xff] %vm822, %v848
      %868 = vst.msk [vmem:[%s265 + $0x28] sm:$0xff] %vm822, %v850
      %869 = vst.msk [vmem:[%s265 + $0x30] sm:$0xff] %vm822, %v852
      %870 = vst.msk [vmem:[%s265 + $0x38] sm:$0xff] %vm822, %v854
      %s871 = smul.u32 8, %s18
      %p872 = scmp.lt.s32.totalorder %s871, 15
      %s873 = scalar_select %p872, %s871, 15
      %s874 = smul.addr %s873, 8
      %s875 = scalar_lea.vmem %s5, %s874
      %s876 = smul.u32 8, %s18
      %p877 = scmp.lt.s32.totalorder %s876, 15
      %s878 = scalar_select %p877, %s876, 15
      %s879 = smul.addr %s878, 8
      %s880 = scalar_lea.vmem %s6, %s879
      // Predicated region
      $region41: #{stage2_block1_forward.5} parent=39 // pred_check
        %p881 = pneg %p146
      $region42: #{stage2_block1_forward.5} parent=39 // pred_check_branch
        %883 = sbr.rel (%p881) target = $region44
      $region43: #{stage2_block1_forward.5} parent=39 // pred_region
        %s884 = smul.u32 8, %s18
      $region44: #{stage2_block1_forward.5} parent=39 // pred_fallthru
        _
      // Predicated region
      $region45: #{stage2_block1_forward.5} parent=39 // pred_check
        %p885 = pneg %p172
      $region46: #{stage2_block1_forward.5} parent=39 // pred_check_branch
        %887 = sbr.rel (%p885) target = $region48
      $region47: #{stage2_block1_forward.5} parent=39 // pred_region
        %s888 = smul.u32 8, %s18
      $region48: #{stage2_block1_forward.5} parent=39 // pred_fallthru
        _
    $region40: #{stage2_block1_forward.5} parent=5 // pred_fallthru
      _
    %p889 = scmp.le.s32.totalorder 2, %s13
    // Predicated region
    $region49: #{stage2_block1_forward.5} parent=5 // pred_check
      %p890 = pneg %p889
    $region50: #{stage2_block1_forward.5} parent=5 // pred_check_branch
      %892 = sbr.rel (%p890) target = $region52
    $region51: #{stage2_block1_forward.5} parent=5 // pred_region
      %s893 = ssub.s32 %s13, 2
      // Predicated region
      $region53: #{stage2_block1_forward.5} parent=51 // pred_check
        %p894 = pneg %p152
      $region54: #{stage2_block1_forward.5} parent=51 // pred_check_branch
        %896 = sbr.rel (%p894) target = $region56
      $region55: #{stage2_block1_forward.5} parent=51 // pred_region
        %s897 = smul.u32 8, %s19
        %p898 = scmp.lt.s32.totalorder %s897, 15
        %s899 = scalar_select %p898, %s897, 15
        %s900 = smul.addr %s899, 8
        %s901 = scalar_lea.vmem %s5, %s900
      $region56: #{stage2_block1_forward.5} parent=51 // pred_fallthru
        _
      // Predicated region
      $region57: #{stage2_block1_forward.5} parent=51 // pred_check
        %p902 = pneg %p178
      $region58: #{stage2_block1_forward.5} parent=51 // pred_check_branch
        %904 = sbr.rel (%p902) target = $region60
      $region59: #{stage2_block1_forward.5} parent=51 // pred_region
        %s905 = smul.u32 8, %s19
        %p906 = scmp.lt.s32.totalorder %s905, 15
        %s907 = scalar_select %p906, %s905, 15
        %s908 = smul.addr %s907, 8
        %s909 = scalar_lea.vmem %s6, %s908
      $region60: #{stage2_block1_forward.5} parent=51 // pred_fallthru
        _
    $region52: #{stage2_block1_forward.5} parent=5 // pred_fallthru
      _
  $region6: #{stage2_block1_forward.5} parent=0 // loop_footer
    %s17 = sadd.s32 1, %s13
  $region7: #{stage2_block1_forward.5} parent=0 // loop_footer_branch
    %12 = sbr.rel target = $region3
  $region8: #{stage2_block1_forward.5} parent=0 // loop_exit
    _

// kernel: stage2_block1_forward.6
$region0: #{stage2_block1_forward.6}
  #allocation0 [shape = 'u32[]', space=smem, size = 0x4, offset = 0x4, fixed_abs, tag = 'smem constant byte address 0x4 - core index']
  #allocation1 [shape = 'u32[144,128]{1,0:T(1,128)}', space=vmem, size = 0x12000, scoped, tag = 'internal scratch']
  #allocation2 [shape = 'f32[1,8]{1,0:T(1,128)}', space=vmem, size = 0x200, scoped, tag = 'scratch operand']
  #allocation3 [shape = 'f32[1,8]{1,0:T(1,128)}', space=vmem, size = 0x200, scoped, tag = 'scratch operand']
  %s0 = inlined_call_operand.vmem [shape: f32[128,8], index: 0, kind: input, shape index: {}]
  %s1 = inlined_call_operand.vmem [shape: f32[1,8], index: 1, kind: input, shape index: {}]
  %s2 = inlined_call_operand.vmem [shape: f32[1,8], index: 2, kind: input, shape index: {}]
  %s3 = inlined_call_operand.vmem [shape: f32[1,8], index: 3, kind: output, shape index: {0}]
  %s4 = inlined_call_operand.vmem [shape: f32[1,8], index: 4, kind: output, shape index: {1}]
  %5 = xla_tuple %s3, %s4
  %s6 = sld [smem:[#allocation0]]
  $region38: #{stage2_block1_forward.6} parent=0
    _
  %s8 = ssub.s32 1, %s6
  %s9 = scalar_select 0, %s8, %s6
  // Predicated region
  $region2: #{stage2_block1_forward.6} parent=0 // pred_check
    _
  $region3: #{stage2_block1_forward.6} parent=0 // pred_check_branch
    %11 = sbr.rel (0) target = $region5
  $region4: #{stage2_block1_forward.6} parent=0 // pred_region
    _
  $region5: #{stage2_block1_forward.6} parent=0 // pred_fallthru
    _
  // Predicated region
  $region6: #{stage2_block1_forward.6} parent=0 // pred_check
    _
  $region7: #{stage2_block1_forward.6} parent=0 // pred_check_branch
    %13 = sbr.rel (0) target = $region9
  $region8: #{stage2_block1_forward.6} parent=0 // pred_region
    _
  $region9: #{stage2_block1_forward.6} parent=0 // pred_fallthru
    _
  // Predicated region
  $region10: #{stage2_block1_forward.6} parent=0 // pred_check
    _
  $region11: #{stage2_block1_forward.6} parent=0 // pred_check_branch
    %15 = sbr.rel (0) target = $region13
  $region12: #{stage2_block1_forward.6} parent=0 // pred_region
    _
  $region13: #{stage2_block1_forward.6} parent=0 // pred_fallthru
    _
  %p16 = scmp.eq.s32.totalorder 0, 0
  // Predicated region
  $region14: #{stage2_block1_forward.6} parent=0 // pred_check
    %p17 = pneg %p16
  $region15: #{stage2_block1_forward.6} parent=0 // pred_check_branch
    %19 = sbr.rel (%p17) target = $region17
  $region16: #{stage2_block1_forward.6} parent=0 // pred_region
    %vm20 = vcmask 57344
    %21 = vst.msk [vmem:[#allocation2] sm:$0x1] %vm20, 0.0
    %22 = vst.msk [vmem:[#allocation3] sm:$0x1] %vm20, 0.0
  $region17: #{stage2_block1_forward.6} parent=0 // pred_fallthru
    _
  %v23 = vld [vmem:[%s0] sm:$0xff]
  %v24 = vld [vmem:[%s0 + $0x8] sm:$0xff]
  %v25 = vld [vmem:[%s0 + $0x10] sm:$0xff]
  %v26 = vld [vmem:[%s0 + $0x18] sm:$0xff]
  %v27 = vld [vmem:[%s0 + $0x20] sm:$0xff]
  %v28 = vld [vmem:[%s0 + $0x28] sm:$0xff]
  %v29 = vld [vmem:[%s0 + $0x30] sm:$0xff]
  %v30 = vld [vmem:[%s0 + $0x38] sm:$0xff]
  %v31 = vld [vmem:[%s0 + $0x40] sm:$0xff]
  %v32 = vld [vmem:[%s0 + $0x48] sm:$0xff]
  %v33 = vld [vmem:[%s0 + $0x50] sm:$0xff]
  %v34 = vld [vmem:[%s0 + $0x58] sm:$0xff]
  %v35 = vld [vmem:[%s0 + $0x60] sm:$0xff]
  %v36 = vld [vmem:[%s0 + $0x68] sm:$0xff]
  %v37 = vld [vmem:[%s0 + $0x70] sm:$0xff]
  %v38 = vld [vmem:[%s0 + $0x78] sm:$0xff]
  %v39 = vld [vmem:[#allocation2] sm:$0x1]
  %vm40 = vcmask 64512
  %v41 = vsel %vm40, %v23, 0.0
  %v42 = vsel %vm40, %v24, 0.0
  %v43 = vadd.f32 %v41, %v42
  %v44 = vsel %vm40, %v25, 0.0
  %v45 = vadd.f32 %v43, %v44
  %v46 = vsel %vm40, %v26, 0.0
  %v47 = vadd.f32 %v45, %v46
  %v48 = vsel %vm40, %v27, 0.0
  %v49 = vadd.f32 %v47, %v48
  %v50 = vsel %vm40, %v28, 0.0
  %v51 = vadd.f32 %v49, %v50
  %v52 = vsel %vm40, %v29, 0.0
  %v53 = vadd.f32 %v51, %v52
  %v54 = vsel %vm40, %v30, 0.0
  %v55 = vadd.f32 %v53, %v54
  %v56 = vsel %vm40, %v31, 0.0
  %v57 = vadd.f32 %v55, %v56
  %v58 = vsel %vm40, %v32, 0.0
  %v59 = vadd.f32 %v57, %v58
  %v60 = vsel %vm40, %v33, 0.0
  %v61 = vadd.f32 %v59, %v60
  %v62 = vsel %vm40, %v34, 0.0
  %v63 = vadd.f32 %v61, %v62
  %v64 = vsel %vm40, %v35, 0.0
  %v65 = vadd.f32 %v63, %v64
  %v66 = vsel %vm40, %v36, 0.0
  %v67 = vadd.f32 %v65, %v66
  %v68 = vsel %vm40, %v37, 0.0
  %v69 = vadd.f32 %v67, %v68
  %v70 = vsel %vm40, %v38, 0.0
  %v71 = vadd.f32 %v69, %v70
  %v72 = vrot.slane %v71, 4
  %v73 = vadd.f32 %v71, %v72
  %v74 = vrot.slane %v73, 2
  %v75 = vadd.f32 %v73, %v74
  %v76 = vrot.slane %v75, 1
  %v77 = vadd.f32 %v75, %v76
  %v78 = vadd.f32 %v39, %v77
  %vm79 = vcmask 57344
  %80 = vst.msk [vmem:[#allocation2] sm:$0x1] %vm79, %v78
  %v81 = vld [vmem:[#allocation3] sm:$0x1]
  %v82 = vmul.f32 %v23, %v23
  %v83 = vmul.f32 %v24, %v24
  %v84 = vmul.f32 %v25, %v25
  %v85 = vmul.f32 %v26, %v26
  %v86 = vmul.f32 %v27, %v27
  %v87 = vmul.f32 %v28, %v28
  %v88 = vmul.f32 %v29, %v29
  %v89 = vmul.f32 %v30, %v30
  %v90 = vmul.f32 %v31, %v31
  %v91 = vmul.f32 %v32, %v32
  %v92 = vmul.f32 %v33, %v33
  %v93 = vmul.f32 %v34, %v34
  %v94 = vmul.f32 %v35, %v35
  %v95 = vmul.f32 %v36, %v36
  %v96 = vmul.f32 %v37, %v37
  %v97 = vmul.f32 %v38, %v38
  %v98 = vsel %vm40, %v82, 0.0
  %v99 = vsel %vm40, %v83, 0.0
  %v100 = vadd.f32 %v98, %v99
  %v101 = vsel %vm40, %v84, 0.0
  %v102 = vadd.f32 %v100, %v101
  %v103 = vsel %vm40, %v85, 0.0
  %v104 = vadd.f32 %v102, %v103
  %v105 = vsel %vm40, %v86, 0.0
  %v106 = vadd.f32 %v104, %v105
  %v107 = vsel %vm40, %v87, 0.0
  %v108 = vadd.f32 %v106, %v107
  %v109 = vsel %vm40, %v88, 0.0
  %v110 = vadd.f32 %v108, %v109
  %v111 = vsel %vm40, %v89, 0.0
  %v112 = vadd.f32 %v110, %v111
  %v113 = vsel %vm40, %v90, 0.0
  %v114 = vadd.f32 %v112, %v113
  %v115 = vsel %vm40, %v91, 0.0
  %v116 = vadd.f32 %v114, %v115
  %v117 = vsel %vm40, %v92, 0.0
  %v118 = vadd.f32 %v116, %v117
  %v119 = vsel %vm40, %v93, 0.0
  %v120 = vadd.f32 %v118, %v119
  %v121 = vsel %vm40, %v94, 0.0
  %v122 = vadd.f32 %v120, %v121
  %v123 = vsel %vm40, %v95, 0.0
  %v124 = vadd.f32 %v122, %v123
  %v125 = vsel %vm40, %v96, 0.0
  %v126 = vadd.f32 %v124, %v125
  %v127 = vsel %vm40, %v97, 0.0
  %v128 = vadd.f32 %v126, %v127
  %v129 = vrot.slane %v128, 4
  %v130 = vadd.f32 %v128, %v129
  %v131 = vrot.slane %v130, 2
  %v132 = vadd.f32 %v130, %v131
  %v133 = vrot.slane %v132, 1
  %v134 = vadd.f32 %v132, %v133
  %v135 = vadd.f32 %v81, %v134
  %136 = vst.msk [vmem:[#allocation3] sm:$0x1] %vm79, %v135
  // Predicated region
  $region18: #{stage2_block1_forward.6} parent=0 // pred_check
    %p137 = pneg %p16
  $region19: #{stage2_block1_forward.6} parent=0 // pred_check_branch
    %139 = sbr.rel (%p137) target = $region21
  $region20: #{stage2_block1_forward.6} parent=0 // pred_region
    %v140 = vld [vmem:[#allocation2] sm:$0x1]
    %v141 = vmul.f32 %v140, 0.0078125
    %v142 = vld [vmem:[#allocation3] sm:$0x1]
    %v143 = vmul.f32 %v142, 0.0078125
    %v144 = vmul.f32 %v141, %v141
    %v145 = vsub.f32 %v143, %v144
    %v146 = vld [vmem:[%s1] sm:$0x1]
    %v147 = vadd.f32 %v145, 1e-05
    %v148 = vrsqrt.pop %v147
    %v149 = vmul.f32 %v146, %v148
    %150 = vst.msk [vmem:[%s3] sm:$0x1] %vm79, %v149
    %v151 = vld [vmem:[%s2] sm:$0x1]
    %v152 = vmul.f32 %v141, %v149
    %v153 = vsub.f32 %v151, %v152
    %154 = vst.msk [vmem:[%s4] sm:$0x1] %vm79, %v153
  $region21: #{stage2_block1_forward.6} parent=0 // pred_fallthru
    _
  // Predicated region
  $region22: #{stage2_block1_forward.6} parent=0 // pred_check
    _
  $region23: #{stage2_block1_forward.6} parent=0 // pred_check_branch
    %156 = sbr.rel (0) target = $region25
  $region24: #{stage2_block1_forward.6} parent=0 // pred_region
    _
  $region25: #{stage2_block1_forward.6} parent=0 // pred_fallthru
    _
  // Predicated region
  $region26: #{stage2_block1_forward.6} parent=0 // pred_check
    _
  $region27: #{stage2_block1_forward.6} parent=0 // pred_check_branch
    %158 = sbr.rel (0) target = $region29
  $region28: #{stage2_block1_forward.6} parent=0 // pred_region
    _
  $region29: #{stage2_block1_forward.6} parent=0 // pred_fallthru
    _
  // Predicated region
  $region30: #{stage2_block1_forward.6} parent=0 // pred_check
    _
  $region31: #{stage2_block1_forward.6} parent=0 // pred_check_branch
    %160 = sbr.rel (0) target = $region33
  $region32: #{stage2_block1_forward.6} parent=0 // pred_region
    _
  $region33: #{stage2_block1_forward.6} parent=0 // pred_fallthru
    _
  // Predicated region
  $region34: #{stage2_block1_forward.6} parent=0 // pred_check
    _
  $region35: #{stage2_block1_forward.6} parent=0 // pred_check_branch
    %162 = sbr.rel (0) target = $region37
  $region36: #{stage2_block1_forward.6} parent=0 // pred_region
    _
  $region37: #{stage2_block1_forward.6} parent=0 // pred_fallthru
    _

// kernel: stage2_block1_forward.7
$region0: #{stage2_block1_forward.7}
  #allocation0 [shape = 'u32[]', space=smem, size = 0x4, offset = 0x4, fixed_abs, tag = 'smem constant byte address 0x4 - core index']
  #allocation1 [shape = 'u32[144,128]{1,0:T(1,128)}', space=vmem, size = 0x12000, scoped, tag = 'internal scratch']
  %s0 = inlined_call_operand.vmem [shape: f32[2,10,10,8], index: 0, kind: input, shape index: {}]
  %s1 = inlined_call_operand.vmem [shape: f32[10,10,8], index: 1, kind: input, shape index: {}]
  %s2 = inlined_call_operand.vmem [shape: f32[10,10,8], index: 2, kind: input, shape index: {}]
  %s3 = inlined_call_operand.vmem [shape: bf16[9,8,8], index: 3, kind: input, shape index: {}]
  %s4 = inlined_call_operand.vmem [shape: f32[1,8], index: 4, kind: input, shape index: {}]
  %s5 = inlined_call_operand.vmem [shape: f32[128,8], index: 5, kind: input, shape index: {}, may-alias: {5,6}]
  %s6 = inlined_call_operand.vmem [shape: f32[128,8], index: 6, kind: output, shape index: {}, may-alias: {5,6}]
  %s7 = sld [smem:[#allocation0]]
  $region57: #{stage2_block1_forward.7} parent=0
    _
  %s9 = ssub.s32 1, %s7
  %s10 = scalar_select 0, %s9, %s7
  loop: start=0, step=1, limit=4
  $region2: #{stage2_block1_forward.7} parent=0 // loop_pre_header
    _
  $region3: #{stage2_block1_forward.7} parent=0 // loop_header
    %s12 = sphi 0, %s16
    %p13 = scmp.ge.s32.totalorder %s12, 4
    %s22 = sphi 0, %s24
    %s25 = sphi 0, %s22
    %s26 = sphi 0, %s25
    %s42 = sphi 0, %s26
    %s46 = sphi 0, %s46
    %s48 = sphi 0, %s46
    %s49 = sphi 0, %s48
    %s63 = sphi 0, %s49
    %s67 = sphi 0, %s67
    %s69 = sphi 0, %s67
    %s70 = sphi 0, %s69
    %s84 = sphi 0, %s70
    %s88 = sphi 0, %s88
    %s90 = sphi 0, %s88
    %s91 = sphi 0, %s90
    %s105 = sphi 0, %s91
    %s109 = sphi 0, %s109
    %s111 = sphi 0, %s109
    %s112 = sphi 0, %s111
    %s126 = sphi 0, %s112
    %s132 = sphi 0, %s134
    %s135 = sphi 0, %s132
    %s136 = sphi 0, %s135
    %s152 = sphi 0, %s136
    %s158 = sphi 0, %s160
    %s161 = sphi 0, %s158
    %s162 = sphi 0, %s161
    %s178 = sphi 0, %s162
  $region4: #{stage2_block1_forward.7} parent=0 // loop_header_branch
    %15 = sbr.rel (%p13) target = $region8
  $region5: #{stage2_block1_forward.7} parent=0 // loop_body
    %s17 = ssub.s32 %s12, 1
    %s18 = ssub.s32 %s12, 2
    %s19 = sadd.s32 %s12, 1
    %s20 = ssub.s32 %s12, %s19
    %p21 = scmp.eq.s32.totalorder %s20, 0
    %s23 = sadd.s32 %s22, 1
    %s24 = scalar_select %p21, %s22, %s23
    %p27 = pneg %p21
    %p28 = scmp.eq.s32.totalorder %s12, 1
    %p29 = por %p27, %p28
    %p30 = scmp.ne.s32.totalorder %s22, %s25
    %p31 = scmp.eq.s32.totalorder %s12, 0
    %p32 = por %p30, %p31
    %p33 = scmp.ne.s32.totalorder %s22, %s25
    %p34 = scmp.eq.s32.totalorder %s17, 1
    %p35 = por %p33, %p34
    %p36 = scmp.ne.s32.totalorder %s25, %s26
    %p37 = scmp.eq.s32.totalorder %s17, 0
    %p38 = por %p36, %p37
    %p39 = scmp.ne.s32.totalorder %s25, %s26
    %p40 = scmp.eq.s32.totalorder %s18, 1
    %p41 = por %p39, %p40
    %p43 = scmp.ne.s32.totalorder %s26, %s42
    %p44 = scmp.eq.s32.totalorder %s18, 0
    %p45 = por %p43, %p44
    %s47 = sadd.s32 %s46, 1
    %p50 = scmp.eq.s32.totalorder %s12, 1
    %p51 = scmp.ne.s32.totalorder %s46, %s48
    %p52 = scmp.eq.s32.totalorder %s12, 0
    %p53 = por %p51, %p52
    %p54 = scmp.ne.s32.totalorder %s46, %s48
    %p55 = scmp.eq.s32.totalorder %s17, 1
    %p56 = por %p54, %p55
    %p57 = scmp.ne.s32.totalorder %s48, %s49
    %p58 = scmp.eq.s32.totalorder %s17, 0
    %p59 = por %p57, %p58
    %p60 = scmp.ne.s32.totalorder %s48, %s49
    %p61 = scmp.eq.s32.totalorder %s18, 1
    %p62 = por %p60, %p61
    %p64 = scmp.ne.s32.totalorder %s49, %s63
    %p65 = scmp.eq.s32.totalorder %s18, 0
    %p66 = por %p64, %p65
    %s68 = sadd.s32 %s67, 1
    %p71 = scmp.eq.s32.totalorder %s12, 1
    %p72 = scmp.ne.s32.totalorder %s67, %s69
    %p73 = scmp.eq.s32.totalorder %s12, 0
    %p74 = por %p72, %p73
    %p75 = scmp.ne.s32.totalorder %s67, %s69
    %p76 = scmp.eq.s32.totalorder %s17, 1
    %p77 = por %p75, %p76
    %p78 = scmp.ne.s32.totalorder %s69, %s70
    %p79 = scmp.eq.s32.totalorder %s17, 0
    %p80 = por %p78, %p79
    %p81 = scmp.ne.s32.totalorder %s69, %s70
    %p82 = scmp.eq.s32.totalorder %s18, 1
    %p83 = por %p81, %p82
    %p85 = scmp.ne.s32.totalorder %s70, %s84
    %p86 = scmp.eq.s32.totalorder %s18, 0
    %p87 = por %p85, %p86
    %s89 = sadd.s32 %s88, 1
    %p92 = scmp.eq.s32.totalorder %s12, 1
    %p93 = scmp.ne.s32.totalorder %s88, %s90
    %p94 = scmp.eq.s32.totalorder %s12, 0
    %p95 = por %p93, %p94
    %p96 = scmp.ne.s32.totalorder %s88, %s90
    %p97 = scmp.eq.s32.totalorder %s17, 1
    %p98 = por %p96, %p97
    %p99 = scmp.ne.s32.totalorder %s90, %s91
    %p100 = scmp.eq.s32.totalorder %s17, 0
    %p101 = por %p99, %p100
    %p102 = scmp.ne.s32.totalorder %s90, %s91
    %p103 = scmp.eq.s32.totalorder %s18, 1
    %p104 = por %p102, %p103
    %p106 = scmp.ne.s32.totalorder %s91, %s105
    %p107 = scmp.eq.s32.totalorder %s18, 0
    %p108 = por %p106, %p107
    %s110 = sadd.s32 %s109, 1
    %p113 = scmp.eq.s32.totalorder %s12, 1
    %p114 = scmp.ne.s32.totalorder %s109, %s111
    %p115 = scmp.eq.s32.totalorder %s12, 0
    %p116 = por %p114, %p115
    %p117 = scmp.ne.s32.totalorder %s109, %s111
    %p118 = scmp.eq.s32.totalorder %s17, 1
    %p119 = por %p117, %p118
    %p120 = scmp.ne.s32.totalorder %s111, %s112
    %p121 = scmp.eq.s32.totalorder %s17, 0
    %p122 = por %p120, %p121
    %p123 = scmp.ne.s32.totalorder %s111, %s112
    %p124 = scmp.eq.s32.totalorder %s18, 1
    %p125 = por %p123, %p124
    %p127 = scmp.ne.s32.totalorder %s112, %s126
    %p128 = scmp.eq.s32.totalorder %s18, 0
    %p129 = por %p127, %p128
    %s130 = ssub.s32 %s12, %s19
    %p131 = scmp.eq.s32.totalorder %s130, 0
    %s133 = sadd.s32 %s132, 1
    %s134 = scalar_select %p131, %s132, %s133
    %p137 = pneg %p131
    %p138 = scmp.eq.s32.totalorder %s12, 1
    %p139 = por %p137, %p138
    %p140 = scmp.ne.s32.totalorder %s132, %s135
    %p141 = scmp.eq.s32.totalorder %s12, 0
    %p142 = por %p140, %p141
    %p143 = scmp.ne.s32.totalorder %s132, %s135
    %p144 = scmp.eq.s32.totalorder %s17, 1
    %p145 = por %p143, %p144
    %p146 = scmp.ne.s32.totalorder %s135, %s136
    %p147 = scmp.eq.s32.totalorder %s17, 0
    %p148 = por %p146, %p147
    %p149 = scmp.ne.s32.totalorder %s135, %s136
    %p150 = scmp.eq.s32.totalorder %s18, 1
    %p151 = por %p149, %p150
    %p153 = scmp.ne.s32.totalorder %s136, %s152
    %p154 = scmp.eq.s32.totalorder %s18, 0
    %p155 = por %p153, %p154
    %s156 = ssub.s32 %s12, %s19
    %p157 = scmp.eq.s32.totalorder %s156, 0
    %s159 = sadd.s32 %s158, 1
    %s160 = scalar_select %p157, %s158, %s159
    %p163 = pneg %p157
    %p164 = scmp.eq.s32.totalorder %s12, 1
    %p165 = por %p163, %p164
    %p166 = scmp.ne.s32.totalorder %s158, %s161
    %p167 = scmp.eq.s32.totalorder %s12, 0
    %p168 = por %p166, %p167
    %p169 = scmp.ne.s32.totalorder %s158, %s161
    %p170 = scmp.eq.s32.totalorder %s17, 1
    %p171 = por %p169, %p170
    %p172 = scmp.ne.s32.totalorder %s161, %s162
    %p173 = scmp.eq.s32.totalorder %s17, 0
    %p174 = por %p172, %p173
    %p175 = scmp.ne.s32.totalorder %s161, %s162
    %p176 = scmp.eq.s32.totalorder %s18, 1
    %p177 = por %p175, %p176
    %p179 = scmp.ne.s32.totalorder %s162, %s178
    %p180 = scmp.eq.s32.totalorder %s18, 0
    %p181 = por %p179, %p180
    %p182 = scmp.le.s32.totalorder 1, %s12
    %p183 = scmp.lt.s32.totalorder %s12, 3
    %p184 = pnand %p182, %p183
    %p185 = pneg %p184
    // Predicated region
    $region9: #{stage2_block1_forward.7} parent=5 // pred_check
      _
    $region10: #{stage2_block1_forward.7} parent=5 // pred_check_branch
      %187 = sbr.rel (%p184) target = $region12
    $region11: #{stage2_block1_forward.7} parent=5 // pred_region
      %s188 = ssub.s32 %s12, 1
      // Predicated region
      $region13: #{stage2_block1_forward.7} parent=11 // pred_check
        %p189 = pneg %p59
      $region14: #{stage2_block1_forward.7} parent=11 // pred_check_branch
        %191 = sbr.rel (%p189) target = $region16
      $region15: #{stage2_block1_forward.7} parent=11 // pred_region
        _
      $region16: #{stage2_block1_forward.7} parent=11 // pred_fallthru
        _
      // Predicated region
      $region17: #{stage2_block1_forward.7} parent=11 // pred_check
        %p192 = pneg %p80
      $region18: #{stage2_block1_forward.7} parent=11 // pred_check_branch
        %194 = sbr.rel (%p192) target = $region20
      $region19: #{stage2_block1_forward.7} parent=11 // pred_region
        _
      $region20: #{stage2_block1_forward.7} parent=11 // pred_fallthru
        _
      // Predicated region
      $region21: #{stage2_block1_forward.7} parent=11 // pred_check
        %p195 = pneg %p101
      $region22: #{stage2_block1_forward.7} parent=11 // pred_check_branch
        %197 = sbr.rel (%p195) target = $region24
      $region23: #{stage2_block1_forward.7} parent=11 // pred_region
        _
      $region24: #{stage2_block1_forward.7} parent=11 // pred_fallthru
        _
      // Predicated region
      $region25: #{stage2_block1_forward.7} parent=11 // pred_check
        %p198 = pneg %p122
      $region26: #{stage2_block1_forward.7} parent=11 // pred_check_branch
        %200 = sbr.rel (%p198) target = $region28
      $region27: #{stage2_block1_forward.7} parent=11 // pred_region
        _
      $region28: #{stage2_block1_forward.7} parent=11 // pred_fallthru
        _
    $region12: #{stage2_block1_forward.7} parent=5 // pred_fallthru
      _
    %p201 = scmp.lt.s32.totalorder %s12, 2
    // Predicated region
    $region29: #{stage2_block1_forward.7} parent=5 // pred_check
      %p202 = pneg %p201
    $region30: #{stage2_block1_forward.7} parent=5 // pred_check_branch
      %204 = sbr.rel (%p202) target = $region32
    $region31: #{stage2_block1_forward.7} parent=5 // pred_region
      // Predicated region
      $region33: #{stage2_block1_forward.7} parent=31 // pred_check
        %p205 = pneg %p32
      $region34: #{stage2_block1_forward.7} parent=31 // pred_check_branch
        %207 = sbr.rel (%p205) target = $region36
      $region35: #{stage2_block1_forward.7} parent=31 // pred_region
        %p208 = scmp.lt.s32.totalorder %s12, 1
        %s209 = scalar_select %p208, %s12, 1
        %s210 = smul.addr %s209, 20
        %s211 = smul.addr %s210, 8
        %s212 = scalar_lea.vmem %s0, %s211
      $region36: #{stage2_block1_forward.7} parent=31 // pred_fallthru
        _
      // Predicated region
      $region37: #{stage2_block1_forward.7} parent=31 // pred_check
        %p213 = pneg %p142
      $region38: #{stage2_block1_forward.7} parent=31 // pred_check_branch
        %215 = sbr.rel (%p213) target = $region40
      $region39: #{stage2_block1_forward.7} parent=31 // pred_region
        %s216 = smul.u32 8, %s12
        %p217 = scmp.lt.s32.totalorder %s216, 15
        %s218 = scalar_select %p217, %s216, 15
        %s219 = smul.addr %s218, 8
        %s220 = scalar_lea.vmem %s5, %s219
        %s221 = smul.u32 8, %s12
      $region40: #{stage2_block1_forward.7} parent=31 // pred_fallthru
        _
    $region32: #{stage2_block1_forward.7} parent=5 // pred_fallthru
      _
    %p222 = scmp.le.s32.totalorder 1, %s12
    %p223 = scmp.lt.s32.totalorder %s12, 3
    %p224 = pnand %p222, %p223
    %p225 = pneg %p224
    // Predicated region
    $region41: #{stage2_block1_forward.7} parent=5 // pred_check
      _
    $region42: #{stage2_block1_forward.7} parent=5 // pred_check_branch
      %227 = sbr.rel (%p224) target = $region44
    $region43: #{stage2_block1_forward.7} parent=5 // pred_region
      %s228 = ssub.s32 %s12, 1
      %p229 = scmp.lt.s32.totalorder %s17, 1
      %s230 = scalar_select %p229, %s17, 1
      %s231 = smul.addr %s230, 20
      %s232 = smul.addr %s231, 8
      %s233 = scalar_lea.vmem %s0, %s232
      %p234 = pneg %p38
      %p235 = pneg %p35
      %p236 = pneg %p59
      %p237 = pneg %p56
      %p238 = pneg %p80
      %p239 = pneg %p77
      %p240 = pneg %p101
      %p241 = pneg %p98
      %p242 = pneg %p122
      %p243 = pneg %p119
      %s244 = smul.u32 8, %s17
      %p245 = scmp.lt.s32.totalorder %s244, 15
      %s246 = scalar_select %p245, %s244, 15
      %s247 = smul.addr %s246, 8
      %s248 = scalar_lea.vmem %s5, %s247
      %p249 = pneg %p148
      %p250 = pneg %p145
      %p251 = pneg %p174
      %p252 = pneg %p171
      %s253 = smul.u32 8, %s17
      %p254 = scmp.lt.s32.totalorder %s253, 15
      %s255 = scalar_select %p254, %s253, 15
      %s256 = smul.addr %s255, 8
      %s257 = scalar_lea.vmem %s6, %s256
      %p258 = scmp.lt.s32.totalorder %s17, 1
      %s259 = scalar_select %p258, %s17, 1
      %s260 = smul.addr %s259, 20
      %s261 = smul.addr %s260, 8
      %s262 = scalar_lea.vmem %s0, %s261
      %s263 = smul.u32 8, %s17
      %p264 = scmp.lt.s32.totalorder %s263, 15
      %s265 = scalar_select %p264, %s263, 15
      %s266 = smul.addr %s265, 8
      %s267 = scalar_lea.vmem %s5, %s266
      %s268 = smul.u32 8, %s17
      %s269 = smul.u32 8, %s17
      %p270 = scmp.lt.s32.totalorder %s269, 15
      %s271 = scalar_select %p270, %s269, 15
      %s272 = smul.addr %s271, 8
      %s273 = scalar_lea.vmem %s6, %s272
      %s274 = smul.u32 8, %s17
      %v276 = vld [vmem:[%s262] sm:$0xff]
      %v277 = vld [vmem:[%s262 + $0x8] sm:$0x3]
      %v278 = vld [vmem:[%s262 + $0x10] sm:$0xff]
      %v279 = vld [vmem:[%s262 + $0x18] sm:$0x3]
      %v280 = vld [vmem:[%s262 + $0x20] sm:$0xff]
      %v281 = vld [vmem:[%s262 + $0x28] sm:$0x3]
      %v282 = vld [vmem:[%s262 + $0x30] sm:$0xff]
      %v283 = vld [vmem:[%s262 + $0x38] sm:$0x3]
      %v284 = vld [vmem:[%s262 + $0x40] sm:$0xff]
      %v285 = vld [vmem:[%s262 + $0x48] sm:$0x3]
      %v286 = vld [vmem:[%s262 + $0x50] sm:$0xff]
      %v287 = vld [vmem:[%s262 + $0x58] sm:$0x3]
      %v288 = vld [vmem:[%s262 + $0x60] sm:$0xff]
      %v289 = vld [vmem:[%s262 + $0x68] sm:$0x3]
      %v290 = vld [vmem:[%s262 + $0x70] sm:$0xff]
      %v291 = vld [vmem:[%s262 + $0x78] sm:$0x3]
      %v292 = vld [vmem:[%s262 + $0x80] sm:$0xff]
      %v293 = vld [vmem:[%s262 + $0x88] sm:$0x3]
      %v294 = vld [vmem:[%s262 + $0x90] sm:$0xff]
      %v295 = vld [vmem:[%s262 + $0x98] sm:$0x3]
      %v296 = vld [vmem:[%s1] sm:$0xff]
      %v297 = vld [vmem:[%s1 + $0x8] sm:$0x3]
      %v298 = vld [vmem:[%s1 + $0x10] sm:$0xff]
      %v299 = vld [vmem:[%s1 + $0x18] sm:$0x3]
      %v300 = vld [vmem:[%s1 + $0x20] sm:$0xff]
      %v301 = vld [vmem:[%s1 + $0x28] sm:$0x3]
      %v302 = vld [vmem:[%s1 + $0x30] sm:$0xff]
      %v303 = vld [vmem:[%s1 + $0x38] sm:$0x3]
      %v304 = vld [vmem:[%s1 + $0x40] sm:$0xff]
      %v305 = vld [vmem:[%s1 + $0x48] sm:$0x3]
      %v306 = vld [vmem:[%s1 + $0x50] sm:$0xff]
      %v307 = vld [vmem:[%s1 + $0x58] sm:$0x3]
      %v308 = vld [vmem:[%s1 + $0x60] sm:$0xff]
      %v309 = vld [vmem:[%s1 + $0x68] sm:$0x3]
      %v310 = vld [vmem:[%s1 + $0x70] sm:$0xff]
      %v311 = vld [vmem:[%s1 + $0x78] sm:$0x3]
      %v312 = vld [vmem:[%s1 + $0x80] sm:$0xff]
      %v313 = vld [vmem:[%s1 + $0x88] sm:$0x3]
      %v314 = vld [vmem:[%s1 + $0x90] sm:$0xff]
      %v315 = vld [vmem:[%s1 + $0x98] sm:$0x3]
      %v316 = vmul.f32 %v276, %v296
      %v317 = vmul.f32 %v277, %v297
      %v318 = vmul.f32 %v278, %v298
      %v319 = vmul.f32 %v279, %v299
      %v320 = vmul.f32 %v280, %v300
      %v321 = vmul.f32 %v281, %v301
      %v322 = vmul.f32 %v282, %v302
      %v323 = vmul.f32 %v283, %v303
      %v324 = vmul.f32 %v284, %v304
      %v325 = vmul.f32 %v285, %v305
      %v326 = vmul.f32 %v286, %v306
      %v327 = vmul.f32 %v287, %v307
      %v328 = vmul.f32 %v288, %v308
      %v329 = vmul.f32 %v289, %v309
      %v330 = vmul.f32 %v290, %v310
      %v331 = vmul.f32 %v291, %v311
      %v332 = vmul.f32 %v292, %v312
      %v333 = vmul.f32 %v293, %v313
      %v334 = vmul.f32 %v294, %v314
      %v335 = vmul.f32 %v295, %v315
      %v336 = vld [vmem:[%s2] sm:$0xff]
      %v337 = vld [vmem:[%s2 + $0x8] sm:$0x3]
      %v338 = vld [vmem:[%s2 + $0x10] sm:$0xff]
      %v339 = vld [vmem:[%s2 + $0x18] sm:$0x3]
      %v340 = vld [vmem:[%s2 + $0x20] sm:$0xff]
      %v341 = vld [vmem:[%s2 + $0x28] sm:$0x3]
      %v342 = vld [vmem:[%s2 + $0x30] sm:$0xff]
      %v343 = vld [vmem:[%s2 + $0x38] sm:$0x3]
      %v344 = vld [vmem:[%s2 + $0x40] sm:$0xff]
      %v345 = vld [vmem:[%s2 + $0x48] sm:$0x3]
      %v346 = vld [vmem:[%s2 + $0x50] sm:$0xff]
      %v347 = vld [vmem:[%s2 + $0x58] sm:$0x3]
      %v348 = vld [vmem:[%s2 + $0x60] sm:$0xff]
      %v349 = vld [vmem:[%s2 + $0x68] sm:$0x3]
      %v350 = vld [vmem:[%s2 + $0x70] sm:$0xff]
      %v351 = vld [vmem:[%s2 + $0x78] sm:$0x3]
      %v352 = vld [vmem:[%s2 + $0x80] sm:$0xff]
      %v353 = vld [vmem:[%s2 + $0x88] sm:$0x3]
      %v354 = vld [vmem:[%s2 + $0x90] sm:$0xff]
      %v355 = vld [vmem:[%s2 + $0x98] sm:$0x3]
      %v356 = vadd.f32 %v316, %v336
      %v357 = vadd.f32 %v317, %v337
      %v358 = vadd.f32 %v318, %v338
      %v359 = vadd.f32 %v319, %v339
      %v360 = vadd.f32 %v320, %v340
      %v361 = vadd.f32 %v321, %v341
      %v362 = vadd.f32 %v322, %v342
      %v363 = vadd.f32 %v323, %v343
      %v364 = vadd.f32 %v324, %v344
      %v365 = vadd.f32 %v325, %v345
      %v366 = vadd.f32 %v326, %v346
      %v367 = vadd.f32 %v327, %v347
      %v368 = vadd.f32 %v328, %v348
      %v369 = vadd.f32 %v329, %v349
      %v370 = vadd.f32 %v330, %v350
      %v371 = vadd.f32 %v331, %v351
      %v372 = vadd.f32 %v332, %v352
      %v373 = vadd.f32 %v333, %v353
      %v374 = vadd.f32 %v334, %v354
      %v375 = vadd.f32 %v335, %v355
      %v376 = vmax.f32 %v356, 0.0
      %v377 = vmax.f32 %v357, 0.0
      %v378 = vmax.f32 %v358, 0.0
      %v379 = vmax.f32 %v359, 0.0
      %v380 = vmax.f32 %v360, 0.0
      %v381 = vmax.f32 %v361, 0.0
      %v382 = vmax.f32 %v362, 0.0
      %v383 = vmax.f32 %v363, 0.0
      %v384 = vmax.f32 %v364, 0.0
      %v385 = vmax.f32 %v365, 0.0
      %v386 = vmax.f32 %v366, 0.0
      %v387 = vmax.f32 %v367, 0.0
      %v388 = vmax.f32 %v368, 0.0
      %v389 = vmax.f32 %v369, 0.0
      %v390 = vmax.f32 %v370, 0.0
      %v391 = vmax.f32 %v371, 0.0
      %v392 = vmax.f32 %v372, 0.0
      %v393 = vmax.f32 %v373, 0.0
      %v394 = vmax.f32 %v374, 0.0
      %v395 = vmax.f32 %v375, 0.0
      %v396 = vpack.c.bf16 %v378, %v376
      %v397 = vpack.c.bf16 %v382, %v380
      %v398 = vpack.c.bf16 %v386, %v384
      %v399 = vpack.c.bf16 %v390, %v388
      %v400 = vld [vmem:[%s3] sm:$0xf]
      %vm417 = vcmask 1046528
      %v418 = vrot.slane %v376, 1
      %v419 = vrot.slane %v377, 1
      %v420 = vsel %vm417, %v418, %v419
      %v421 = vrot.slane %v378, 1
      %v422 = vrot.slane %v379, 1
      %v423 = vsel %vm417, %v421, %v422
      %v424 = vrot.slane %v380, 1
      %v425 = vrot.slane %v381, 1
      %v426 = vsel %vm417, %v424, %v425
      %v427 = vrot.slane %v382, 1
      %v428 = vrot.slane %v383, 1
      %v429 = vsel %vm417, %v427, %v428
      %v430 = vrot.slane %v384, 1
      %v431 = vrot.slane %v385, 1
      %v432 = vsel %vm417, %v430, %v431
      %v433 = vrot.slane %v386, 1
      %v434 = vrot.slane %v387, 1
      %v435 = vsel %vm417, %v433, %v434
      %v436 = vrot.slane %v388, 1
      %v437 = vrot.slane %v389, 1
      %v438 = vsel %vm417, %v436, %v437
      %v439 = vrot.slane %v390, 1
      %v440 = vrot.slane %v391, 1
      %v441 = vsel %vm417, %v439, %v440
      %v450 = vpack.c.bf16 %v423, %v420
      %v451 = vpack.c.bf16 %v429, %v426
      %v452 = vpack.c.bf16 %v435, %v432
      %v453 = vpack.c.bf16 %v441, %v438
      %s454 = scalar_lea.vmem %s3, 4
      %v455 = vld [vmem:[%s454] sm:$0xf]
      %vm456 = vcmask 64512
      %v458 = vsel %vm456, %v450, 0
      %v461 = vsel %vm456, %v451, 0
      %v464 = vsel %vm456, %v452, 0
      %v467 = vsel %vm456, %v453, 0
      %vm469 = vcmask 1043456
      %v471 = vsel %vm469, %v455, 0
      %473 = vmatprep.subr.bf16.mxu0 0
      %474 = vmatpush1.bf16.msra.mxu0 %v471
      %475 = vmatprep.subr.bf16.mxu0 0
      %476 = vmatpush1.bf16.msra.mxu0 0
      %477 = vmatprep.subr.bf16.mxu0 0
      %478 = vmatpush1.bf16.msra.mxu0 0
      %479 = vmatprep.subr.bf16.mxu0 0
      %480 = vmatpush1.bf16.msra.mxu0 0
      %481 = vmatprep.subr.bf16.mxu0 0
      %482 = vmatpush1.bf16.msra.mxu0 0
      %483 = vmatprep.subr.bf16.mxu0 0
      %484 = vmatpush1.bf16.msra.mxu0 0
      %485 = vmatprep.subr.bf16.mxu0 0
      %486 = vmatpush1.bf16.msra.mxu0 0
      %487 = vmatprep.subr.bf16.mxu0 0
      %488 = vmatpush1.bf16.msra.mxu0 0
      %489 = vmatprep.subr.bf16.mxu0 0
      %490 = vmatpush1.bf16.msra.mxu0 0
      %491 = vmatprep.subr.bf16.mxu0 0
      %492 = vmatpush1.bf16.msra.mxu0 0
      %493 = vmatprep.subr.bf16.mxu0 0
      %494 = vmatpush1.bf16.msra.mxu0 0
      %495 = vmatprep.subr.bf16.mxu0 0
      %496 = vmatpush1.bf16.msra.mxu0 0
      %497 = vmatprep.subr.bf16.mxu0 0
      %498 = vmatpush1.bf16.msra.mxu0 0
      %499 = vmatprep.subr.bf16.mxu0 0
      %500 = vmatpush1.bf16.msra.mxu0 0
      %501 = vmatprep.subr.bf16.mxu0 0
      %502 = vmatpush1.bf16.msra.mxu0 0
      %503 = vmatprep.subr.bf16.mxu0 0
      %504 = vmatpush1.bf16.msra.mxu0 0
      %505 = vmatprep.mubr.bf16.mxu0 0
      %506 = vmatmul.mubr.bf16.gmra.mrb[0].mxu0 %v458
      %v507 = vpop.f32.mrb[0].mxu0
      %v508 = vadd.f32 0.0, %v507
      %v509 = vpop.f32.mrb[0].mxu0
      %v510 = vpop.f32.mrb[0].mxu0
      %v511 = vadd.f32 0.0, %v510
      %v512 = vpop.f32.mrb[0].mxu0
      %513 = vmatprep.mubr.bf16.mxu0 0
      %514 = vmatmul.mubr.bf16.gmra.mrb[0].mxu0 %v461
      %v515 = vpop.f32.mrb[0].mxu0
      %v516 = vadd.f32 0.0, %v515
      %v517 = vpop.f32.mrb[0].mxu0
      %v518 = vpop.f32.mrb[0].mxu0
      %v519 = vadd.f32 0.0, %v518
      %v520 = vpop.f32.mrb[0].mxu0
      %521 = vmatprep.mubr.bf16.mxu0 0
      %522 = vmatmul.mubr.bf16.gmra.mrb[0].mxu0 %v464
      %v523 = vpop.f32.mrb[0].mxu0
      %v524 = vadd.f32 0.0, %v523
      %v525 = vpop.f32.mrb[0].mxu0
      %v526 = vpop.f32.mrb[0].mxu0
      %v527 = vadd.f32 0.0, %v526
      %v528 = vpop.f32.mrb[0].mxu0
      %529 = vmatprep.mubr.bf16.mxu0 0
      %530 = vmatmul.mubr.bf16.gmra.mrb[0].mxu0 %v467
      %v531 = vpop.f32.mrb[0].mxu0
      %v532 = vadd.f32 0.0, %v531
      %v533 = vpop.f32.mrb[0].mxu0
      %v534 = vpop.f32.mrb[0].mxu0
      %v535 = vadd.f32 0.0, %v534
      %v536 = vpop.f32.mrb[0].mxu0
      %537 = vdwg.mxu0
      %v539 = vsel %vm456, %v396, 0
      %v542 = vsel %vm456, %v397, 0
      %v545 = vsel %vm456, %v398, 0
      %v548 = vsel %vm456, %v399, 0
      %v551 = vsel %vm469, %v400, 0
      %553 = vmatprep.subr.bf16.mxu0 0
      %554 = vmatpush1.bf16.msra.mxu0 %v551
      %555 = vmatprep.subr.bf16.mxu0 0
      %556 = vmatpush1.bf16.msra.mxu0 0
      %557 = vmatprep.subr.bf16.mxu0 0
      %558 = vmatpush1.bf16.msra.mxu0 0
      %559 = vmatprep.subr.bf16.mxu0 0
      %560 = vmatpush1.bf16.msra.mxu0 0
      %561 = vmatprep.subr.bf16.mxu0 0
      %562 = vmatpush1.bf16.msra.mxu0 0
      %563 = vmatprep.subr.bf16.mxu0 0
      %564 = vmatpush1.bf16.msra.mxu0 0
      %565 = vmatprep.subr.bf16.mxu0 0
      %566 = vmatpush1.bf16.msra.mxu0 0
      %567 = vmatprep.subr.bf16.mxu0 0
      %568 = vmatpush1.bf16.msra.mxu0 0
      %569 = vmatprep.subr.bf16.mxu0 0
      %570 = vmatpush1.bf16.msra.mxu0 0
      %571 = vmatprep.subr.bf16.mxu0 0
      %572 = vmatpush1.bf16.msra.mxu0 0
      %573 = vmatprep.subr.bf16.mxu0 0
      %574 = vmatpush1.bf16.msra.mxu0 0
      %575 = vmatprep.subr.bf16.mxu0 0
      %576 = vmatpush1.bf16.msra.mxu0 0
      %577 = vmatprep.subr.bf16.mxu0 0
      %578 = vmatpush1.bf16.msra.mxu0 0
      %579 = vmatprep.subr.bf16.mxu0 0
      %580 = vmatpush1.bf16.msra.mxu0 0
      %581 = vmatprep.subr.bf16.mxu0 0
      %582 = vmatpush1.bf16.msra.mxu0 0
      %583 = vmatprep.subr.bf16.mxu0 0
      %584 = vmatpush1.bf16.msra.mxu0 0
      %585 = vmatprep.mubr.bf16.mxu0 0
      %586 = vmatmul.mubr.bf16.gmra.mrb[0].mxu0 %v539
      %v587 = vpop.f32.mrb[0].mxu0
      %v588 = vadd.f32 %v508, %v587
      %v589 = vpop.f32.mrb[0].mxu0
      %v590 = vpop.f32.mrb[0].mxu0
      %v591 = vadd.f32 %v511, %v590
      %v592 = vpop.f32.mrb[0].mxu0
      %593 = vmatprep.mubr.bf16.mxu0 0
      %594 = vmatmul.mubr.bf16.gmra.mrb[0].mxu0 %v542
      %v595 = vpop.f32.mrb[0].mxu0
      %v596 = vadd.f32 %v516, %v595
      %v597 = vpop.f32.mrb[0].mxu0
      %v598 = vpop.f32.mrb[0].mxu0
      %v599 = vadd.f32 %v519, %v598
      %v600 = vpop.f32.mrb[0].mxu0
      %601 = vmatprep.mubr.bf16.mxu0 0
      %602 = vmatmul.mubr.bf16.gmra.mrb[0].mxu0 %v545
      %v603 = vpop.f32.mrb[0].mxu0
      %v604 = vadd.f32 %v524, %v603
      %v605 = vpop.f32.mrb[0].mxu0
      %v606 = vpop.f32.mrb[0].mxu0
      %v607 = vadd.f32 %v527, %v606
      %v608 = vpop.f32.mrb[0].mxu0
      %609 = vmatprep.mubr.bf16.mxu0 0
      %610 = vmatmul.mubr.bf16.gmra.mrb[0].mxu0 %v548
      %v611 = vpop.f32.mrb[0].mxu0
      %v612 = vadd.f32 %v532, %v611
      %v613 = vpop.f32.mrb[0].mxu0
      %v614 = vpop.f32.mrb[0].mxu0
      %v615 = vadd.f32 %v535, %v614
      %v616 = vpop.f32.mrb[0].mxu0
      %617 = vdwg.mxu0
      %vm618 = vcmask 1045504
      %v619 = vrot.slane %v376, 2
      %v620 = vrot.slane %v377, 2
      %v621 = vsel %vm618, %v619, %v620
      %v622 = vrot.slane %v378, 2
      %v623 = vrot.slane %v379, 2
      %v624 = vsel %vm618, %v622, %v623
      %v625 = vrot.slane %v380, 2
      %v626 = vrot.slane %v381, 2
      %v627 = vsel %vm618, %v625, %v626
      %v628 = vrot.slane %v382, 2
      %v629 = vrot.slane %v383, 2
      %v630 = vsel %vm618, %v628, %v629
      %v631 = vrot.slane %v384, 2
      %v632 = vrot.slane %v385, 2
      %v633 = vsel %vm618, %v631, %v632
      %v634 = vrot.slane %v386, 2
      %v635 = vrot.slane %v387, 2
      %v636 = vsel %vm618, %v634, %v635
      %v637 = vrot.slane %v388, 2
      %v638 = vrot.slane %v389, 2
      %v639 = vsel %vm618, %v637, %v638
      %v640 = vrot.slane %v390, 2
      %v641 = vrot.slane %v391, 2
      %v642 = vsel %vm618, %v640, %v641
      %v651 = vpack.c.bf16 %v624, %v621
      %v652 = vpack.c.bf16 %v630, %v627
      %v653 = vpack.c.bf16 %v636, %v633
      %v654 = vpack.c.bf16 %v642, %v639
      %s655 = scalar_lea.vmem %s3, 8
      %v656 = vld [vmem:[%s655] sm:$0xf]
      %v658 = vsel %vm456, %v651, 0
      %v661 = vsel %vm456, %v652, 0
      %v664 = vsel %vm456, %v653, 0
      %v667 = vsel %vm456, %v654, 0
      %v670 = vsel %vm469, %v656, 0
      %672 = vmatprep.subr.bf16.mxu0 0
      %673 = vmatpush1.bf16.msra.mxu0 %v670
      %674 = vmatprep.subr.bf16.mxu0 0
      %675 = vmatpush1.bf16.msra.mxu0 0
      %676 = vmatprep.subr.bf16.mxu0 0
      %677 = vmatpush1.bf16.msra.mxu0 0
      %678 = vmatprep.subr.bf16.mxu0 0
      %679 = vmatpush1.bf16.msra.mxu0 0
      %680 = vmatprep.subr.bf16.mxu0 0
      %681 = vmatpush1.bf16.msra.mxu0 0
      %682 = vmatprep.subr.bf16.mxu0 0
      %683 = vmatpush1.bf16.msra.mxu0 0
      %684 = vmatprep.subr.bf16.mxu0 0
      %685 = vmatpush1.bf16.msra.mxu0 0
      %686 = vmatprep.subr.bf16.mxu0 0
      %687 = vmatpush1.bf16.msra.mxu0 0
      %688 = vmatprep.subr.bf16.mxu0 0
      %689 = vmatpush1.bf16.msra.mxu0 0
      %690 = vmatprep.subr.bf16.mxu0 0
      %691 = vmatpush1.bf16.msra.mxu0 0
      %692 = vmatprep.subr.bf16.mxu0 0
      %693 = vmatpush1.bf16.msra.mxu0 0
      %694 = vmatprep.subr.bf16.mxu0 0
      %695 = vmatpush1.bf16.msra.mxu0 0
      %696 = vmatprep.subr.bf16.mxu0 0
      %697 = vmatpush1.bf16.msra.mxu0 0
      %698 = vmatprep.subr.bf16.mxu0 0
      %699 = vmatpush1.bf16.msra.mxu0 0
      %700 = vmatprep.subr.bf16.mxu0 0
      %701 = vmatpush1.bf16.msra.mxu0 0
      %702 = vmatprep.subr.bf16.mxu0 0
      %703 = vmatpush1.bf16.msra.mxu0 0
      %704 = vmatprep.mubr.bf16.mxu0 0
      %705 = vmatmul.mubr.bf16.gmra.mrb[0].mxu0 %v658
      %v706 = vpop.f32.mrb[0].mxu0
      %v707 = vadd.f32 0.0, %v706
      %v708 = vpop.f32.mrb[0].mxu0
      %v709 = vpop.f32.mrb[0].mxu0
      %v710 = vadd.f32 0.0, %v709
      %v711 = vpop.f32.mrb[0].mxu0
      %712 = vmatprep.mubr.bf16.mxu0 0
      %713 = vmatmul.mubr.bf16.gmra.mrb[0].mxu0 %v661
      %v714 = vpop.f32.mrb[0].mxu0
      %v715 = vadd.f32 0.0, %v714
      %v716 = vpop.f32.mrb[0].mxu0
      %v717 = vpop.f32.mrb[0].mxu0
      %v718 = vadd.f32 0.0, %v717
      %v719 = vpop.f32.mrb[0].mxu0
      %720 = vmatprep.mubr.bf16.mxu0 0
      %721 = vmatmul.mubr.bf16.gmra.mrb[0].mxu0 %v664
      %v722 = vpop.f32.mrb[0].mxu0
      %v723 = vadd.f32 0.0, %v722
      %v724 = vpop.f32.mrb[0].mxu0
      %v725 = vpop.f32.mrb[0].mxu0
      %v726 = vadd.f32 0.0, %v725
      %v727 = vpop.f32.mrb[0].mxu0
      %728 = vmatprep.mubr.bf16.mxu0 0
      %729 = vmatmul.mubr.bf16.gmra.mrb[0].mxu0 %v667
      %v730 = vpop.f32.mrb[0].mxu0
      %v731 = vadd.f32 0.0, %v730
      %v732 = vpop.f32.mrb[0].mxu0
      %v733 = vpop.f32.mrb[0].mxu0
      %v734 = vadd.f32 0.0, %v733
      %v735 = vpop.f32.mrb[0].mxu0
      %736 = vdwg.mxu0
      %v737 = vadd.f32 %v588, %v707
      %v738 = vadd.f32 %v591, %v710
      %v739 = vadd.f32 %v596, %v715
      %v740 = vadd.f32 %v599, %v718
      %v741 = vadd.f32 %v604, %v723
      %v742 = vadd.f32 %v607, %v726
      %v743 = vadd.f32 %v612, %v731
      %v744 = vadd.f32 %v615, %v734
      %v745 = vpack.c.bf16 %v380, %v378
      %v746 = vpack.c.bf16 %v384, %v382
      %v747 = vpack.c.bf16 %v388, %v386
      %v748 = vpack.c.bf16 %v392, %v390
      %s749 = scalar_lea.vmem %s3, 12
      %v750 = vld [vmem:[%s749] sm:$0xf]
      %v752 = vsel %vm456, %v745, 0
      %v755 = vsel %vm456, %v746, 0
      %v758 = vsel %vm456, %v747, 0
      %v761 = vsel %vm456, %v748, 0
      %v764 = vsel %vm469, %v750, 0
      %766 = vmatprep.subr.bf16.mxu0 0
      %767 = vmatpush1.bf16.msra.mxu0 %v764
      %768 = vmatprep.subr.bf16.mxu0 0
      %769 = vmatpush1.bf16.msra.mxu0 0
      %770 = vmatprep.subr.bf16.mxu0 0
      %771 = vmatpush1.bf16.msra.mxu0 0
      %772 = vmatprep.subr.bf16.mxu0 0
      %773 = vmatpush1.bf16.msra.mxu0 0
      %774 = vmatprep.subr.bf16.mxu0 0
      %775 = vmatpush1.bf16.msra.mxu0 0
      %776 = vmatprep.subr.bf16.mxu0 0
      %777 = vmatpush1.bf16.msra.mxu0 0
      %778 = vmatprep.subr.bf16.mxu0 0
      %779 = vmatpush1.bf16.msra.mxu0 0
      %780 = vmatprep.subr.bf16.mxu0 0
      %781 = vmatpush1.bf16.msra.mxu0 0
      %782 = vmatprep.subr.bf16.mxu0 0
      %783 = vmatpush1.bf16.msra.mxu0 0
      %784 = vmatprep.subr.bf16.mxu0 0
      %785 = vmatpush1.bf16.msra.mxu0 0
      %786 = vmatprep.subr.bf16.mxu0 0
      %787 = vmatpush1.bf16.msra.mxu0 0
      %788 = vmatprep.subr.bf16.mxu0 0
      %789 = vmatpush1.bf16.msra.mxu0 0
      %790 = vmatprep.subr.bf16.mxu0 0
      %791 = vmatpush1.bf16.msra.mxu0 0
      %792 = vmatprep.subr.bf16.mxu0 0
      %793 = vmatpush1.bf16.msra.mxu0 0
      %794 = vmatprep.subr.bf16.mxu0 0
      %795 = vmatpush1.bf16.msra.mxu0 0
      %796 = vmatprep.subr.bf16.mxu0 0
      %797 = vmatpush1.bf16.msra.mxu0 0
      %798 = vmatprep.mubr.bf16.mxu0 0
      %799 = vmatmul.mubr.bf16.gmra.mrb[0].mxu0 %v752
      %v800 = vpop.f32.mrb[0].mxu0
      %v801 = vadd.f32 0.0, %v800
      %v802 = vpop.f32.mrb[0].mxu0
      %v803 = vpop.f32.mrb[0].mxu0
      %v804 = vadd.f32 0.0, %v803
      %v805 = vpop.f32.mrb[0].mxu0
      %806 = vmatprep.mubr.bf16.mxu0 0
      %807 = vmatmul.mubr.bf16.gmra.mrb[0].mxu0 %v755
      %v808 = vpop.f32.mrb[0].mxu0
      %v809 = vadd.f32 0.0, %v808
      %v810 = vpop.f32.mrb[0].mxu0
      %v811 = vpop.f32.mrb[0].mxu0
      %v812 = vadd.f32 0.0, %v811
      %v813 = vpop.f32.mrb[0].mxu0
      %814 = vmatprep.mubr.bf16.mxu0 0
      %815 = vmatmul.mubr.bf16.gmra.mrb[0].mxu0 %v758
      %v816 = vpop.f32.mrb[0].mxu0
      %v817 = vadd.f32 0.0, %v816
      %v818 = vpop.f32.mrb[0].mxu0
      %v819 = vpop.f32.mrb[0].mxu0
      %v820 = vadd.f32 0.0, %v819
      %v821 = vpop.f32.mrb[0].mxu0
      %822 = vmatprep.mubr.bf16.mxu0 0
      %823 = vmatmul.mubr.bf16.gmra.mrb[0].mxu0 %v761
      %v824 = vpop.f32.mrb[0].mxu0
      %v825 = vadd.f32 0.0, %v824
      %v826 = vpop.f32.mrb[0].mxu0
      %v827 = vpop.f32.mrb[0].mxu0
      %v828 = vadd.f32 0.0, %v827
      %v829 = vpop.f32.mrb[0].mxu0
      %830 = vdwg.mxu0
      %v831 = vadd.f32 %v737, %v801
      %v832 = vadd.f32 %v738, %v804
      %v833 = vadd.f32 %v739, %v809
      %v834 = vadd.f32 %v740, %v812
      %v835 = vadd.f32 %v741, %v817
      %v836 = vadd.f32 %v742, %v820
      %v837 = vadd.f32 %v743, %v825
      %v838 = vadd.f32 %v744, %v828
      %v841 = vrot.slane %v392, 1
      %v842 = vrot.slane %v393, 1
      %v843 = vsel %vm417, %v841, %v842
      %v845 = vpack.c.bf16 %v426, %v423
      %v846 = vpack.c.bf16 %v432, %v429
      %v847 = vpack.c.bf16 %v438, %v435
      %v848 = vpack.c.bf16 %v843, %v441
      %s849 = scalar_lea.vmem %s3, 16
      %v850 = vld [vmem:[%s849] sm:$0xf]
      %v852 = vsel %vm456, %v845, 0
      %v855 = vsel %vm456, %v846, 0
      %v858 = vsel %vm456, %v847, 0
      %v861 = vsel %vm456, %v848, 0
      %v864 = vsel %vm469, %v850, 0
      %866 = vmatprep.subr.bf16.mxu0 0
      %867 = vmatpush1.bf16.msra.mxu0 %v864
      %868 = vmatprep.subr.bf16.mxu0 0
      %869 = vmatpush1.bf16.msra.mxu0 0
      %870 = vmatprep.subr.bf16.mxu0 0
      %871 = vmatpush1.bf16.msra.mxu0 0
      %872 = vmatprep.subr.bf16.mxu0 0
      %873 = vmatpush1.bf16.msra.mxu0 0
      %874 = vmatprep.subr.bf16.mxu0 0
      %875 = vmatpush1.bf16.msra.mxu0 0
      %876 = vmatprep.subr.bf16.mxu0 0
      %877 = vmatpush1.bf16.msra.mxu0 0
      %878 = vmatprep.subr.bf16.mxu0 0
      %879 = vmatpush1.bf16.msra.mxu0 0
      %880 = vmatprep.subr.bf16.mxu0 0
      %881 = vmatpush1.bf16.msra.mxu0 0
      %882 = vmatprep.subr.bf16.mxu0 0
      %883 = vmatpush1.bf16.msra.mxu0 0
      %884 = vmatprep.subr.bf16.mxu0 0
      %885 = vmatpush1.bf16.msra.mxu0 0
      %886 = vmatprep.subr.bf16.mxu0 0
      %887 = vmatpush1.bf16.msra.mxu0 0
      %888 = vmatprep.subr.bf16.mxu0 0
      %889 = vmatpush1.bf16.msra.mxu0 0
      %890 = vmatprep.subr.bf16.mxu0 0
      %891 = vmatpush1.bf16.msra.mxu0 0
      %892 = vmatprep.subr.bf16.mxu0 0
      %893 = vmatpush1.bf16.msra.mxu0 0
      %894 = vmatprep.subr.bf16.mxu0 0
      %895 = vmatpush1.bf16.msra.mxu0 0
      %896 = vmatprep.subr.bf16.mxu0 0
      %897 = vmatpush1.bf16.msra.mxu0 0
      %898 = vmatprep.mubr.bf16.mxu0 0
      %899 = vmatmul.mubr.bf16.gmra.mrb[0].mxu0 %v852
      %v900 = vpop.f32.mrb[0].mxu0
      %v901 = vadd.f32 0.0, %v900
      %v902 = vpop.f32.mrb[0].mxu0
      %v903 = vpop.f32.mrb[0].mxu0
      %v904 = vadd.f32 0.0, %v903
      %v905 = vpop.f32.mrb[0].mxu0
      %906 = vmatprep.mubr.bf16.mxu0 0
      %907 = vmatmul.mubr.bf16.gmra.mrb[0].mxu0 %v855
      %v908 = vpop.f32.mrb[0].mxu0
      %v909 = vadd.f32 0.0, %v908
      %v910 = vpop.f32.mrb[0].mxu0
      %v911 = vpop.f32.mrb[0].mxu0
      %v912 = vadd.f32 0.0, %v911
      %v913 = vpop.f32.mrb[0].mxu0
      %914 = vmatprep.mubr.bf16.mxu0 0
      %915 = vmatmul.mubr.bf16.gmra.mrb[0].mxu0 %v858
      %v916 = vpop.f32.mrb[0].mxu0
      %v917 = vadd.f32 0.0, %v916
      %v918 = vpop.f32.mrb[0].mxu0
      %v919 = vpop.f32.mrb[0].mxu0
      %v920 = vadd.f32 0.0, %v919
      %v921 = vpop.f32.mrb[0].mxu0
      %922 = vmatprep.mubr.bf16.mxu0 0
      %923 = vmatmul.mubr.bf16.gmra.mrb[0].mxu0 %v861
      %v924 = vpop.f32.mrb[0].mxu0
      %v925 = vadd.f32 0.0, %v924
      %v926 = vpop.f32.mrb[0].mxu0
      %v927 = vpop.f32.mrb[0].mxu0
      %v928 = vadd.f32 0.0, %v927
      %v929 = vpop.f32.mrb[0].mxu0
      %930 = vdwg.mxu0
      %v931 = vadd.f32 %v831, %v901
      %v932 = vadd.f32 %v832, %v904
      %v933 = vadd.f32 %v833, %v909
      %v934 = vadd.f32 %v834, %v912
      %v935 = vadd.f32 %v835, %v917
      %v936 = vadd.f32 %v836, %v920
      %v937 = vadd.f32 %v837, %v925
      %v938 = vadd.f32 %v838, %v928
      %v939 = vrot.slane %v392, 2
      %v940 = vrot.slane %v393, 2
      %v941 = vsel %vm618, %v939, %v940
      %v943 = vpack.c.bf16 %v627, %v624
      %v944 = vpack.c.bf16 %v633, %v630
      %v945 = vpack.c.bf16 %v639, %v636
      %v946 = vpack.c.bf16 %v941, %v642
      %s947 = scalar_lea.vmem %s3, 20
      %v948 = vld [vmem:[%s947] sm:$0xf]
      %v950 = vsel %vm456, %v943, 0
      %v953 = vsel %vm456, %v944, 0
      %v956 = vsel %vm456, %v945, 0
      %v959 = vsel %vm456, %v946, 0
      %v962 = vsel %vm469, %v948, 0
      %964 = vmatprep.subr.bf16.mxu0 0
      %965 = vmatpush1.bf16.msra.mxu0 %v962
      %966 = vmatprep.subr.bf16.mxu0 0
      %967 = vmatpush1.bf16.msra.mxu0 0
      %968 = vmatprep.subr.bf16.mxu0 0
      %969 = vmatpush1.bf16.msra.mxu0 0
      %970 = vmatprep.subr.bf16.mxu0 0
      %971 = vmatpush1.bf16.msra.mxu0 0
      %972 = vmatprep.subr.bf16.mxu0 0
      %973 = vmatpush1.bf16.msra.mxu0 0
      %974 = vmatprep.subr.bf16.mxu0 0
      %975 = vmatpush1.bf16.msra.mxu0 0
      %976 = vmatprep.subr.bf16.mxu0 0
      %977 = vmatpush1.bf16.msra.mxu0 0
      %978 = vmatprep.subr.bf16.mxu0 0
      %979 = vmatpush1.bf16.msra.mxu0 0
      %980 = vmatprep.subr.bf16.mxu0 0
      %981 = vmatpush1.bf16.msra.mxu0 0
      %982 = vmatprep.subr.bf16.mxu0 0
      %983 = vmatpush1.bf16.msra.mxu0 0
      %984 = vmatprep.subr.bf16.mxu0 0
      %985 = vmatpush1.bf16.msra.mxu0 0
      %986 = vmatprep.subr.bf16.mxu0 0
      %987 = vmatpush1.bf16.msra.mxu0 0
      %988 = vmatprep.subr.bf16.mxu0 0
      %989 = vmatpush1.bf16.msra.mxu0 0
      %990 = vmatprep.subr.bf16.mxu0 0
      %991 = vmatpush1.bf16.msra.mxu0 0
      %992 = vmatprep.subr.bf16.mxu0 0
      %993 = vmatpush1.bf16.msra.mxu0 0
      %994 = vmatprep.subr.bf16.mxu0 0
      %995 = vmatpush1.bf16.msra.mxu0 0
      %996 = vmatprep.mubr.bf16.mxu0 0
      %997 = vmatmul.mubr.bf16.gmra.mrb[0].mxu0 %v950
      %v998 = vpop.f32.mrb[0].mxu0
      %v999 = vadd.f32 0.0, %v998
      %v1000 = vpop.f32.mrb[0].mxu0
      %v1001 = vpop.f32.mrb[0].mxu0
      %v1002 = vadd.f32 0.0, %v1001
      %v1003 = vpop.f32.mrb[0].mxu0
      %1004 = vmatprep.mubr.bf16.mxu0 0
      %1005 = vmatmul.mubr.bf16.gmra.mrb[0].mxu0 %v953
      %v1006 = vpop.f32.mrb[0].mxu0
      %v1007 = vadd.f32 0.0, %v1006
      %v1008 = vpop.f32.mrb[0].mxu0
      %v1009 = vpop.f32.mrb[0].mxu0
      %v1010 = vadd.f32 0.0, %v1009
      %v1011 = vpop.f32.mrb[0].mxu0
      %1012 = vmatprep.mubr.bf16.mxu0 0
      %1013 = vmatmul.mubr.bf16.gmra.mrb[0].mxu0 %v956
      %v1014 = vpop.f32.mrb[0].mxu0
      %v1015 = vadd.f32 0.0, %v1014
      %v1016 = vpop.f32.mrb[0].mxu0
      %v1017 = vpop.f32.mrb[0].mxu0
      %v1018 = vadd.f32 0.0, %v1017
      %v1019 = vpop.f32.mrb[0].mxu0
      %1020 = vmatprep.mubr.bf16.mxu0 0
      %1021 = vmatmul.mubr.bf16.gmra.mrb[0].mxu0 %v959
      %v1022 = vpop.f32.mrb[0].mxu0
      %v1023 = vadd.f32 0.0, %v1022
      %v1024 = vpop.f32.mrb[0].mxu0
      %v1025 = vpop.f32.mrb[0].mxu0
      %v1026 = vadd.f32 0.0, %v1025
      %v1027 = vpop.f32.mrb[0].mxu0
      %1028 = vdwg.mxu0
      %v1029 = vadd.f32 %v931, %v999
      %v1030 = vadd.f32 %v932, %v1002
      %v1031 = vadd.f32 %v933, %v1007
      %v1032 = vadd.f32 %v934, %v1010
      %v1033 = vadd.f32 %v935, %v1015
      %v1034 = vadd.f32 %v936, %v1018
      %v1035 = vadd.f32 %v937, %v1023
      %v1036 = vadd.f32 %v938, %v1026
      %v1037 = vpack.c.bf16 %v394, %v392
      %s1038 = scalar_lea.vmem %s3, 24
      %v1039 = vld [vmem:[%s1038] sm:$0xf]
      %v1041 = vsel %vm456, %v1037, 0
      %v1044 = vsel %vm469, %v1039, 0
      %1046 = vmatprep.subr.bf16.mxu0 0
      %1047 = vmatpush1.bf16.msra.mxu0 %v1044
      %1048 = vmatprep.subr.bf16.mxu0 0
      %1049 = vmatpush1.bf16.msra.mxu0 0
      %1050 = vmatprep.subr.bf16.mxu0 0
      %1051 = vmatpush1.bf16.msra.mxu0 0
      %1052 = vmatprep.subr.bf16.mxu0 0
      %1053 = vmatpush1.bf16.msra.mxu0 0
      %1054 = vmatprep.subr.bf16.mxu0 0
      %1055 = vmatpush1.bf16.msra.mxu0 0
      %1056 = vmatprep.subr.bf16.mxu0 0
      %1057 = vmatpush1.bf16.msra.mxu0 0
      %1058 = vmatprep.subr.bf16.mxu0 0
      %1059 = vmatpush1.bf16.msra.mxu0 0
      %1060 = vmatprep.subr.bf16.mxu0 0
      %1061 = vmatpush1.bf16.msra.mxu0 0
      %1062 = vmatprep.subr.bf16.mxu0 0
      %1063 = vmatpush1.bf16.msra.mxu0 0
      %1064 = vmatprep.subr.bf16.mxu0 0
      %1065 = vmatpush1.bf16.msra.mxu0 0
      %1066 = vmatprep.subr.bf16.mxu0 0
      %1067 = vmatpush1.bf16.msra.mxu0 0
      %1068 = vmatprep.subr.bf16.mxu0 0
      %1069 = vmatpush1.bf16.msra.mxu0 0
      %1070 = vmatprep.subr.bf16.mxu0 0
      %1071 = vmatpush1.bf16.msra.mxu0 0
      %1072 = vmatprep.subr.bf16.mxu0 0
      %1073 = vmatpush1.bf16.msra.mxu0 0
      %1074 = vmatprep.subr.bf16.mxu0 0
      %1075 = vmatpush1.bf16.msra.mxu0 0
      %1076 = vmatprep.subr.bf16.mxu0 0
      %1077 = vmatpush1.bf16.msra.mxu0 0
      %1078 = vmatprep.mubr.bf16.mxu0 0
      %1079 = vmatmul.mubr.bf16.gmra.mrb[0].mxu0 %v542
      %v1080 = vpop.f32.mrb[0].mxu0
      %v1081 = vadd.f32 0.0, %v1080
      %v1082 = vpop.f32.mrb[0].mxu0
      %v1083 = vpop.f32.mrb[0].mxu0
      %v1084 = vadd.f32 0.0, %v1083
      %v1085 = vpop.f32.mrb[0].mxu0
      %1086 = vmatprep.mubr.bf16.mxu0 0
      %1087 = vmatmul.mubr.bf16.gmra.mrb[0].mxu0 %v545
      %v1088 = vpop.f32.mrb[0].mxu0
      %v1089 = vadd.f32 0.0, %v1088
      %v1090 = vpop.f32.mrb[0].mxu0
      %v1091 = vpop.f32.mrb[0].mxu0
      %v1092 = vadd.f32 0.0, %v1091
      %v1093 = vpop.f32.mrb[0].mxu0
      %1094 = vmatprep.mubr.bf16.mxu0 0
      %1095 = vmatmul.mubr.bf16.gmra.mrb[0].mxu0 %v548
      %v1096 = vpop.f32.mrb[0].mxu0
      %v1097 = vadd.f32 0.0, %v1096
      %v1098 = vpop.f32.mrb[0].mxu0
      %v1099 = vpop.f32.mrb[0].mxu0
      %v1100 = vadd.f32 0.0, %v1099
      %v1101 = vpop.f32.mrb[0].mxu0
      %1102 = vmatprep.mubr.bf16.mxu0 0
      %1103 = vmatmul.mubr.bf16.gmra.mrb[0].mxu0 %v1041
      %v1104 = vpop.f32.mrb[0].mxu0
      %v1105 = vadd.f32 0.0, %v1104
      %v1106 = vpop.f32.mrb[0].mxu0
      %v1107 = vpop.f32.mrb[0].mxu0
      %v1108 = vadd.f32 0.0, %v1107
      %v1109 = vpop.f32.mrb[0].mxu0
      %1110 = vdwg.mxu0
      %v1111 = vadd.f32 %v1029, %v1081
      %v1112 = vadd.f32 %v1030, %v1084
      %v1113 = vadd.f32 %v1031, %v1089
      %v1114 = vadd.f32 %v1032, %v1092
      %v1115 = vadd.f32 %v1033, %v1097
      %v1116 = vadd.f32 %v1034, %v1100
      %v1117 = vadd.f32 %v1035, %v1105
      %v1118 = vadd.f32 %v1036, %v1108
      %v1121 = vrot.slane %v394, 1
      %v1122 = vrot.slane %v395, 1
      %v1123 = vsel %vm417, %v1121, %v1122
      %v1125 = vpack.c.bf16 %v1123, %v843
      %s1126 = scalar_lea.vmem %s3, 28
      %v1127 = vld [vmem:[%s1126] sm:$0xf]
      %v1129 = vsel %vm456, %v1125, 0
      %v1132 = vsel %vm469, %v1127, 0
      %1134 = vmatprep.subr.bf16.mxu0 0
      %1135 = vmatpush1.bf16.msra.mxu0 %v1132
      %1136 = vmatprep.subr.bf16.mxu0 0
      %1137 = vmatpush1.bf16.msra.mxu0 0
      %1138 = vmatprep.subr.bf16.mxu0 0
      %1139 = vmatpush1.bf16.msra.mxu0 0
      %1140 = vmatprep.subr.bf16.mxu0 0
      %1141 = vmatpush1.bf16.msra.mxu0 0
      %1142 = vmatprep.subr.bf16.mxu0 0
      %1143 = vmatpush1.bf16.msra.mxu0 0
      %1144 = vmatprep.subr.bf16.mxu0 0
      %1145 = vmatpush1.bf16.msra.mxu0 0
      %1146 = vmatprep.subr.bf16.mxu0 0
      %1147 = vmatpush1.bf16.msra.mxu0 0
      %1148 = vmatprep.subr.bf16.mxu0 0
      %1149 = vmatpush1.bf16.msra.mxu0 0
      %1150 = vmatprep.subr.bf16.mxu0 0
      %1151 = vmatpush1.bf16.msra.mxu0 0
      %1152 = vmatprep.subr.bf16.mxu0 0
      %1153 = vmatpush1.bf16.msra.mxu0 0
      %1154 = vmatprep.subr.bf16.mxu0 0
      %1155 = vmatpush1.bf16.msra.mxu0 0
      %1156 = vmatprep.subr.bf16.mxu0 0
      %1157 = vmatpush1.bf16.msra.mxu0 0
      %1158 = vmatprep.subr.bf16.mxu0 0
      %1159 = vmatpush1.bf16.msra.mxu0 0
      %1160 = vmatprep.subr.bf16.mxu0 0
      %1161 = vmatpush1.bf16.msra.mxu0 0
      %1162 = vmatprep.subr.bf16.mxu0 0
      %1163 = vmatpush1.bf16.msra.mxu0 0
      %1164 = vmatprep.subr.bf16.mxu0 0
      %1165 = vmatpush1.bf16.msra.mxu0 0
      %1166 = vmatprep.mubr.bf16.mxu0 0
      %1167 = vmatmul.mubr.bf16.gmra.mrb[0].mxu0 %v461
      %v1168 = vpop.f32.mrb[0].mxu0
      %v1169 = vadd.f32 0.0, %v1168
      %v1170 = vpop.f32.mrb[0].mxu0
      %v1171 = vpop.f32.mrb[0].mxu0
      %v1172 = vadd.f32 0.0, %v1171
      %v1173 = vpop.f32.mrb[0].mxu0
      %1174 = vmatprep.mubr.bf16.mxu0 0
      %1175 = vmatmul.mubr.bf16.gmra.mrb[0].mxu0 %v464
      %v1176 = vpop.f32.mrb[0].mxu0
      %v1177 = vadd.f32 0.0, %v1176
      %v1178 = vpop.f32.mrb[0].mxu0
      %v1179 = vpop.f32.mrb[0].mxu0
      %v1180 = vadd.f32 0.0, %v1179
      %v1181 = vpop.f32.mrb[0].mxu0
      %1182 = vmatprep.mubr.bf16.mxu0 0
      %1183 = vmatmul.mubr.bf16.gmra.mrb[0].mxu0 %v467
      %v1184 = vpop.f32.mrb[0].mxu0
      %v1185 = vadd.f32 0.0, %v1184
      %v1186 = vpop.f32.mrb[0].mxu0
      %v1187 = vpop.f32.mrb[0].mxu0
      %v1188 = vadd.f32 0.0, %v1187
      %v1189 = vpop.f32.mrb[0].mxu0
      %1190 = vmatprep.mubr.bf16.mxu0 0
      %1191 = vmatmul.mubr.bf16.gmra.mrb[0].mxu0 %v1129
      %v1192 = vpop.f32.mrb[0].mxu0
      %v1193 = vadd.f32 0.0, %v1192
      %v1194 = vpop.f32.mrb[0].mxu0
      %v1195 = vpop.f32.mrb[0].mxu0
      %v1196 = vadd.f32 0.0, %v1195
      %v1197 = vpop.f32.mrb[0].mxu0
      %1198 = vdwg.mxu0
      %v1199 = vadd.f32 %v1111, %v1169
      %v1200 = vadd.f32 %v1112, %v1172
      %v1201 = vadd.f32 %v1113, %v1177
      %v1202 = vadd.f32 %v1114, %v1180
      %v1203 = vadd.f32 %v1115, %v1185
      %v1204 = vadd.f32 %v1116, %v1188
      %v1205 = vadd.f32 %v1117, %v1193
      %v1206 = vadd.f32 %v1118, %v1196
      %v1207 = vrot.slane %v394, 2
      %v1208 = vrot.slane %v395, 2
      %v1209 = vsel %vm618, %v1207, %v1208
      %v1211 = vpack.c.bf16 %v1209, %v941
      %s1212 = scalar_lea.vmem %s3, 32
      %v1213 = vld [vmem:[%s1212] sm:$0xf]
      %v1215 = vsel %vm456, %v1211, 0
      %v1218 = vsel %vm469, %v1213, 0
      %1220 = vmatprep.subr.bf16.mxu0 0
      %1221 = vmatpush1.bf16.msra.mxu0 %v1218
      %1222 = vmatprep.subr.bf16.mxu0 0
      %1223 = vmatpush1.bf16.msra.mxu0 0
      %1224 = vmatprep.subr.bf16.mxu0 0
      %1225 = vmatpush1.bf16.msra.mxu0 0
      %1226 = vmatprep.subr.bf16.mxu0 0
      %1227 = vmatpush1.bf16.msra.mxu0 0
      %1228 = vmatprep.subr.bf16.mxu0 0
      %1229 = vmatpush1.bf16.msra.mxu0 0
      %1230 = vmatprep.subr.bf16.mxu0 0
      %1231 = vmatpush1.bf16.msra.mxu0 0
      %1232 = vmatprep.subr.bf16.mxu0 0
      %1233 = vmatpush1.bf16.msra.mxu0 0
      %1234 = vmatprep.subr.bf16.mxu0 0
      %1235 = vmatpush1.bf16.msra.mxu0 0
      %1236 = vmatprep.subr.bf16.mxu0 0
      %1237 = vmatpush1.bf16.msra.mxu0 0
      %1238 = vmatprep.subr.bf16.mxu0 0
      %1239 = vmatpush1.bf16.msra.mxu0 0
      %1240 = vmatprep.subr.bf16.mxu0 0
      %1241 = vmatpush1.bf16.msra.mxu0 0
      %1242 = vmatprep.subr.bf16.mxu0 0
      %1243 = vmatpush1.bf16.msra.mxu0 0
      %1244 = vmatprep.subr.bf16.mxu0 0
      %1245 = vmatpush1.bf16.msra.mxu0 0
      %1246 = vmatprep.subr.bf16.mxu0 0
      %1247 = vmatpush1.bf16.msra.mxu0 0
      %1248 = vmatprep.subr.bf16.mxu0 0
      %1249 = vmatpush1.bf16.msra.mxu0 0
      %1250 = vmatprep.subr.bf16.mxu0 0
      %1251 = vmatpush1.bf16.msra.mxu0 0
      %1252 = vmatprep.mubr.bf16.mxu0 0
      %1253 = vmatmul.mubr.bf16.gmra.mrb[0].mxu0 %v661
      %v1254 = vpop.f32.mrb[0].mxu0
      %v1255 = vadd.f32 0.0, %v1254
      %v1256 = vpop.f32.mrb[0].mxu0
      %v1257 = vpop.f32.mrb[0].mxu0
      %v1258 = vadd.f32 0.0, %v1257
      %v1259 = vpop.f32.mrb[0].mxu0
      %1260 = vmatprep.mubr.bf16.mxu0 0
      %1261 = vmatmul.mubr.bf16.gmra.mrb[0].mxu0 %v664
      %v1262 = vpop.f32.mrb[0].mxu0
      %v1263 = vadd.f32 0.0, %v1262
      %v1264 = vpop.f32.mrb[0].mxu0
      %v1265 = vpop.f32.mrb[0].mxu0
      %v1266 = vadd.f32 0.0, %v1265
      %v1267 = vpop.f32.mrb[0].mxu0
      %1268 = vmatprep.mubr.bf16.mxu0 0
      %1269 = vmatmul.mubr.bf16.gmra.mrb[0].mxu0 %v667
      %v1270 = vpop.f32.mrb[0].mxu0
      %v1271 = vadd.f32 0.0, %v1270
      %v1272 = vpop.f32.mrb[0].mxu0
      %v1273 = vpop.f32.mrb[0].mxu0
      %v1274 = vadd.f32 0.0, %v1273
      %v1275 = vpop.f32.mrb[0].mxu0
      %1276 = vmatprep.mubr.bf16.mxu0 0
      %1277 = vmatmul.mubr.bf16.gmra.mrb[0].mxu0 %v1215
      %v1278 = vpop.f32.mrb[0].mxu0
      %v1279 = vadd.f32 0.0, %v1278
      %v1280 = vpop.f32.mrb[0].mxu0
      %v1281 = vpop.f32.mrb[0].mxu0
      %v1282 = vadd.f32 0.0, %v1281
      %v1283 = vpop.f32.mrb[0].mxu0
      %1284 = vdwg.mxu0
      %v1285 = vadd.f32 %v1199, %v1255
      %v1286 = vadd.f32 %v1200, %v1258
      %v1287 = vadd.f32 %v1201, %v1263
      %v1288 = vadd.f32 %v1202, %v1266
      %v1289 = vadd.f32 %v1203, %v1271
      %v1290 = vadd.f32 %v1204, %v1274
      %v1291 = vadd.f32 %v1205, %v1279
      %v1292 = vadd.f32 %v1206, %v1282
      %v1293 = vld [vmem:[%s4] sm:$0x1]
      %v1295 = vlaneseq
      %v1296 = vshrl.u32 %v1295, 7
      %v1297 = vsub.s32 0, %v1296
      %v1298 = vrot.slane %v1293, %v1297
      %v1300 = vadd.f32 %v1285, %v1298
      %v1301 = vadd.f32 %v1286, %v1298
      %v1302 = vadd.f32 %v1287, %v1298
      %v1303 = vadd.f32 %v1288, %v1298
      %v1304 = vadd.f32 %v1289, %v1298
      %v1305 = vadd.f32 %v1290, %v1298
      %v1306 = vadd.f32 %v1291, %v1298
      %v1307 = vadd.f32 %v1292, %v1298
      %v1308 = vld [vmem:[%s267] sm:$0xff]
      %v1309 = vld [vmem:[%s267 + $0x8] sm:$0xff]
      %v1310 = vld [vmem:[%s267 + $0x10] sm:$0xff]
      %v1311 = vld [vmem:[%s267 + $0x18] sm:$0xff]
      %v1312 = vld [vmem:[%s267 + $0x20] sm:$0xff]
      %v1313 = vld [vmem:[%s267 + $0x28] sm:$0xff]
      %v1314 = vld [vmem:[%s267 + $0x30] sm:$0xff]
      %v1315 = vld [vmem:[%s267 + $0x38] sm:$0xff]
      %v1316 = vadd.f32 %v1300, %v1308
      %v1317 = vadd.f32 %v1301, %v1309
      %v1318 = vadd.f32 %v1302, %v1310
      %v1319 = vadd.f32 %v1303, %v1311
      %v1320 = vadd.f32 %v1304, %v1312
      %v1321 = vadd.f32 %v1305, %v1313
      %v1322 = vadd.f32 %v1306, %v1314
      %v1323 = vadd.f32 %v1307, %v1315
      %1324 = vst.msk [vmem:[%s273] sm:$0xff] %vm456, %v1316
      %1325 = vst.msk [vmem:[%s273 + $0x8] sm:$0xff] %vm456, %v1317
      %1326 = vst.msk [vmem:[%s273 + $0x10] sm:$0xff] %vm456, %v1318
      %1327 = vst.msk [vmem:[%s273 + $0x18] sm:$0xff] %vm456, %v1319
      %1328 = vst.msk [vmem:[%s273 + $0x20] sm:$0xff] %vm456, %v1320
      %1329 = vst.msk [vmem:[%s273 + $0x28] sm:$0xff] %vm456, %v1321
      %1330 = vst.msk [vmem:[%s273 + $0x30] sm:$0xff] %vm456, %v1322
      %1331 = vst.msk [vmem:[%s273 + $0x38] sm:$0xff] %vm456, %v1323
      %s1332 = smul.u32 8, %s17
      %p1333 = scmp.lt.s32.totalorder %s1332, 15
      %s1334 = scalar_select %p1333, %s1332, 15
      %s1335 = smul.addr %s1334, 8
      %s1336 = scalar_lea.vmem %s6, %s1335
      // Predicated region
      $region45: #{stage2_block1_forward.7} parent=43 // pred_check
        %p1337 = pneg %p171
      $region46: #{stage2_block1_forward.7} parent=43 // pred_check_branch
        %1339 = sbr.rel (%p1337) target = $region48
      $region47: #{stage2_block1_forward.7} parent=43 // pred_region
        %s1340 = smul.u32 8, %s17
      $region48: #{stage2_block1_forward.7} parent=43 // pred_fallthru
        _
    $region44: #{stage2_block1_forward.7} parent=5 // pred_fallthru
      _
    %p1341 = scmp.le.s32.totalorder 2, %s12
    // Predicated region
    $region49: #{stage2_block1_forward.7} parent=5 // pred_check
      %p1342 = pneg %p1341
    $region50: #{stage2_block1_forward.7} parent=5 // pred_check_branch
      %1344 = sbr.rel (%p1342) target = $region52
    $region51: #{stage2_block1_forward.7} parent=5 // pred_region
      %s1345 = ssub.s32 %s12, 2
      // Predicated region
      $region53: #{stage2_block1_forward.7} parent=51 // pred_check
        %p1346 = pneg %p177
      $region54: #{stage2_block1_forward.7} parent=51 // pred_check_branch
        %1348 = sbr.rel (%p1346) target = $region56
      $region55: #{stage2_block1_forward.7} parent=51 // pred_region
        %s1349 = smul.u32 8, %s18
        %p1350 = scmp.lt.s32.totalorder %s1349, 15
        %s1351 = scalar_select %p1350, %s1349, 15
        %s1352 = smul.addr %s1351, 8
        %s1353 = scalar_lea.vmem %s6, %s1352
      $region56: #{stage2_block1_forward.7} parent=51 // pred_fallthru
        _
    $region52: #{stage2_block1_forward.7} parent=5 // pred_fallthru
      _
  $region6: #{stage2_block1_forward.7} parent=0 // loop_footer
    %s16 = sadd.s32 1, %s12
  $region7: #{stage2_block1_forward.7} parent=0 // loop_footer_branch
    %11 = sbr.rel target = $region3
  $region8: #{stage2_block1_forward.7} parent=0 // loop_exit
    _

</llo_original>
